<compile_context>
chip_gen: v6e
topology: v6e:2x2x1
jax: 0.10.0
libtpu: 0.0.40
codegen_flags: <defaults>
</compile_context>

<pallas_src>
import functools
import math

import jax
import jax.numpy as jnp
from jax import lax
from jax.experimental import pallas as pl
from jax.experimental.pallas import tpu as pltpu

EPS = 1e-6
MAXPAD = 10          # max depthwise padding (kernel 21 -> pad 10)
SMOOTH_K = 7         # gaussian smoothing kernel size (pad 3)


# ---------------------------------------------------------------------------
# in-kernel math helpers (channels-on-sublanes layout)
# ---------------------------------------------------------------------------
def _seqnorm(h, m, rsum, w, b):
    # h: (C, N), m: (1, N), rsum: scalar 1/(len*C), w/b: (C, 1)
    hm = h * m
    mean = jnp.sum(hm) * rsum
    hc = (hm - mean) * m
    var = jnp.sum(hc * hc) * rsum
    return hc * lax.rsqrt(var + EPS) * w + b


def _conv_block(h, m, rsum, w, b):
    # Conv module tail: ReLU(SeqNorm(.)) * mask
    return jnp.maximum(_seqnorm(h, m, rsum, w, b), 0.0) * m


# ---------------------------------------------------------------------------
# Pallas kernel: one grid step == `bt` fused batch elements, everything in VMEM
# ---------------------------------------------------------------------------
def predictor_kernel(len_ref,                       # scalar prefetch (SMEM): (B,) int32
                     x_ref, w_in_ref,
                     gin_w_ref, gin_b_ref,
                     dw1_ref, g1_w_ref, g1_b_ref,
                     dw2_ref, g2_w_ref, g2_b_ref,
                     w_out_ref, b_out_ref,
                     o_ref,
                     hp_ref, lp_ref,                # VMEM scratch (padded tap buffers)
                     *, bt, n, c, gk):
    b0 = pl.program_id(0) * bt

    # zero the halo columns (center region is overwritten per sample)
    hp_ref[...] = jnp.zeros_like(hp_ref)
    lp_ref[...] = jnp.zeros_like(lp_ref)

    w_in = w_in_ref[...]                                   # (C, 1024) bf16
    gin_w, gin_b = gin_w_ref[...], gin_b_ref[...]          # (C, 1)
    dw1, g1_w, g1_b = dw1_ref[...], g1_w_ref[...], g1_b_ref[...]
    dw2, g2_w, g2_b = dw2_ref[...], g2_w_ref[...], g2_b_ref[...]
    w_out, b_out = w_out_ref[...], b_out_ref[...]          # (5, 3C), (5, 1)

    pos = lax.broadcasted_iota(jnp.int32, (1, n), 1)       # lane positions
    k1, k2 = dw1.shape[1], dw2.shape[1]                    # 9, 21
    off1 = MAXPAD - k1 // 2                                # 6
    spad = SMOOTH_K // 2                                   # 3

    for s in range(bt):                                    # static unroll over fused samples
        length = len_ref[b0 + s]
        m = (pos < length).astype(jnp.float32)             # (1, N) prefix mask
        rsum = 1.0 / (jnp.maximum(length, 1).astype(jnp.float32) * c)

        # CNN.input: 1x1 conv (1024 -> C) on the MXU, bf16 operands, f32 accum
        h = jnp.dot(w_in, x_ref[s], preferred_element_type=jnp.float32)   # (C, N)
        h = _conv_block(h, m, rsum, gin_w, gin_b)

        # CNN.dwc1 / dwc2: depthwise convs along N (exact zero padding) as
        # shifted lane-slices of one shared zero-padded VMEM buffer.
        hp_ref[:, MAXPAD:MAXPAD + n] = h

        z1 = jnp.zeros_like(h)
        for k in range(k1):
            z1 = z1 + hp_ref[:, off1 + k: off1 + k + n] * dw1[:, k:k + 1]
        z1 = _conv_block(z1, m, rsum, g1_w, g1_b)

        z2 = jnp.zeros_like(h)
        for k in range(k2):
            z2 = z2 + hp_ref[:, k: k + n] * dw2[:, k:k + 1]
        z2 = _conv_block(z2, m, rsum, g2_w, g2_b)

        cat = jnp.concatenate([h, z1, z2], axis=0)         # (3C, N)
        # TODO(synk): nn.Dropout2d(p=0.5) is identity in eval mode; training-mode RNG not implemented.

        # CNN.output: 1x1 conv (3C -> 5) + bias, masked -> lane-dense (5, N)
        logits = jnp.dot(w_out, cat, preferred_element_type=jnp.float32) + b_out
        logits = logits * m

        # Predictor tail: pad(3,3) + unfold(7) + einsum == 7-tap banded smoother along N
        lp_ref[:, spad:spad + n] = logits
        sm = gk[0] * lp_ref[:, 0:n]
        for j in range(1, SMOOTH_K):
            sm = sm + gk[j] * lp_ref[:, j:j + n]

        o_ref[s] = sm                                       # (5, N), lane-dense store


# ---------------------------------------------------------------------------
# wrapper
# ---------------------------------------------------------------------------
def _pick_samples_per_step(batch, n):
    # fuse enough short sequences per grid step to amortize per-step overhead
    cap = max(1, 256 // max(n, 1))
    for d in range(min(batch, cap), 0, -1):
        if batch % d == 0:
            return d
    return 1


def predictor_forward(x, mask, params, gk):
    """x: (B, N, 1024) float, mask: (B, N) {0,1} prefix mask. Returns (B, 5, N) f32."""
    B, N, Cin = x.shape
    C = params["gin_w"].shape[0]

    # per-sample lengths (tmbed masks are contiguous prefixes)
    lengths = jnp.sum(mask > 0, axis=1).astype(jnp.int32)

    # bf16 + channels-first layout for the big input (single fused XLA pass)
    x_t = jnp.transpose(x.astype(jnp.bfloat16), (0, 2, 1))    # (B, 1024, N)

    bt = _pick_samples_per_step(B, N)
    grid = (B // bt,)

    def full(shape):
        nd = len(shape)
        return pl.BlockSpec(shape, lambda b, lens, _nd=nd: (0,) * _nd)

    grid_spec = pltpu.PrefetchScalarGridSpec(
        num_scalar_prefetch=1,                                   # lengths -> SMEM
        grid=grid,
        in_specs=[
            pl.BlockSpec((bt, Cin, N), lambda b, lens: (b, 0, 0)),   # x (bf16)
            full((C, Cin)),                                          # input 1x1 conv weight (bf16)
            full((C, 1)), full((C, 1)),                              # SeqNorm(input) w/b
            full((C, 9)), full((C, 1)), full((C, 1)),                # dwc1 weight, SeqNorm w/b
            full((C, 21)), full((C, 1)), full((C, 1)),               # dwc2 weight, SeqNorm w/b
            full((5, 3 * C)), full((5, 1)),                          # output conv weight/bias
        ],
        out_specs=pl.BlockSpec((bt, 5, N), lambda b, lens: (b, 0, 0)),
        scratch_shapes=[
            pltpu.VMEM((C, N + 2 * MAXPAD), jnp.float32),            # padded h for depthwise taps
            pltpu.VMEM((5, N + 2 * (SMOOTH_K // 2)), jnp.float32),   # padded logits for smoother
        ],
    )

    kernel = functools.partial(predictor_kernel, bt=bt, n=N, c=C, gk=tuple(gk))

    return pl.pallas_call(
        kernel,
        out_shape=jax.ShapeDtypeStruct((B, 5, N), jnp.float32),
        grid_spec=grid_spec,
        compiler_params=pltpu.CompilerParams(dimension_semantics=("parallel",)),
    )(lengths, x_t,
      params["w_in"], params["gin_w"], params["gin_b"],
      params["dw1"], params["g1_w"], params["g1_b"],
      params["dw2"], params["g2_w"], params["g2_b"],
      params["w_out"], params["b_out"])


# ---------------------------------------------------------------------------
# deterministic parameter construction (synthetic; shapes match the module)
# ---------------------------------------------------------------------------
def gaussian_kernel(kernel_size=7, std=1.0):
    s2 = 2.0 * std * std
    vals = [math.exp(-((i - kernel_size // 2) ** 2) / s2) / math.sqrt(s2 * math.pi)
            for i in range(kernel_size)]
    total = sum(vals)
    return tuple(v / total for v in vals)


def init_params(key, channels=16, in_dim=1024):
    C = channels
    ks = jax.random.split(key, 4)

    def xavier(k, shape, fan_in, fan_out):
        bound = math.sqrt(6.0 / (fan_in + fan_out))
        return jax.random.uniform(k, shape, jnp.float32, -bound, bound)

    return {
        # input 1x1 conv: torch weight (C, 1024, 1, 1) -> stored (C, 1024), bf16 MXU operand
        "w_in": xavier(ks[0], (C, in_dim), in_dim, C).astype(jnp.bfloat16),
        "gin_w": jnp.ones((C, 1), jnp.float32),
        "gin_b": jnp.zeros((C, 1), jnp.float32),
        # depthwise convs: torch weight (C, 1, K, 1) -> stored (C, K)
        "dw1": xavier(ks[1], (C, 9), 9, 9 * C),
        "g1_w": jnp.ones((C, 1), jnp.float32),
        "g1_b": jnp.zeros((C, 1), jnp.float32),
        "dw2": xavier(ks[2], (C, 21), 21, 21 * C),
        "g2_w": jnp.ones((C, 1), jnp.float32),
        "g2_b": jnp.zeros((C, 1), jnp.float32),
        # output 1x1 conv: torch weight (5, 3C, 1, 1) -> stored (5, 3C); zero bias
        "w_out": xavier(ks[3], (5, 3 * C), 3 * C, 5),
        "b_out": jnp.zeros((5, 1), jnp.float32),
    }


# ---------------------------------------------------------------------------
# pure-JAX reference (torch-style (N, C) layout; same bf16 input matmul)
# ---------------------------------------------------------------------------
def predictor_ref(x, mask, params, gk):
    B, N, _ = x.shape
    C = params["gin_w"].shape[0]
    gk_arr = jnp.asarray(gk, jnp.float32)
    w_in = params["w_in"]                     # (C, 1024) bf16
    outs = []
    for b in range(B):
        m = mask[b].reshape(N, 1).astype(jnp.float32)
        rsum = 1.0 / (jnp.maximum(jnp.sum(m), 1.0) * C)

        def seqnorm(h, w, bb):
            hm = h * m
            mean = jnp.sum(hm) * rsum
            hc = (hm - mean) * m
            var = jnp.sum(hc * hc) * rsum
            return hc * lax.rsqrt(var + EPS) * w + bb

        def conv_block(h, w, bb):
            return jnp.maximum(seqnorm(h, w, bb), 0.0) * m

        def depthwise(h, dw):                 # h (N, C), dw (C, K)
            K = dw.shape[1]
            pad = K // 2
            hp = jnp.pad(h, ((pad, pad), (0, 0)))
            out = jnp.zeros_like(h)
            for k in range(K):
                out = out + hp[k:k + N, :] * dw[:, k][None, :]
            return out

        h = jnp.dot(x[b].astype(jnp.bfloat16), w_in.T,
                    preferred_element_type=jnp.float32)               # (N, C)
        h = conv_block(h, params["gin_w"].T, params["gin_b"].T)
        z1 = conv_block(depthwise(h, params["dw1"]), params["g1_w"].T, params["g1_b"].T)
        z2 = conv_block(depthwise(h, params["dw2"]), params["g2_w"].T, params["g2_b"].T)
        cat = jnp.concatenate([h, z1, z2], axis=1)                    # (N, 3C)
        logits = (cat @ params["w_out"].T + params["b_out"].T) * m    # (N, 5)
        lp = jnp.pad(logits, ((3, 3), (0, 0)))
        sm = jnp.zeros_like(logits)
        for j in range(7):
            sm = sm + gk_arr[j] * lp[j:j + N, :]
        outs.append(sm.T)                                             # (5, N)
    return jnp.stack(outs)


if __name__ == "__main__":
    B, N, Cin, C = 2, 16, 1024, 16     # Cin=1024 is fixed by CNN.__init__

    key = jax.random.PRNGKey(0)
    kx, kp = jax.random.split(key)
    x = jax.random.normal(kx, (B, N, Cin), jnp.float32)
    lengths = jnp.array([12, 9], jnp.int32)
    mask = (jnp.arange(N)[None, :] < lengths[:, None]).astype(jnp.float32)   # (B, N)

    params = init_params(kp, channels=C, in_dim=Cin)
    gk = gaussian_kernel(7, 1.0)

    out = predictor_forward(x, mask, params, gk)
    out = jax.block_until_ready(out)

    ref = predictor_ref(x, mask, params, gk)
    assert out.shape == (B, 5, N)
    err = float(jnp.max(jnp.abs(out - ref)))
    assert jnp.allclose(out, ref, atol=1e-3, rtol=1e-3), f"max abs err {err}"

    print("KERNEL_OK")
</pallas_src>

<mosaic_0001>
module attributes {stable_mosaic.version = 11 : i64} {
  func.func @predictor_kernel(%arg0: i32, %arg1: memref<2xi32, #tpu.memory_space<smem>>, %arg2: memref<2x1024x16xbf16, #tpu.memory_space<vmem>>, %arg3: memref<16x1024xbf16, #tpu.memory_space<vmem>>, %arg4: memref<16x1xf32, #tpu.memory_space<vmem>>, %arg5: memref<16x1xf32, #tpu.memory_space<vmem>>, %arg6: memref<16x9xf32, #tpu.memory_space<vmem>>, %arg7: memref<16x1xf32, #tpu.memory_space<vmem>>, %arg8: memref<16x1xf32, #tpu.memory_space<vmem>>, %arg9: memref<16x21xf32, #tpu.memory_space<vmem>>, %arg10: memref<16x1xf32, #tpu.memory_space<vmem>>, %arg11: memref<16x1xf32, #tpu.memory_space<vmem>>, %arg12: memref<5x48xf32, #tpu.memory_space<vmem>>, %arg13: memref<5x1xf32, #tpu.memory_space<vmem>>, %arg14: memref<2x5x16xf32, #tpu.memory_space<vmem>>, %arg15: memref<16x36xf32, #tpu.memory_space<vmem>>, %arg16: memref<5x22xf32, #tpu.memory_space<vmem>>) attributes {dimension_semantics = [#tpu.dimension_semantics<parallel>], iteration_bounds = array<i64: 1>, scalar_prefetch = 1 : i64, scratch_operands = 2 : i64, tpu.core_type = #tpu.core_type<tc>, window_params = [{transform_indices = @transform_0, window_bounds = array<i64: 2, 1024, 16>}, {pipeline_mode = #tpu.pipeline_mode<synchronous>, transform_indices = @transform_1, window_bounds = array<i64: 16, 1024>}, {pipeline_mode = #tpu.pipeline_mode<synchronous>, transform_indices = @transform_2, window_bounds = array<i64: 16, 1>}, {pipeline_mode = #tpu.pipeline_mode<synchronous>, transform_indices = @transform_3, window_bounds = array<i64: 16, 1>}, {pipeline_mode = #tpu.pipeline_mode<synchronous>, transform_indices = @transform_4, window_bounds = array<i64: 16, 9>}, {pipeline_mode = #tpu.pipeline_mode<synchronous>, transform_indices = @transform_5, window_bounds = array<i64: 16, 1>}, {pipeline_mode = #tpu.pipeline_mode<synchronous>, transform_indices = @transform_6, window_bounds = array<i64: 16, 1>}, {pipeline_mode = #tpu.pipeline_mode<synchronous>, transform_indices = @transform_7, window_bounds = array<i64: 16, 21>}, {pipeline_mode = #tpu.pipeline_mode<synchronous>, transform_indices = @transform_8, window_bounds = array<i64: 16, 1>}, {pipeline_mode = #tpu.pipeline_mode<synchronous>, transform_indices = @transform_9, window_bounds = array<i64: 16, 1>}, {pipeline_mode = #tpu.pipeline_mode<synchronous>, transform_indices = @transform_10, window_bounds = array<i64: 5, 48>}, {pipeline_mode = #tpu.pipeline_mode<synchronous>, transform_indices = @transform_11, window_bounds = array<i64: 5, 1>}, {transform_indices = @transform_12, window_bounds = array<i64: 2, 5, 16>}]} {
    %c2_i32 = arith.constant 2 : i32
    %0 = arith.muli %arg0, %c2_i32 : i32
    %cst = arith.constant 0.000000e+00 : f32
    %1 = vector.broadcast %cst : f32 to vector<16x36xf32>
    %c0 = arith.constant 0 : index
    %c0_0 = arith.constant 0 : index
    %2 = vector.load %arg15[%c0, %c0_0] : memref<16x36xf32, #tpu.memory_space<vmem>>, vector<16x36xf32>
    tpu.vector_store %arg15[%c0, %c0_0], %1 {strides = array<i32>} : memref<16x36xf32, #tpu.memory_space<vmem>>, vector<16x36xf32>,
    %cst_1 = arith.constant 0.000000e+00 : f32
    %3 = vector.broadcast %cst_1 : f32 to vector<5x22xf32>
    %c0_2 = arith.constant 0 : index
    %c0_3 = arith.constant 0 : index
    %4 = vector.load %arg16[%c0_2, %c0_3] : memref<5x22xf32, #tpu.memory_space<vmem>>, vector<5x22xf32>
    tpu.vector_store %arg16[%c0_2, %c0_3], %3 {strides = array<i32>} : memref<5x22xf32, #tpu.memory_space<vmem>>, vector<5x22xf32>,
    %c0_4 = arith.constant 0 : index
    %c0_5 = arith.constant 0 : index
    %5 = vector.load %arg3[%c0_4, %c0_5] : memref<16x1024xbf16, #tpu.memory_space<vmem>>, vector<16x1024xbf16>
    %c0_6 = arith.constant 0 : index
    %c0_7 = arith.constant 0 : index
    %6 = vector.load %arg4[%c0_6, %c0_7] : memref<16x1xf32, #tpu.memory_space<vmem>>, vector<16x1xf32>
    %c0_8 = arith.constant 0 : index
    %c0_9 = arith.constant 0 : index
    %7 = vector.load %arg5[%c0_8, %c0_9] : memref<16x1xf32, #tpu.memory_space<vmem>>, vector<16x1xf32>
    %c0_10 = arith.constant 0 : index
    %c0_11 = arith.constant 0 : index
    %8 = vector.load %arg6[%c0_10, %c0_11] : memref<16x9xf32, #tpu.memory_space<vmem>>, vector<16x9xf32>
    %c0_12 = arith.constant 0 : index
    %c0_13 = arith.constant 0 : index
    %9 = vector.load %arg7[%c0_12, %c0_13] : memref<16x1xf32, #tpu.memory_space<vmem>>, vector<16x1xf32>
    %c0_14 = arith.constant 0 : index
    %c0_15 = arith.constant 0 : index
    %10 = vector.load %arg8[%c0_14, %c0_15] : memref<16x1xf32, #tpu.memory_space<vmem>>, vector<16x1xf32>
    %c0_16 = arith.constant 0 : index
    %c0_17 = arith.constant 0 : index
    %11 = vector.load %arg9[%c0_16, %c0_17] : memref<16x21xf32, #tpu.memory_space<vmem>>, vector<16x21xf32>
    %c0_18 = arith.constant 0 : index
    %c0_19 = arith.constant 0 : index
    %12 = vector.load %arg10[%c0_18, %c0_19] : memref<16x1xf32, #tpu.memory_space<vmem>>, vector<16x1xf32>
    %c0_20 = arith.constant 0 : index
    %c0_21 = arith.constant 0 : index
    %13 = vector.load %arg11[%c0_20, %c0_21] : memref<16x1xf32, #tpu.memory_space<vmem>>, vector<16x1xf32>
    %c0_22 = arith.constant 0 : index
    %c0_23 = arith.constant 0 : index
    %14 = vector.load %arg12[%c0_22, %c0_23] : memref<5x48xf32, #tpu.memory_space<vmem>>, vector<5x48xf32>
    %c0_24 = arith.constant 0 : index
    %c0_25 = arith.constant 0 : index
    %15 = vector.load %arg13[%c0_24, %c0_25] : memref<5x1xf32, #tpu.memory_space<vmem>>, vector<5x1xf32>
    %16 = tpu.iota {dimensions = array<i32: 1>} : vector<1x16xi32>
    %c0_i32 = arith.constant 0 : i32
    %17 = arith.addi %0, %c0_i32 : i32
    %18 = arith.index_cast %17 : i32 to index
    %19 = memref.load %arg1[%18] : memref<2xi32, #tpu.memory_space<smem>>
    %20 = vector.broadcast %19 : i32 to vector<1x16xi32>
    %21 = arith.cmpi slt, %16, %20 : vector<1x16xi32>
    %22 = arith.extui %21 : vector<1x16xi1> to vector<1x16xi32>
    %23 = arith.sitofp %22 : vector<1x16xi32> to vector<1x16xf32>
    %c1_i32 = arith.constant 1 : i32
    %24 = arith.maxsi %19, %c1_i32 : i32
    %25 = arith.sitofp %24 : i32 to f32
    %cst_26 = arith.constant 1.600000e+01 : f32
    %26 = arith.mulf %25, %cst_26 : f32
    %cst_27 = arith.constant 1.000000e+00 : f32
    %27 = arith.divf %cst_27, %26 : f32
    %c0_28 = arith.constant 0 : index
    %c0_29 = arith.constant 0 : index
    %c0_30 = arith.constant 0 : index
    %28 = vector.load %arg2[%c0_28, %c0_29, %c0_30] : memref<2x1024x16xbf16, #tpu.memory_space<vmem>>, vector<1x1024x16xbf16>
    %29 = vector.shape_cast %28 : vector<1x1024x16xbf16> to vector<1024x16xbf16>
    %cst_31 = arith.constant dense<0.000000e+00> : vector<16x16xf32>
    %30 = tpu.matmul %5, %29, %cst_31 {dimension_numbers = #tpu.dot_dimension_numbers<[1], [0], [0], [1], [0, 0, 1, 1], [], []>} : vector<16x1024xbf16>, vector<1024x16xbf16>, vector<16x16xf32> -> vector<16x16xf32>
    %31 = vector.broadcast %23 : vector<1x16xf32> to vector<16x16xf32>
    %32 = arith.mulf %30, %31 : vector<16x16xf32>
    %33 = vector.shape_cast %32 : vector<16x16xf32> to vector<1x16x16xf32>
    %cst_32 = arith.constant dense<0.000000e+00> : vector<1xf32>
    %34 = vector.multi_reduction <add>, %33, %cst_32 [1, 2] : vector<1x16x16xf32> to vector<1xf32>
    %35 = vector.shape_cast %34 : vector<1xf32> to vector<1x1x1xf32>
    %36 = vector.extract %35[0, 0, 0] : f32 from vector<1x1x1xf32>
    %37 = arith.mulf %36, %27 : f32
    %38 = vector.broadcast %37 : f32 to vector<16x16xf32>
    %39 = arith.subf %32, %38 : vector<16x16xf32>
    %40 = vector.broadcast %23 : vector<1x16xf32> to vector<16x16xf32>
    %41 = arith.mulf %39, %40 : vector<16x16xf32>
    %42 = arith.mulf %41, %41 : vector<16x16xf32>
    %43 = vector.shape_cast %42 : vector<16x16xf32> to vector<1x16x16xf32>
    %cst_33 = arith.constant dense<0.000000e+00> : vector<1xf32>
    %44 = vector.multi_reduction <add>, %43, %cst_33 [1, 2] : vector<1x16x16xf32> to vector<1xf32>
    %45 = vector.shape_cast %44 : vector<1xf32> to vector<1x1x1xf32>
    %46 = vector.extract %45[0, 0, 0] : f32 from vector<1x1x1xf32>
    %47 = arith.mulf %46, %27 : f32
    %cst_34 = arith.constant 9.99999997E-7 : f32
    %48 = arith.addf %47, %cst_34 : f32
    %49 = math.rsqrt %48 : f32
    %50 = vector.broadcast %49 : f32 to vector<16x16xf32>
    %51 = arith.mulf %41, %50 : vector<16x16xf32>
    %52 = vector.broadcast %6 : vector<16x1xf32> to vector<16x16xf32>
    %53 = arith.mulf %51, %52 : vector<16x16xf32>
    %54 = vector.broadcast %7 : vector<16x1xf32> to vector<16x16xf32>
    %55 = arith.addf %53, %54 : vector<16x16xf32>
    %cst_35 = arith.constant 0.000000e+00 : f32
    %56 = vector.broadcast %cst_35 : f32 to vector<16x16xf32>
    %57 = arith.maximumf %55, %56 : vector<16x16xf32>
    %58 = vector.broadcast %23 : vector<1x16xf32> to vector<16x16xf32>
    %59 = arith.mulf %57, %58 : vector<16x16xf32>
    %c0_36 = arith.constant 0 : index
    %c10 = arith.constant 10 : index
    %60 = vector.load %arg15[%c0_36, %c10] : memref<16x36xf32, #tpu.memory_space<vmem>>, vector<16x16xf32>
    tpu.vector_store %arg15[%c0_36, %c10], %59 {strides = array<i32>} : memref<16x36xf32, #tpu.memory_space<vmem>>, vector<16x16xf32>,
    %cst_37 = arith.constant 0.000000e+00 : f32
    %61 = vector.broadcast %cst_37 : f32 to vector<16x16xf32>
    %c0_38 = arith.constant 0 : index
    %c6 = arith.constant 6 : index
    %62 = vector.load %arg15[%c0_38, %c6] : memref<16x36xf32, #tpu.memory_space<vmem>>, vector<16x16xf32>
    %63 = vector.extract_strided_slice %8 {offsets = [0, 0], sizes = [16, 1], strides = [1, 1]} : vector<16x9xf32> to vector<16x1xf32>
    %64 = vector.broadcast %63 : vector<16x1xf32> to vector<16x16xf32>
    %65 = arith.mulf %62, %64 : vector<16x16xf32>
    %66 = arith.addf %61, %65 : vector<16x16xf32>
    %c0_39 = arith.constant 0 : index
    %c7 = arith.constant 7 : index
    %67 = vector.load %arg15[%c0_39, %c7] : memref<16x36xf32, #tpu.memory_space<vmem>>, vector<16x16xf32>
    %68 = vector.extract_strided_slice %8 {offsets = [0, 1], sizes = [16, 1], strides = [1, 1]} : vector<16x9xf32> to vector<16x1xf32>
    %69 = vector.broadcast %68 : vector<16x1xf32> to vector<16x16xf32>
    %70 = arith.mulf %67, %69 : vector<16x16xf32>
    %71 = arith.addf %66, %70 : vector<16x16xf32>
    %c0_40 = arith.constant 0 : index
    %c8 = arith.constant 8 : index
    %72 = vector.load %arg15[%c0_40, %c8] : memref<16x36xf32, #tpu.memory_space<vmem>>, vector<16x16xf32>
    %73 = vector.extract_strided_slice %8 {offsets = [0, 2], sizes = [16, 1], strides = [1, 1]} : vector<16x9xf32> to vector<16x1xf32>
    %74 = vector.broadcast %73 : vector<16x1xf32> to vector<16x16xf32>
    %75 = arith.mulf %72, %74 : vector<16x16xf32>
    %76 = arith.addf %71, %75 : vector<16x16xf32>
    %c0_41 = arith.constant 0 : index
    %c9 = arith.constant 9 : index
    %77 = vector.load %arg15[%c0_41, %c9] : memref<16x36xf32, #tpu.memory_space<vmem>>, vector<16x16xf32>
    %78 = vector.extract_strided_slice %8 {offsets = [0, 3], sizes = [16, 1], strides = [1, 1]} : vector<16x9xf32> to vector<16x1xf32>
    %79 = vector.broadcast %78 : vector<16x1xf32> to vector<16x16xf32>
    %80 = arith.mulf %77, %79 : vector<16x16xf32>
    %81 = arith.addf %76, %80 : vector<16x16xf32>
    %c0_42 = arith.constant 0 : index
    %c10_43 = arith.constant 10 : index
    %82 = vector.load %arg15[%c0_42, %c10_43] : memref<16x36xf32, #tpu.memory_space<vmem>>, vector<16x16xf32>
    %83 = vector.extract_strided_slice %8 {offsets = [0, 4], sizes = [16, 1], strides = [1, 1]} : vector<16x9xf32> to vector<16x1xf32>
    %84 = vector.broadcast %83 : vector<16x1xf32> to vector<16x16xf32>
    %85 = arith.mulf %82, %84 : vector<16x16xf32>
    %86 = arith.addf %81, %85 : vector<16x16xf32>
    %c0_44 = arith.constant 0 : index
    %c11 = arith.constant 11 : index
    %87 = vector.load %arg15[%c0_44, %c11] : memref<16x36xf32, #tpu.memory_space<vmem>>, vector<16x16xf32>
    %88 = vector.extract_strided_slice %8 {offsets = [0, 5], sizes = [16, 1], strides = [1, 1]} : vector<16x9xf32> to vector<16x1xf32>
    %89 = vector.broadcast %88 : vector<16x1xf32> to vector<16x16xf32>
    %90 = arith.mulf %87, %89 : vector<16x16xf32>
    %91 = arith.addf %86, %90 : vector<16x16xf32>
    %c0_45 = arith.constant 0 : index
    %c12 = arith.constant 12 : index
    %92 = vector.load %arg15[%c0_45, %c12] : memref<16x36xf32, #tpu.memory_space<vmem>>, vector<16x16xf32>
    %93 = vector.extract_strided_slice %8 {offsets = [0, 6], sizes = [16, 1], strides = [1, 1]} : vector<16x9xf32> to vector<16x1xf32>
    %94 = vector.broadcast %93 : vector<16x1xf32> to vector<16x16xf32>
    %95 = arith.mulf %92, %94 : vector<16x16xf32>
    %96 = arith.addf %91, %95 : vector<16x16xf32>
    %c0_46 = arith.constant 0 : index
    %c13 = arith.constant 13 : index
    %97 = vector.load %arg15[%c0_46, %c13] : memref<16x36xf32, #tpu.memory_space<vmem>>, vector<16x16xf32>
    %98 = vector.extract_strided_slice %8 {offsets = [0, 7], sizes = [16, 1], strides = [1, 1]} : vector<16x9xf32> to vector<16x1xf32>
    %99 = vector.broadcast %98 : vector<16x1xf32> to vector<16x16xf32>
    %100 = arith.mulf %97, %99 : vector<16x16xf32>
    %101 = arith.addf %96, %100 : vector<16x16xf32>
    %c0_47 = arith.constant 0 : index
    %c14 = arith.constant 14 : index
    %102 = vector.load %arg15[%c0_47, %c14] : memref<16x36xf32, #tpu.memory_space<vmem>>, vector<16x16xf32>
    %103 = vector.extract_strided_slice %8 {offsets = [0, 8], sizes = [16, 1], strides = [1, 1]} : vector<16x9xf32> to vector<16x1xf32>
    %104 = vector.broadcast %103 : vector<16x1xf32> to vector<16x16xf32>
    %105 = arith.mulf %102, %104 : vector<16x16xf32>
    %106 = arith.addf %101, %105 : vector<16x16xf32>
    %107 = vector.broadcast %23 : vector<1x16xf32> to vector<16x16xf32>
    %108 = arith.mulf %106, %107 : vector<16x16xf32>
    %109 = vector.shape_cast %108 : vector<16x16xf32> to vector<1x16x16xf32>
    %cst_48 = arith.constant dense<0.000000e+00> : vector<1xf32>
    %110 = vector.multi_reduction <add>, %109, %cst_48 [1, 2] : vector<1x16x16xf32> to vector<1xf32>
    %111 = vector.shape_cast %110 : vector<1xf32> to vector<1x1x1xf32>
    %112 = vector.extract %111[0, 0, 0] : f32 from vector<1x1x1xf32>
    %113 = arith.mulf %112, %27 : f32
    %114 = vector.broadcast %113 : f32 to vector<16x16xf32>
    %115 = arith.subf %108, %114 : vector<16x16xf32>
    %116 = vector.broadcast %23 : vector<1x16xf32> to vector<16x16xf32>
    %117 = arith.mulf %115, %116 : vector<16x16xf32>
    %118 = arith.mulf %117, %117 : vector<16x16xf32>
    %119 = vector.shape_cast %118 : vector<16x16xf32> to vector<1x16x16xf32>
    %cst_49 = arith.constant dense<0.000000e+00> : vector<1xf32>
    %120 = vector.multi_reduction <add>, %119, %cst_49 [1, 2] : vector<1x16x16xf32> to vector<1xf32>
    %121 = vector.shape_cast %120 : vector<1xf32> to vector<1x1x1xf32>
    %122 = vector.extract %121[0, 0, 0] : f32 from vector<1x1x1xf32>
    %123 = arith.mulf %122, %27 : f32
    %cst_50 = arith.constant 9.99999997E-7 : f32
    %124 = arith.addf %123, %cst_50 : f32
    %125 = math.rsqrt %124 : f32
    %126 = vector.broadcast %125 : f32 to vector<16x16xf32>
    %127 = arith.mulf %117, %126 : vector<16x16xf32>
    %128 = vector.broadcast %9 : vector<16x1xf32> to vector<16x16xf32>
    %129 = arith.mulf %127, %128 : vector<16x16xf32>
    %130 = vector.broadcast %10 : vector<16x1xf32> to vector<16x16xf32>
    %131 = arith.addf %129, %130 : vector<16x16xf32>
    %cst_51 = arith.constant 0.000000e+00 : f32
    %132 = vector.broadcast %cst_51 : f32 to vector<16x16xf32>
    %133 = arith.maximumf %131, %132 : vector<16x16xf32>
    %134 = vector.broadcast %23 : vector<1x16xf32> to vector<16x16xf32>
    %135 = arith.mulf %133, %134 : vector<16x16xf32>
    %cst_52 = arith.constant 0.000000e+00 : f32
    %136 = vector.broadcast %cst_52 : f32 to vector<16x16xf32>
    %c0_53 = arith.constant 0 : index
    %c0_54 = arith.constant 0 : index
    %137 = vector.load %arg15[%c0_53, %c0_54] : memref<16x36xf32, #tpu.memory_space<vmem>>, vector<16x16xf32>
    %138 = vector.extract_strided_slice %11 {offsets = [0, 0], sizes = [16, 1], strides = [1, 1]} : vector<16x21xf32> to vector<16x1xf32>
    %139 = vector.broadcast %138 : vector<16x1xf32> to vector<16x16xf32>
    %140 = arith.mulf %137, %139 : vector<16x16xf32>
    %141 = arith.addf %136, %140 : vector<16x16xf32>
    %c0_55 = arith.constant 0 : index
    %c1 = arith.constant 1 : index
    %142 = vector.load %arg15[%c0_55, %c1] : memref<16x36xf32, #tpu.memory_space<vmem>>, vector<16x16xf32>
    %143 = vector.extract_strided_slice %11 {offsets = [0, 1], sizes = [16, 1], strides = [1, 1]} : vector<16x21xf32> to vector<16x1xf32>
    %144 = vector.broadcast %143 : vector<16x1xf32> to vector<16x16xf32>
    %145 = arith.mulf %142, %144 : vector<16x16xf32>
    %146 = arith.addf %141, %145 : vector<16x16xf32>
    %c0_56 = arith.constant 0 : index
    %c2 = arith.constant 2 : index
    %147 = vector.load %arg15[%c0_56, %c2] : memref<16x36xf32, #tpu.memory_space<vmem>>, vector<16x16xf32>
    %148 = vector.extract_strided_slice %11 {offsets = [0, 2], sizes = [16, 1], strides = [1, 1]} : vector<16x21xf32> to vector<16x1xf32>
    %149 = vector.broadcast %148 : vector<16x1xf32> to vector<16x16xf32>
    %150 = arith.mulf %147, %149 : vector<16x16xf32>
    %151 = arith.addf %146, %150 : vector<16x16xf32>
    %c0_57 = arith.constant 0 : index
    %c3 = arith.constant 3 : index
    %152 = vector.load %arg15[%c0_57, %c3] : memref<16x36xf32, #tpu.memory_space<vmem>>, vector<16x16xf32>
    %153 = vector.extract_strided_slice %11 {offsets = [0, 3], sizes = [16, 1], strides = [1, 1]} : vector<16x21xf32> to vector<16x1xf32>
    %154 = vector.broadcast %153 : vector<16x1xf32> to vector<16x16xf32>
    %155 = arith.mulf %152, %154 : vector<16x16xf32>
    %156 = arith.addf %151, %155 : vector<16x16xf32>
    %c0_58 = arith.constant 0 : index
    %c4 = arith.constant 4 : index
    %157 = vector.load %arg15[%c0_58, %c4] : memref<16x36xf32, #tpu.memory_space<vmem>>, vector<16x16xf32>
    %158 = vector.extract_strided_slice %11 {offsets = [0, 4], sizes = [16, 1], strides = [1, 1]} : vector<16x21xf32> to vector<16x1xf32>
    %159 = vector.broadcast %158 : vector<16x1xf32> to vector<16x16xf32>
    %160 = arith.mulf %157, %159 : vector<16x16xf32>
    %161 = arith.addf %156, %160 : vector<16x16xf32>
    %c0_59 = arith.constant 0 : index
    %c5 = arith.constant 5 : index
    %162 = vector.load %arg15[%c0_59, %c5] : memref<16x36xf32, #tpu.memory_space<vmem>>, vector<16x16xf32>
    %163 = vector.extract_strided_slice %11 {offsets = [0, 5], sizes = [16, 1], strides = [1, 1]} : vector<16x21xf32> to vector<16x1xf32>
    %164 = vector.broadcast %163 : vector<16x1xf32> to vector<16x16xf32>
    %165 = arith.mulf %162, %164 : vector<16x16xf32>
    %166 = arith.addf %161, %165 : vector<16x16xf32>
    %c0_60 = arith.constant 0 : index
    %c6_61 = arith.constant 6 : index
    %167 = vector.load %arg15[%c0_60, %c6_61] : memref<16x36xf32, #tpu.memory_space<vmem>>, vector<16x16xf32>
    %168 = vector.extract_strided_slice %11 {offsets = [0, 6], sizes = [16, 1], strides = [1, 1]} : vector<16x21xf32> to vector<16x1xf32>
    %169 = vector.broadcast %168 : vector<16x1xf32> to vector<16x16xf32>
    %170 = arith.mulf %167, %169 : vector<16x16xf32>
    %171 = arith.addf %166, %170 : vector<16x16xf32>
    %c0_62 = arith.constant 0 : index
    %c7_63 = arith.constant 7 : index
    %172 = vector.load %arg15[%c0_62, %c7_63] : memref<16x36xf32, #tpu.memory_space<vmem>>, vector<16x16xf32>
    %173 = vector.extract_strided_slice %11 {offsets = [0, 7], sizes = [16, 1], strides = [1, 1]} : vector<16x21xf32> to vector<16x1xf32>
    %174 = vector.broadcast %173 : vector<16x1xf32> to vector<16x16xf32>
    %175 = arith.mulf %172, %174 : vector<16x16xf32>
    %176 = arith.addf %171, %175 : vector<16x16xf32>
    %c0_64 = arith.constant 0 : index
    %c8_65 = arith.constant 8 : index
    %177 = vector.load %arg15[%c0_64, %c8_65] : memref<16x36xf32, #tpu.memory_space<vmem>>, vector<16x16xf32>
    %178 = vector.extract_strided_slice %11 {offsets = [0, 8], sizes = [16, 1], strides = [1, 1]} : vector<16x21xf32> to vector<16x1xf32>
    %179 = vector.broadcast %178 : vector<16x1xf32> to vector<16x16xf32>
    %180 = arith.mulf %177, %179 : vector<16x16xf32>
    %181 = arith.addf %176, %180 : vector<16x16xf32>
    %c0_66 = arith.constant 0 : index
    %c9_67 = arith.constant 9 : index
    %182 = vector.load %arg15[%c0_66, %c9_67] : memref<16x36xf32, #tpu.memory_space<vmem>>, vector<16x16xf32>
    %183 = vector.extract_strided_slice %11 {offsets = [0, 9], sizes = [16, 1], strides = [1, 1]} : vector<16x21xf32> to vector<16x1xf32>
    %184 = vector.broadcast %183 : vector<16x1xf32> to vector<16x16xf32>
    %185 = arith.mulf %182, %184 : vector<16x16xf32>
    %186 = arith.addf %181, %185 : vector<16x16xf32>
    %c0_68 = arith.constant 0 : index
    %c10_69 = arith.constant 10 : index
    %187 = vector.load %arg15[%c0_68, %c10_69] : memref<16x36xf32, #tpu.memory_space<vmem>>, vector<16x16xf32>
    %188 = vector.extract_strided_slice %11 {offsets = [0, 10], sizes = [16, 1], strides = [1, 1]} : vector<16x21xf32> to vector<16x1xf32>
    %189 = vector.broadcast %188 : vector<16x1xf32> to vector<16x16xf32>
    %190 = arith.mulf %187, %189 : vector<16x16xf32>
    %191 = arith.addf %186, %190 : vector<16x16xf32>
    %c0_70 = arith.constant 0 : index
    %c11_71 = arith.constant 11 : index
    %192 = vector.load %arg15[%c0_70, %c11_71] : memref<16x36xf32, #tpu.memory_space<vmem>>, vector<16x16xf32>
    %193 = vector.extract_strided_slice %11 {offsets = [0, 11], sizes = [16, 1], strides = [1, 1]} : vector<16x21xf32> to vector<16x1xf32>
    %194 = vector.broadcast %193 : vector<16x1xf32> to vector<16x16xf32>
    %195 = arith.mulf %192, %194 : vector<16x16xf32>
    %196 = arith.addf %191, %195 : vector<16x16xf32>
    %c0_72 = arith.constant 0 : index
    %c12_73 = arith.constant 12 : index
    %197 = vector.load %arg15[%c0_72, %c12_73] : memref<16x36xf32, #tpu.memory_space<vmem>>, vector<16x16xf32>
    %198 = vector.extract_strided_slice %11 {offsets = [0, 12], sizes = [16, 1], strides = [1, 1]} : vector<16x21xf32> to vector<16x1xf32>
    %199 = vector.broadcast %198 : vector<16x1xf32> to vector<16x16xf32>
    %200 = arith.mulf %197, %199 : vector<16x16xf32>
    %201 = arith.addf %196, %200 : vector<16x16xf32>
    %c0_74 = arith.constant 0 : index
    %c13_75 = arith.constant 13 : index
    %202 = vector.load %arg15[%c0_74, %c13_75] : memref<16x36xf32, #tpu.memory_space<vmem>>, vector<16x16xf32>
    %203 = vector.extract_strided_slice %11 {offsets = [0, 13], sizes = [16, 1], strides = [1, 1]} : vector<16x21xf32> to vector<16x1xf32>
    %204 = vector.broadcast %203 : vector<16x1xf32> to vector<16x16xf32>
    %205 = arith.mulf %202, %204 : vector<16x16xf32>
    %206 = arith.addf %201, %205 : vector<16x16xf32>
    %c0_76 = arith.constant 0 : index
    %c14_77 = arith.constant 14 : index
    %207 = vector.load %arg15[%c0_76, %c14_77] : memref<16x36xf32, #tpu.memory_space<vmem>>, vector<16x16xf32>
    %208 = vector.extract_strided_slice %11 {offsets = [0, 14], sizes = [16, 1], strides = [1, 1]} : vector<16x21xf32> to vector<16x1xf32>
    %209 = vector.broadcast %208 : vector<16x1xf32> to vector<16x16xf32>
    %210 = arith.mulf %207, %209 : vector<16x16xf32>
    %211 = arith.addf %206, %210 : vector<16x16xf32>
    %c0_78 = arith.constant 0 : index
    %c15 = arith.constant 15 : index
    %212 = vector.load %arg15[%c0_78, %c15] : memref<16x36xf32, #tpu.memory_space<vmem>>, vector<16x16xf32>
    %213 = vector.extract_strided_slice %11 {offsets = [0, 15], sizes = [16, 1], strides = [1, 1]} : vector<16x21xf32> to vector<16x1xf32>
    %214 = vector.broadcast %213 : vector<16x1xf32> to vector<16x16xf32>
    %215 = arith.mulf %212, %214 : vector<16x16xf32>
    %216 = arith.addf %211, %215 : vector<16x16xf32>
    %c0_79 = arith.constant 0 : index
    %c16 = arith.constant 16 : index
    %217 = vector.load %arg15[%c0_79, %c16] : memref<16x36xf32, #tpu.memory_space<vmem>>, vector<16x16xf32>
    %218 = vector.extract_strided_slice %11 {offsets = [0, 16], sizes = [16, 1], strides = [1, 1]} : vector<16x21xf32> to vector<16x1xf32>
    %219 = vector.broadcast %218 : vector<16x1xf32> to vector<16x16xf32>
    %220 = arith.mulf %217, %219 : vector<16x16xf32>
    %221 = arith.addf %216, %220 : vector<16x16xf32>
    %c0_80 = arith.constant 0 : index
    %c17 = arith.constant 17 : index
    %222 = vector.load %arg15[%c0_80, %c17] : memref<16x36xf32, #tpu.memory_space<vmem>>, vector<16x16xf32>
    %223 = vector.extract_strided_slice %11 {offsets = [0, 17], sizes = [16, 1], strides = [1, 1]} : vector<16x21xf32> to vector<16x1xf32>
    %224 = vector.broadcast %223 : vector<16x1xf32> to vector<16x16xf32>
    %225 = arith.mulf %222, %224 : vector<16x16xf32>
    %226 = arith.addf %221, %225 : vector<16x16xf32>
    %c0_81 = arith.constant 0 : index
    %c18 = arith.constant 18 : index
    %227 = vector.load %arg15[%c0_81, %c18] : memref<16x36xf32, #tpu.memory_space<vmem>>, vector<16x16xf32>
    %228 = vector.extract_strided_slice %11 {offsets = [0, 18], sizes = [16, 1], strides = [1, 1]} : vector<16x21xf32> to vector<16x1xf32>
    %229 = vector.broadcast %228 : vector<16x1xf32> to vector<16x16xf32>
    %230 = arith.mulf %227, %229 : vector<16x16xf32>
    %231 = arith.addf %226, %230 : vector<16x16xf32>
    %c0_82 = arith.constant 0 : index
    %c19 = arith.constant 19 : index
    %232 = vector.load %arg15[%c0_82, %c19] : memref<16x36xf32, #tpu.memory_space<vmem>>, vector<16x16xf32>
    %233 = vector.extract_strided_slice %11 {offsets = [0, 19], sizes = [16, 1], strides = [1, 1]} : vector<16x21xf32> to vector<16x1xf32>
    %234 = vector.broadcast %233 : vector<16x1xf32> to vector<16x16xf32>
    %235 = arith.mulf %232, %234 : vector<16x16xf32>
    %236 = arith.addf %231, %235 : vector<16x16xf32>
    %c0_83 = arith.constant 0 : index
    %c20 = arith.constant 20 : index
    %237 = vector.load %arg15[%c0_83, %c20] : memref<16x36xf32, #tpu.memory_space<vmem>>, vector<16x16xf32>
    %238 = vector.extract_strided_slice %11 {offsets = [0, 20], sizes = [16, 1], strides = [1, 1]} : vector<16x21xf32> to vector<16x1xf32>
    %239 = vector.broadcast %238 : vector<16x1xf32> to vector<16x16xf32>
    %240 = arith.mulf %237, %239 : vector<16x16xf32>
    %241 = arith.addf %236, %240 : vector<16x16xf32>
    %242 = vector.broadcast %23 : vector<1x16xf32> to vector<16x16xf32>
    %243 = arith.mulf %241, %242 : vector<16x16xf32>
    %244 = vector.shape_cast %243 : vector<16x16xf32> to vector<1x16x16xf32>
    %cst_84 = arith.constant dense<0.000000e+00> : vector<1xf32>
    %245 = vector.multi_reduction <add>, %244, %cst_84 [1, 2] : vector<1x16x16xf32> to vector<1xf32>
    %246 = vector.shape_cast %245 : vector<1xf32> to vector<1x1x1xf32>
    %247 = vector.extract %246[0, 0, 0] : f32 from vector<1x1x1xf32>
    %248 = arith.mulf %247, %27 : f32
    %249 = vector.broadcast %248 : f32 to vector<16x16xf32>
    %250 = arith.subf %243, %249 : vector<16x16xf32>
    %251 = vector.broadcast %23 : vector<1x16xf32> to vector<16x16xf32>
    %252 = arith.mulf %250, %251 : vector<16x16xf32>
    %253 = arith.mulf %252, %252 : vector<16x16xf32>
    %254 = vector.shape_cast %253 : vector<16x16xf32> to vector<1x16x16xf32>
    %cst_85 = arith.constant dense<0.000000e+00> : vector<1xf32>
    %255 = vector.multi_reduction <add>, %254, %cst_85 [1, 2] : vector<1x16x16xf32> to vector<1xf32>
    %256 = vector.shape_cast %255 : vector<1xf32> to vector<1x1x1xf32>
    %257 = vector.extract %256[0, 0, 0] : f32 from vector<1x1x1xf32>
    %258 = arith.mulf %257, %27 : f32
    %cst_86 = arith.constant 9.99999997E-7 : f32
    %259 = arith.addf %258, %cst_86 : f32
    %260 = math.rsqrt %259 : f32
    %261 = vector.broadcast %260 : f32 to vector<16x16xf32>
    %262 = arith.mulf %252, %261 : vector<16x16xf32>
    %263 = vector.broadcast %12 : vector<16x1xf32> to vector<16x16xf32>
    %264 = arith.mulf %262, %263 : vector<16x16xf32>
    %265 = vector.broadcast %13 : vector<16x1xf32> to vector<16x16xf32>
    %266 = arith.addf %264, %265 : vector<16x16xf32>
    %cst_87 = arith.constant 0.000000e+00 : f32
    %267 = vector.broadcast %cst_87 : f32 to vector<16x16xf32>
    %268 = arith.maximumf %266, %267 : vector<16x16xf32>
    %269 = vector.broadcast %23 : vector<1x16xf32> to vector<16x16xf32>
    %270 = arith.mulf %268, %269 : vector<16x16xf32>
    %271 = tpu.concatenate %59, %135, %270 in 0 : vector<16x16xf32>, vector<16x16xf32>, vector<16x16xf32> -> vector<48x16xf32>
    %cst_88 = arith.constant dense<0.000000e+00> : vector<5x16xf32>
    %272 = tpu.matmul %14, %271, %cst_88 {dimension_numbers = #tpu.dot_dimension_numbers<[1], [0], [0], [1], [0, 0, 1, 1], [], []>} : vector<5x48xf32>, vector<48x16xf32>, vector<5x16xf32> -> vector<5x16xf32>
    %273 = vector.broadcast %15 : vector<5x1xf32> to vector<5x16xf32>
    %274 = arith.addf %272, %273 : vector<5x16xf32>
    %275 = vector.broadcast %23 : vector<1x16xf32> to vector<5x16xf32>
    %276 = arith.mulf %274, %275 : vector<5x16xf32>
    %c0_89 = arith.constant 0 : index
    %c3_90 = arith.constant 3 : index
    %277 = vector.load %arg16[%c0_89, %c3_90] : memref<5x22xf32, #tpu.memory_space<vmem>>, vector<5x16xf32>
    tpu.vector_store %arg16[%c0_89, %c3_90], %276 {strides = array<i32>} : memref<5x22xf32, #tpu.memory_space<vmem>>, vector<5x16xf32>,
    %c0_91 = arith.constant 0 : index
    %c0_92 = arith.constant 0 : index
    %278 = vector.load %arg16[%c0_91, %c0_92] : memref<5x22xf32, #tpu.memory_space<vmem>>, vector<5x16xf32>
    %cst_93 = arith.constant 0.00443304796 : f32
    %279 = vector.broadcast %cst_93 : f32 to vector<5x16xf32>
    %280 = arith.mulf %279, %278 : vector<5x16xf32>
    %c0_94 = arith.constant 0 : index
    %c1_95 = arith.constant 1 : index
    %281 = vector.load %arg16[%c0_94, %c1_95] : memref<5x22xf32, #tpu.memory_space<vmem>>, vector<5x16xf32>
    %cst_96 = arith.constant 0.0540055819 : f32
    %282 = vector.broadcast %cst_96 : f32 to vector<5x16xf32>
    %283 = arith.mulf %282, %281 : vector<5x16xf32>
    %284 = arith.addf %280, %283 : vector<5x16xf32>
    %c0_97 = arith.constant 0 : index
    %c2_98 = arith.constant 2 : index
    %285 = vector.load %arg16[%c0_97, %c2_98] : memref<5x22xf32, #tpu.memory_space<vmem>>, vector<5x16xf32>
    %cst_99 = arith.constant 0.242036223 : f32
    %286 = vector.broadcast %cst_99 : f32 to vector<5x16xf32>
    %287 = arith.mulf %286, %285 : vector<5x16xf32>
    %288 = arith.addf %284, %287 : vector<5x16xf32>
    %c0_100 = arith.constant 0 : index
    %c3_101 = arith.constant 3 : index
    %289 = vector.load %arg16[%c0_100, %c3_101] : memref<5x22xf32, #tpu.memory_space<vmem>>, vector<5x16xf32>
    %cst_102 = arith.constant 0.399050266 : f32
    %290 = vector.broadcast %cst_102 : f32 to vector<5x16xf32>
    %291 = arith.mulf %290, %289 : vector<5x16xf32>
    %292 = arith.addf %288, %291 : vector<5x16xf32>
    %c0_103 = arith.constant 0 : index
    %c4_104 = arith.constant 4 : index
    %293 = vector.load %arg16[%c0_103, %c4_104] : memref<5x22xf32, #tpu.memory_space<vmem>>, vector<5x16xf32>
    %cst_105 = arith.constant 0.242036223 : f32
    %294 = vector.broadcast %cst_105 : f32 to vector<5x16xf32>
    %295 = arith.mulf %294, %293 : vector<5x16xf32>
    %296 = arith.addf %292, %295 : vector<5x16xf32>
    %c0_106 = arith.constant 0 : index
    %c5_107 = arith.constant 5 : index
    %297 = vector.load %arg16[%c0_106, %c5_107] : memref<5x22xf32, #tpu.memory_space<vmem>>, vector<5x16xf32>
    %cst_108 = arith.constant 0.0540055819 : f32
    %298 = vector.broadcast %cst_108 : f32 to vector<5x16xf32>
    %299 = arith.mulf %298, %297 : vector<5x16xf32>
    %300 = arith.addf %296, %299 : vector<5x16xf32>
    %c0_109 = arith.constant 0 : index
    %c6_110 = arith.constant 6 : index
    %301 = vector.load %arg16[%c0_109, %c6_110] : memref<5x22xf32, #tpu.memory_space<vmem>>, vector<5x16xf32>
    %cst_111 = arith.constant 0.00443304796 : f32
    %302 = vector.broadcast %cst_111 : f32 to vector<5x16xf32>
    %303 = arith.mulf %302, %301 : vector<5x16xf32>
    %304 = arith.addf %300, %303 : vector<5x16xf32>
    %c0_112 = arith.constant 0 : index
    %c0_113 = arith.constant 0 : index
    %c0_114 = arith.constant 0 : index
    %305 = vector.load %arg14[%c0_112, %c0_113, %c0_114] : memref<2x5x16xf32, #tpu.memory_space<vmem>>, vector<1x5x16xf32>
    %306 = vector.shape_cast %305 : vector<1x5x16xf32> to vector<5x16xf32>
    %307 = vector.shape_cast %304 : vector<5x16xf32> to vector<1x5x16xf32>
    tpu.vector_store %arg14[%c0_112, %c0_113, %c0_114], %307 {strides = array<i32>} : memref<2x5x16xf32, #tpu.memory_space<vmem>>, vector<1x5x16xf32>,
    %c1_i32_115 = arith.constant 1 : i32
    %308 = arith.addi %0, %c1_i32_115 : i32
    %309 = arith.index_cast %308 : i32 to index
    %310 = memref.load %arg1[%309] : memref<2xi32, #tpu.memory_space<smem>>
    %311 = vector.broadcast %310 : i32 to vector<1x16xi32>
    %312 = arith.cmpi slt, %16, %311 : vector<1x16xi32>
    %313 = arith.extui %312 : vector<1x16xi1> to vector<1x16xi32>
    %314 = arith.sitofp %313 : vector<1x16xi32> to vector<1x16xf32>
    %c1_i32_116 = arith.constant 1 : i32
    %315 = arith.maxsi %310, %c1_i32_116 : i32
    %316 = arith.sitofp %315 : i32 to f32
    %cst_117 = arith.constant 1.600000e+01 : f32
    %317 = arith.mulf %316, %cst_117 : f32
    %cst_118 = arith.constant 1.000000e+00 : f32
    %318 = arith.divf %cst_118, %317 : f32
    %c1_119 = arith.constant 1 : index
    %c0_120 = arith.constant 0 : index
    %c0_121 = arith.constant 0 : index
    %319 = vector.load %arg2[%c1_119, %c0_120, %c0_121] : memref<2x1024x16xbf16, #tpu.memory_space<vmem>>, vector<1x1024x16xbf16>
    %320 = vector.shape_cast %319 : vector<1x1024x16xbf16> to vector<1024x16xbf16>
    %cst_122 = arith.constant dense<0.000000e+00> : vector<16x16xf32>
    %321 = tpu.matmul %5, %320, %cst_122 {dimension_numbers = #tpu.dot_dimension_numbers<[1], [0], [0], [1], [0, 0, 1, 1], [], []>} : vector<16x1024xbf16>, vector<1024x16xbf16>, vector<16x16xf32> -> vector<16x16xf32>
    %322 = vector.broadcast %314 : vector<1x16xf32> to vector<16x16xf32>
    %323 = arith.mulf %321, %322 : vector<16x16xf32>
    %324 = vector.shape_cast %323 : vector<16x16xf32> to vector<1x16x16xf32>
    %cst_123 = arith.constant dense<0.000000e+00> : vector<1xf32>
    %325 = vector.multi_reduction <add>, %324, %cst_123 [1, 2] : vector<1x16x16xf32> to vector<1xf32>
    %326 = vector.shape_cast %325 : vector<1xf32> to vector<1x1x1xf32>
    %327 = vector.extract %326[0, 0, 0] : f32 from vector<1x1x1xf32>
    %328 = arith.mulf %327, %318 : f32
    %329 = vector.broadcast %328 : f32 to vector<16x16xf32>
    %330 = arith.subf %323, %329 : vector<16x16xf32>
    %331 = vector.broadcast %314 : vector<1x16xf32> to vector<16x16xf32>
    %332 = arith.mulf %330, %331 : vector<16x16xf32>
    %333 = arith.mulf %332, %332 : vector<16x16xf32>
    %334 = vector.shape_cast %333 : vector<16x16xf32> to vector<1x16x16xf32>
    %cst_124 = arith.constant dense<0.000000e+00> : vector<1xf32>
    %335 = vector.multi_reduction <add>, %334, %cst_124 [1, 2] : vector<1x16x16xf32> to vector<1xf32>
    %336 = vector.shape_cast %335 : vector<1xf32> to vector<1x1x1xf32>
    %337 = vector.extract %336[0, 0, 0] : f32 from vector<1x1x1xf32>
    %338 = arith.mulf %337, %318 : f32
    %cst_125 = arith.constant 9.99999997E-7 : f32
    %339 = arith.addf %338, %cst_125 : f32
    %340 = math.rsqrt %339 : f32
    %341 = vector.broadcast %340 : f32 to vector<16x16xf32>
    %342 = arith.mulf %332, %341 : vector<16x16xf32>
    %343 = vector.broadcast %6 : vector<16x1xf32> to vector<16x16xf32>
    %344 = arith.mulf %342, %343 : vector<16x16xf32>
    %345 = vector.broadcast %7 : vector<16x1xf32> to vector<16x16xf32>
    %346 = arith.addf %344, %345 : vector<16x16xf32>
    %cst_126 = arith.constant 0.000000e+00 : f32
    %347 = vector.broadcast %cst_126 : f32 to vector<16x16xf32>
    %348 = arith.maximumf %346, %347 : vector<16x16xf32>
    %349 = vector.broadcast %314 : vector<1x16xf32> to vector<16x16xf32>
    %350 = arith.mulf %348, %349 : vector<16x16xf32>
    %c0_127 = arith.constant 0 : index
    %c10_128 = arith.constant 10 : index
    %351 = vector.load %arg15[%c0_127, %c10_128] : memref<16x36xf32, #tpu.memory_space<vmem>>, vector<16x16xf32>
    tpu.vector_store %arg15[%c0_127, %c10_128], %350 {strides = array<i32>} : memref<16x36xf32, #tpu.memory_space<vmem>>, vector<16x16xf32>,
    %cst_129 = arith.constant 0.000000e+00 : f32
    %352 = vector.broadcast %cst_129 : f32 to vector<16x16xf32>
    %c0_130 = arith.constant 0 : index
    %c6_131 = arith.constant 6 : index
    %353 = vector.load %arg15[%c0_130, %c6_131] : memref<16x36xf32, #tpu.memory_space<vmem>>, vector<16x16xf32>
    %354 = vector.extract_strided_slice %8 {offsets = [0, 0], sizes = [16, 1], strides = [1, 1]} : vector<16x9xf32> to vector<16x1xf32>
    %355 = vector.broadcast %354 : vector<16x1xf32> to vector<16x16xf32>
    %356 = arith.mulf %353, %355 : vector<16x16xf32>
    %357 = arith.addf %352, %356 : vector<16x16xf32>
    %c0_132 = arith.constant 0 : index
    %c7_133 = arith.constant 7 : index
    %358 = vector.load %arg15[%c0_132, %c7_133] : memref<16x36xf32, #tpu.memory_space<vmem>>, vector<16x16xf32>
    %359 = vector.extract_strided_slice %8 {offsets = [0, 1], sizes = [16, 1], strides = [1, 1]} : vector<16x9xf32> to vector<16x1xf32>
    %360 = vector.broadcast %359 : vector<16x1xf32> to vector<16x16xf32>
    %361 = arith.mulf %358, %360 : vector<16x16xf32>
    %362 = arith.addf %357, %361 : vector<16x16xf32>
    %c0_134 = arith.constant 0 : index
    %c8_135 = arith.constant 8 : index
    %363 = vector.load %arg15[%c0_134, %c8_135] : memref<16x36xf32, #tpu.memory_space<vmem>>, vector<16x16xf32>
    %364 = vector.extract_strided_slice %8 {offsets = [0, 2], sizes = [16, 1], strides = [1, 1]} : vector<16x9xf32> to vector<16x1xf32>
    %365 = vector.broadcast %364 : vector<16x1xf32> to vector<16x16xf32>
    %366 = arith.mulf %363, %365 : vector<16x16xf32>
    %367 = arith.addf %362, %366 : vector<16x16xf32>
    %c0_136 = arith.constant 0 : index
    %c9_137 = arith.constant 9 : index
    %368 = vector.load %arg15[%c0_136, %c9_137] : memref<16x36xf32, #tpu.memory_space<vmem>>, vector<16x16xf32>
    %369 = vector.extract_strided_slice %8 {offsets = [0, 3], sizes = [16, 1], strides = [1, 1]} : vector<16x9xf32> to vector<16x1xf32>
    %370 = vector.broadcast %369 : vector<16x1xf32> to vector<16x16xf32>
    %371 = arith.mulf %368, %370 : vector<16x16xf32>
    %372 = arith.addf %367, %371 : vector<16x16xf32>
    %c0_138 = arith.constant 0 : index
    %c10_139 = arith.constant 10 : index
    %373 = vector.load %arg15[%c0_138, %c10_139] : memref<16x36xf32, #tpu.memory_space<vmem>>, vector<16x16xf32>
    %374 = vector.extract_strided_slice %8 {offsets = [0, 4], sizes = [16, 1], strides = [1, 1]} : vector<16x9xf32> to vector<16x1xf32>
    %375 = vector.broadcast %374 : vector<16x1xf32> to vector<16x16xf32>
    %376 = arith.mulf %373, %375 : vector<16x16xf32>
    %377 = arith.addf %372, %376 : vector<16x16xf32>
    %c0_140 = arith.constant 0 : index
    %c11_141 = arith.constant 11 : index
    %378 = vector.load %arg15[%c0_140, %c11_141] : memref<16x36xf32, #tpu.memory_space<vmem>>, vector<16x16xf32>
    %379 = vector.extract_strided_slice %8 {offsets = [0, 5], sizes = [16, 1], strides = [1, 1]} : vector<16x9xf32> to vector<16x1xf32>
    %380 = vector.broadcast %379 : vector<16x1xf32> to vector<16x16xf32>
    %381 = arith.mulf %378, %380 : vector<16x16xf32>
    %382 = arith.addf %377, %381 : vector<16x16xf32>
    %c0_142 = arith.constant 0 : index
    %c12_143 = arith.constant 12 : index
    %383 = vector.load %arg15[%c0_142, %c12_143] : memref<16x36xf32, #tpu.memory_space<vmem>>, vector<16x16xf32>
    %384 = vector.extract_strided_slice %8 {offsets = [0, 6], sizes = [16, 1], strides = [1, 1]} : vector<16x9xf32> to vector<16x1xf32>
    %385 = vector.broadcast %384 : vector<16x1xf32> to vector<16x16xf32>
    %386 = arith.mulf %383, %385 : vector<16x16xf32>
    %387 = arith.addf %382, %386 : vector<16x16xf32>
    %c0_144 = arith.constant 0 : index
    %c13_145 = arith.constant 13 : index
    %388 = vector.load %arg15[%c0_144, %c13_145] : memref<16x36xf32, #tpu.memory_space<vmem>>, vector<16x16xf32>
    %389 = vector.extract_strided_slice %8 {offsets = [0, 7], sizes = [16, 1], strides = [1, 1]} : vector<16x9xf32> to vector<16x1xf32>
    %390 = vector.broadcast %389 : vector<16x1xf32> to vector<16x16xf32>
    %391 = arith.mulf %388, %390 : vector<16x16xf32>
    %392 = arith.addf %387, %391 : vector<16x16xf32>
    %c0_146 = arith.constant 0 : index
    %c14_147 = arith.constant 14 : index
    %393 = vector.load %arg15[%c0_146, %c14_147] : memref<16x36xf32, #tpu.memory_space<vmem>>, vector<16x16xf32>
    %394 = vector.extract_strided_slice %8 {offsets = [0, 8], sizes = [16, 1], strides = [1, 1]} : vector<16x9xf32> to vector<16x1xf32>
    %395 = vector.broadcast %394 : vector<16x1xf32> to vector<16x16xf32>
    %396 = arith.mulf %393, %395 : vector<16x16xf32>
    %397 = arith.addf %392, %396 : vector<16x16xf32>
    %398 = vector.broadcast %314 : vector<1x16xf32> to vector<16x16xf32>
    %399 = arith.mulf %397, %398 : vector<16x16xf32>
    %400 = vector.shape_cast %399 : vector<16x16xf32> to vector<1x16x16xf32>
    %cst_148 = arith.constant dense<0.000000e+00> : vector<1xf32>
    %401 = vector.multi_reduction <add>, %400, %cst_148 [1, 2] : vector<1x16x16xf32> to vector<1xf32>
    %402 = vector.shape_cast %401 : vector<1xf32> to vector<1x1x1xf32>
    %403 = vector.extract %402[0, 0, 0] : f32 from vector<1x1x1xf32>
    %404 = arith.mulf %403, %318 : f32
    %405 = vector.broadcast %404 : f32 to vector<16x16xf32>
    %406 = arith.subf %399, %405 : vector<16x16xf32>
    %407 = vector.broadcast %314 : vector<1x16xf32> to vector<16x16xf32>
    %408 = arith.mulf %406, %407 : vector<16x16xf32>
    %409 = arith.mulf %408, %408 : vector<16x16xf32>
    %410 = vector.shape_cast %409 : vector<16x16xf32> to vector<1x16x16xf32>
    %cst_149 = arith.constant dense<0.000000e+00> : vector<1xf32>
    %411 = vector.multi_reduction <add>, %410, %cst_149 [1, 2] : vector<1x16x16xf32> to vector<1xf32>
    %412 = vector.shape_cast %411 : vector<1xf32> to vector<1x1x1xf32>
    %413 = vector.extract %412[0, 0, 0] : f32 from vector<1x1x1xf32>
    %414 = arith.mulf %413, %318 : f32
    %cst_150 = arith.constant 9.99999997E-7 : f32
    %415 = arith.addf %414, %cst_150 : f32
    %416 = math.rsqrt %415 : f32
    %417 = vector.broadcast %416 : f32 to vector<16x16xf32>
    %418 = arith.mulf %408, %417 : vector<16x16xf32>
    %419 = vector.broadcast %9 : vector<16x1xf32> to vector<16x16xf32>
    %420 = arith.mulf %418, %419 : vector<16x16xf32>
    %421 = vector.broadcast %10 : vector<16x1xf32> to vector<16x16xf32>
    %422 = arith.addf %420, %421 : vector<16x16xf32>
    %cst_151 = arith.constant 0.000000e+00 : f32
    %423 = vector.broadcast %cst_151 : f32 to vector<16x16xf32>
    %424 = arith.maximumf %422, %423 : vector<16x16xf32>
    %425 = vector.broadcast %314 : vector<1x16xf32> to vector<16x16xf32>
    %426 = arith.mulf %424, %425 : vector<16x16xf32>
    %cst_152 = arith.constant 0.000000e+00 : f32
    %427 = vector.broadcast %cst_152 : f32 to vector<16x16xf32>
    %c0_153 = arith.constant 0 : index
    %c0_154 = arith.constant 0 : index
    %428 = vector.load %arg15[%c0_153, %c0_154] : memref<16x36xf32, #tpu.memory_space<vmem>>, vector<16x16xf32>
    %429 = vector.extract_strided_slice %11 {offsets = [0, 0], sizes = [16, 1], strides = [1, 1]} : vector<16x21xf32> to vector<16x1xf32>
    %430 = vector.broadcast %429 : vector<16x1xf32> to vector<16x16xf32>
    %431 = arith.mulf %428, %430 : vector<16x16xf32>
    %432 = arith.addf %427, %431 : vector<16x16xf32>
    %c0_155 = arith.constant 0 : index
    %c1_156 = arith.constant 1 : index
    %433 = vector.load %arg15[%c0_155, %c1_156] : memref<16x36xf32, #tpu.memory_space<vmem>>, vector<16x16xf32>
    %434 = vector.extract_strided_slice %11 {offsets = [0, 1], sizes = [16, 1], strides = [1, 1]} : vector<16x21xf32> to vector<16x1xf32>
    %435 = vector.broadcast %434 : vector<16x1xf32> to vector<16x16xf32>
    %436 = arith.mulf %433, %435 : vector<16x16xf32>
    %437 = arith.addf %432, %436 : vector<16x16xf32>
    %c0_157 = arith.constant 0 : index
    %c2_158 = arith.constant 2 : index
    %438 = vector.load %arg15[%c0_157, %c2_158] : memref<16x36xf32, #tpu.memory_space<vmem>>, vector<16x16xf32>
    %439 = vector.extract_strided_slice %11 {offsets = [0, 2], sizes = [16, 1], strides = [1, 1]} : vector<16x21xf32> to vector<16x1xf32>
    %440 = vector.broadcast %439 : vector<16x1xf32> to vector<16x16xf32>
    %441 = arith.mulf %438, %440 : vector<16x16xf32>
    %442 = arith.addf %437, %441 : vector<16x16xf32>
    %c0_159 = arith.constant 0 : index
    %c3_160 = arith.constant 3 : index
    %443 = vector.load %arg15[%c0_159, %c3_160] : memref<16x36xf32, #tpu.memory_space<vmem>>, vector<16x16xf32>
    %444 = vector.extract_strided_slice %11 {offsets = [0, 3], sizes = [16, 1], strides = [1, 1]} : vector<16x21xf32> to vector<16x1xf32>
    %445 = vector.broadcast %444 : vector<16x1xf32> to vector<16x16xf32>
    %446 = arith.mulf %443, %445 : vector<16x16xf32>
    %447 = arith.addf %442, %446 : vector<16x16xf32>
    %c0_161 = arith.constant 0 : index
    %c4_162 = arith.constant 4 : index
    %448 = vector.load %arg15[%c0_161, %c4_162] : memref<16x36xf32, #tpu.memory_space<vmem>>, vector<16x16xf32>
    %449 = vector.extract_strided_slice %11 {offsets = [0, 4], sizes = [16, 1], strides = [1, 1]} : vector<16x21xf32> to vector<16x1xf32>
    %450 = vector.broadcast %449 : vector<16x1xf32> to vector<16x16xf32>
    %451 = arith.mulf %448, %450 : vector<16x16xf32>
    %452 = arith.addf %447, %451 : vector<16x16xf32>
    %c0_163 = arith.constant 0 : index
    %c5_164 = arith.constant 5 : index
    %453 = vector.load %arg15[%c0_163, %c5_164] : memref<16x36xf32, #tpu.memory_space<vmem>>, vector<16x16xf32>
    %454 = vector.extract_strided_slice %11 {offsets = [0, 5], sizes = [16, 1], strides = [1, 1]} : vector<16x21xf32> to vector<16x1xf32>
    %455 = vector.broadcast %454 : vector<16x1xf32> to vector<16x16xf32>
    %456 = arith.mulf %453, %455 : vector<16x16xf32>
    %457 = arith.addf %452, %456 : vector<16x16xf32>
    %c0_165 = arith.constant 0 : index
    %c6_166 = arith.constant 6 : index
    %458 = vector.load %arg15[%c0_165, %c6_166] : memref<16x36xf32, #tpu.memory_space<vmem>>, vector<16x16xf32>
    %459 = vector.extract_strided_slice %11 {offsets = [0, 6], sizes = [16, 1], strides = [1, 1]} : vector<16x21xf32> to vector<16x1xf32>
    %460 = vector.broadcast %459 : vector<16x1xf32> to vector<16x16xf32>
    %461 = arith.mulf %458, %460 : vector<16x16xf32>
    %462 = arith.addf %457, %461 : vector<16x16xf32>
    %c0_167 = arith.constant 0 : index
    %c7_168 = arith.constant 7 : index
    %463 = vector.load %arg15[%c0_167, %c7_168] : memref<16x36xf32, #tpu.memory_space<vmem>>, vector<16x16xf32>
    %464 = vector.extract_strided_slice %11 {offsets = [0, 7], sizes = [16, 1], strides = [1, 1]} : vector<16x21xf32> to vector<16x1xf32>
    %465 = vector.broadcast %464 : vector<16x1xf32> to vector<16x16xf32>
    %466 = arith.mulf %463, %465 : vector<16x16xf32>
    %467 = arith.addf %462, %466 : vector<16x16xf32>
    %c0_169 = arith.constant 0 : index
    %c8_170 = arith.constant 8 : index
    %468 = vector.load %arg15[%c0_169, %c8_170] : memref<16x36xf32, #tpu.memory_space<vmem>>, vector<16x16xf32>
    %469 = vector.extract_strided_slice %11 {offsets = [0, 8], sizes = [16, 1], strides = [1, 1]} : vector<16x21xf32> to vector<16x1xf32>
    %470 = vector.broadcast %469 : vector<16x1xf32> to vector<16x16xf32>
    %471 = arith.mulf %468, %470 : vector<16x16xf32>
    %472 = arith.addf %467, %471 : vector<16x16xf32>
    %c0_171 = arith.constant 0 : index
    %c9_172 = arith.constant 9 : index
    %473 = vector.load %arg15[%c0_171, %c9_172] : memref<16x36xf32, #tpu.memory_space<vmem>>, vector<16x16xf32>
    %474 = vector.extract_strided_slice %11 {offsets = [0, 9], sizes = [16, 1], strides = [1, 1]} : vector<16x21xf32> to vector<16x1xf32>
    %475 = vector.broadcast %474 : vector<16x1xf32> to vector<16x16xf32>
    %476 = arith.mulf %473, %475 : vector<16x16xf32>
    %477 = arith.addf %472, %476 : vector<16x16xf32>
    %c0_173 = arith.constant 0 : index
    %c10_174 = arith.constant 10 : index
    %478 = vector.load %arg15[%c0_173, %c10_174] : memref<16x36xf32, #tpu.memory_space<vmem>>, vector<16x16xf32>
    %479 = vector.extract_strided_slice %11 {offsets = [0, 10], sizes = [16, 1], strides = [1, 1]} : vector<16x21xf32> to vector<16x1xf32>
    %480 = vector.broadcast %479 : vector<16x1xf32> to vector<16x16xf32>
    %481 = arith.mulf %478, %480 : vector<16x16xf32>
    %482 = arith.addf %477, %481 : vector<16x16xf32>
    %c0_175 = arith.constant 0 : index
    %c11_176 = arith.constant 11 : index
    %483 = vector.load %arg15[%c0_175, %c11_176] : memref<16x36xf32, #tpu.memory_space<vmem>>, vector<16x16xf32>
    %484 = vector.extract_strided_slice %11 {offsets = [0, 11], sizes = [16, 1], strides = [1, 1]} : vector<16x21xf32> to vector<16x1xf32>
    %485 = vector.broadcast %484 : vector<16x1xf32> to vector<16x16xf32>
    %486 = arith.mulf %483, %485 : vector<16x16xf32>
    %487 = arith.addf %482, %486 : vector<16x16xf32>
    %c0_177 = arith.constant 0 : index
    %c12_178 = arith.constant 12 : index
    %488 = vector.load %arg15[%c0_177, %c12_178] : memref<16x36xf32, #tpu.memory_space<vmem>>, vector<16x16xf32>
    %489 = vector.extract_strided_slice %11 {offsets = [0, 12], sizes = [16, 1], strides = [1, 1]} : vector<16x21xf32> to vector<16x1xf32>
    %490 = vector.broadcast %489 : vector<16x1xf32> to vector<16x16xf32>
    %491 = arith.mulf %488, %490 : vector<16x16xf32>
    %492 = arith.addf %487, %491 : vector<16x16xf32>
    %c0_179 = arith.constant 0 : index
    %c13_180 = arith.constant 13 : index
    %493 = vector.load %arg15[%c0_179, %c13_180] : memref<16x36xf32, #tpu.memory_space<vmem>>, vector<16x16xf32>
    %494 = vector.extract_strided_slice %11 {offsets = [0, 13], sizes = [16, 1], strides = [1, 1]} : vector<16x21xf32> to vector<16x1xf32>
    %495 = vector.broadcast %494 : vector<16x1xf32> to vector<16x16xf32>
    %496 = arith.mulf %493, %495 : vector<16x16xf32>
    %497 = arith.addf %492, %496 : vector<16x16xf32>
    %c0_181 = arith.constant 0 : index
    %c14_182 = arith.constant 14 : index
    %498 = vector.load %arg15[%c0_181, %c14_182] : memref<16x36xf32, #tpu.memory_space<vmem>>, vector<16x16xf32>
    %499 = vector.extract_strided_slice %11 {offsets = [0, 14], sizes = [16, 1], strides = [1, 1]} : vector<16x21xf32> to vector<16x1xf32>
    %500 = vector.broadcast %499 : vector<16x1xf32> to vector<16x16xf32>
    %501 = arith.mulf %498, %500 : vector<16x16xf32>
    %502 = arith.addf %497, %501 : vector<16x16xf32>
    %c0_183 = arith.constant 0 : index
    %c15_184 = arith.constant 15 : index
    %503 = vector.load %arg15[%c0_183, %c15_184] : memref<16x36xf32, #tpu.memory_space<vmem>>, vector<16x16xf32>
    %504 = vector.extract_strided_slice %11 {offsets = [0, 15], sizes = [16, 1], strides = [1, 1]} : vector<16x21xf32> to vector<16x1xf32>
    %505 = vector.broadcast %504 : vector<16x1xf32> to vector<16x16xf32>
    %506 = arith.mulf %503, %505 : vector<16x16xf32>
    %507 = arith.addf %502, %506 : vector<16x16xf32>
    %c0_185 = arith.constant 0 : index
    %c16_186 = arith.constant 16 : index
    %508 = vector.load %arg15[%c0_185, %c16_186] : memref<16x36xf32, #tpu.memory_space<vmem>>, vector<16x16xf32>
    %509 = vector.extract_strided_slice %11 {offsets = [0, 16], sizes = [16, 1], strides = [1, 1]} : vector<16x21xf32> to vector<16x1xf32>
    %510 = vector.broadcast %509 : vector<16x1xf32> to vector<16x16xf32>
    %511 = arith.mulf %508, %510 : vector<16x16xf32>
    %512 = arith.addf %507, %511 : vector<16x16xf32>
    %c0_187 = arith.constant 0 : index
    %c17_188 = arith.constant 17 : index
    %513 = vector.load %arg15[%c0_187, %c17_188] : memref<16x36xf32, #tpu.memory_space<vmem>>, vector<16x16xf32>
    %514 = vector.extract_strided_slice %11 {offsets = [0, 17], sizes = [16, 1], strides = [1, 1]} : vector<16x21xf32> to vector<16x1xf32>
    %515 = vector.broadcast %514 : vector<16x1xf32> to vector<16x16xf32>
    %516 = arith.mulf %513, %515 : vector<16x16xf32>
    %517 = arith.addf %512, %516 : vector<16x16xf32>
    %c0_189 = arith.constant 0 : index
    %c18_190 = arith.constant 18 : index
    %518 = vector.load %arg15[%c0_189, %c18_190] : memref<16x36xf32, #tpu.memory_space<vmem>>, vector<16x16xf32>
    %519 = vector.extract_strided_slice %11 {offsets = [0, 18], sizes = [16, 1], strides = [1, 1]} : vector<16x21xf32> to vector<16x1xf32>
    %520 = vector.broadcast %519 : vector<16x1xf32> to vector<16x16xf32>
    %521 = arith.mulf %518, %520 : vector<16x16xf32>
    %522 = arith.addf %517, %521 : vector<16x16xf32>
    %c0_191 = arith.constant 0 : index
    %c19_192 = arith.constant 19 : index
    %523 = vector.load %arg15[%c0_191, %c19_192] : memref<16x36xf32, #tpu.memory_space<vmem>>, vector<16x16xf32>
    %524 = vector.extract_strided_slice %11 {offsets = [0, 19], sizes = [16, 1], strides = [1, 1]} : vector<16x21xf32> to vector<16x1xf32>
    %525 = vector.broadcast %524 : vector<16x1xf32> to vector<16x16xf32>
    %526 = arith.mulf %523, %525 : vector<16x16xf32>
    %527 = arith.addf %522, %526 : vector<16x16xf32>
    %c0_193 = arith.constant 0 : index
    %c20_194 = arith.constant 20 : index
    %528 = vector.load %arg15[%c0_193, %c20_194] : memref<16x36xf32, #tpu.memory_space<vmem>>, vector<16x16xf32>
    %529 = vector.extract_strided_slice %11 {offsets = [0, 20], sizes = [16, 1], strides = [1, 1]} : vector<16x21xf32> to vector<16x1xf32>
    %530 = vector.broadcast %529 : vector<16x1xf32> to vector<16x16xf32>
    %531 = arith.mulf %528, %530 : vector<16x16xf32>
    %532 = arith.addf %527, %531 : vector<16x16xf32>
    %533 = vector.broadcast %314 : vector<1x16xf32> to vector<16x16xf32>
    %534 = arith.mulf %532, %533 : vector<16x16xf32>
    %535 = vector.shape_cast %534 : vector<16x16xf32> to vector<1x16x16xf32>
    %cst_195 = arith.constant dense<0.000000e+00> : vector<1xf32>
    %536 = vector.multi_reduction <add>, %535, %cst_195 [1, 2] : vector<1x16x16xf32> to vector<1xf32>
    %537 = vector.shape_cast %536 : vector<1xf32> to vector<1x1x1xf32>
    %538 = vector.extract %537[0, 0, 0] : f32 from vector<1x1x1xf32>
    %539 = arith.mulf %538, %318 : f32
    %540 = vector.broadcast %539 : f32 to vector<16x16xf32>
    %541 = arith.subf %534, %540 : vector<16x16xf32>
    %542 = vector.broadcast %314 : vector<1x16xf32> to vector<16x16xf32>
    %543 = arith.mulf %541, %542 : vector<16x16xf32>
    %544 = arith.mulf %543, %543 : vector<16x16xf32>
    %545 = vector.shape_cast %544 : vector<16x16xf32> to vector<1x16x16xf32>
    %cst_196 = arith.constant dense<0.000000e+00> : vector<1xf32>
    %546 = vector.multi_reduction <add>, %545, %cst_196 [1, 2] : vector<1x16x16xf32> to vector<1xf32>
    %547 = vector.shape_cast %546 : vector<1xf32> to vector<1x1x1xf32>
    %548 = vector.extract %547[0, 0, 0] : f32 from vector<1x1x1xf32>
    %549 = arith.mulf %548, %318 : f32
    %cst_197 = arith.constant 9.99999997E-7 : f32
    %550 = arith.addf %549, %cst_197 : f32
    %551 = math.rsqrt %550 : f32
    %552 = vector.broadcast %551 : f32 to vector<16x16xf32>
    %553 = arith.mulf %543, %552 : vector<16x16xf32>
    %554 = vector.broadcast %12 : vector<16x1xf32> to vector<16x16xf32>
    %555 = arith.mulf %553, %554 : vector<16x16xf32>
    %556 = vector.broadcast %13 : vector<16x1xf32> to vector<16x16xf32>
    %557 = arith.addf %555, %556 : vector<16x16xf32>
    %cst_198 = arith.constant 0.000000e+00 : f32
    %558 = vector.broadcast %cst_198 : f32 to vector<16x16xf32>
    %559 = arith.maximumf %557, %558 : vector<16x16xf32>
    %560 = vector.broadcast %314 : vector<1x16xf32> to vector<16x16xf32>
    %561 = arith.mulf %559, %560 : vector<16x16xf32>
    %562 = tpu.concatenate %350, %426, %561 in 0 : vector<16x16xf32>, vector<16x16xf32>, vector<16x16xf32> -> vector<48x16xf32>
    %cst_199 = arith.constant dense<0.000000e+00> : vector<5x16xf32>
    %563 = tpu.matmul %14, %562, %cst_199 {dimension_numbers = #tpu.dot_dimension_numbers<[1], [0], [0], [1], [0, 0, 1, 1], [], []>} : vector<5x48xf32>, vector<48x16xf32>, vector<5x16xf32> -> vector<5x16xf32>
    %564 = vector.broadcast %15 : vector<5x1xf32> to vector<5x16xf32>
    %565 = arith.addf %563, %564 : vector<5x16xf32>
    %566 = vector.broadcast %314 : vector<1x16xf32> to vector<5x16xf32>
    %567 = arith.mulf %565, %566 : vector<5x16xf32>
    %c0_200 = arith.constant 0 : index
    %c3_201 = arith.constant 3 : index
    %568 = vector.load %arg16[%c0_200, %c3_201] : memref<5x22xf32, #tpu.memory_space<vmem>>, vector<5x16xf32>
    tpu.vector_store %arg16[%c0_200, %c3_201], %567 {strides = array<i32>} : memref<5x22xf32, #tpu.memory_space<vmem>>, vector<5x16xf32>,
    %c0_202 = arith.constant 0 : index
    %c0_203 = arith.constant 0 : index
    %569 = vector.load %arg16[%c0_202, %c0_203] : memref<5x22xf32, #tpu.memory_space<vmem>>, vector<5x16xf32>
    %cst_204 = arith.constant 0.00443304796 : f32
    %570 = vector.broadcast %cst_204 : f32 to vector<5x16xf32>
    %571 = arith.mulf %570, %569 : vector<5x16xf32>
    %c0_205 = arith.constant 0 : index
    %c1_206 = arith.constant 1 : index
    %572 = vector.load %arg16[%c0_205, %c1_206] : memref<5x22xf32, #tpu.memory_space<vmem>>, vector<5x16xf32>
    %cst_207 = arith.constant 0.0540055819 : f32
    %573 = vector.broadcast %cst_207 : f32 to vector<5x16xf32>
    %574 = arith.mulf %573, %572 : vector<5x16xf32>
    %575 = arith.addf %571, %574 : vector<5x16xf32>
    %c0_208 = arith.constant 0 : index
    %c2_209 = arith.constant 2 : index
    %576 = vector.load %arg16[%c0_208, %c2_209] : memref<5x22xf32, #tpu.memory_space<vmem>>, vector<5x16xf32>
    %cst_210 = arith.constant 0.242036223 : f32
    %577 = vector.broadcast %cst_210 : f32 to vector<5x16xf32>
    %578 = arith.mulf %577, %576 : vector<5x16xf32>
    %579 = arith.addf %575, %578 : vector<5x16xf32>
    %c0_211 = arith.constant 0 : index
    %c3_212 = arith.constant 3 : index
    %580 = vector.load %arg16[%c0_211, %c3_212] : memref<5x22xf32, #tpu.memory_space<vmem>>, vector<5x16xf32>
    %cst_213 = arith.constant 0.399050266 : f32
    %581 = vector.broadcast %cst_213 : f32 to vector<5x16xf32>
    %582 = arith.mulf %581, %580 : vector<5x16xf32>
    %583 = arith.addf %579, %582 : vector<5x16xf32>
    %c0_214 = arith.constant 0 : index
    %c4_215 = arith.constant 4 : index
    %584 = vector.load %arg16[%c0_214, %c4_215] : memref<5x22xf32, #tpu.memory_space<vmem>>, vector<5x16xf32>
    %cst_216 = arith.constant 0.242036223 : f32
    %585 = vector.broadcast %cst_216 : f32 to vector<5x16xf32>
    %586 = arith.mulf %585, %584 : vector<5x16xf32>
    %587 = arith.addf %583, %586 : vector<5x16xf32>
    %c0_217 = arith.constant 0 : index
    %c5_218 = arith.constant 5 : index
    %588 = vector.load %arg16[%c0_217, %c5_218] : memref<5x22xf32, #tpu.memory_space<vmem>>, vector<5x16xf32>
    %cst_219 = arith.constant 0.0540055819 : f32
    %589 = vector.broadcast %cst_219 : f32 to vector<5x16xf32>
    %590 = arith.mulf %589, %588 : vector<5x16xf32>
    %591 = arith.addf %587, %590 : vector<5x16xf32>
    %c0_220 = arith.constant 0 : index
    %c6_221 = arith.constant 6 : index
    %592 = vector.load %arg16[%c0_220, %c6_221] : memref<5x22xf32, #tpu.memory_space<vmem>>, vector<5x16xf32>
    %cst_222 = arith.constant 0.00443304796 : f32
    %593 = vector.broadcast %cst_222 : f32 to vector<5x16xf32>
    %594 = arith.mulf %593, %592 : vector<5x16xf32>
    %595 = arith.addf %591, %594 : vector<5x16xf32>
    %c1_223 = arith.constant 1 : index
    %c0_224 = arith.constant 0 : index
    %c0_225 = arith.constant 0 : index
    %596 = vector.load %arg14[%c1_223, %c0_224, %c0_225] : memref<2x5x16xf32, #tpu.memory_space<vmem>>, vector<1x5x16xf32>
    %597 = vector.shape_cast %596 : vector<1x5x16xf32> to vector<5x16xf32>
    %598 = vector.shape_cast %595 : vector<5x16xf32> to vector<1x5x16xf32>
    tpu.vector_store %arg14[%c1_223, %c0_224, %c0_225], %598 {strides = array<i32>} : memref<2x5x16xf32, #tpu.memory_space<vmem>>, vector<1x5x16xf32>,
    return
  }
  func.func @transform_0(%arg0: i32, %arg1: memref<2xi32, #tpu.memory_space<smem>>) -> (i32, i32, i32) {
    %c0_i32 = arith.constant 0 : i32
    %c0_i32_0 = arith.constant 0 : i32
    %c0_i32_1 = arith.constant 0 : i32
    return %arg0, %c0_i32, %c0_i32_0 : i32, i32, i32
  }
  func.func @transform_1(%arg0: i32, %arg1: memref<2xi32, #tpu.memory_space<smem>>) -> (i32, i32) {
    %c0_i32 = arith.constant 0 : i32
    %c0_i32_0 = arith.constant 0 : i32
    %c0_i32_1 = arith.constant 0 : i32
    return %c0_i32, %c0_i32_0 : i32, i32
  }
  func.func @transform_2(%arg0: i32, %arg1: memref<2xi32, #tpu.memory_space<smem>>) -> (i32, i32) {
    %c0_i32 = arith.constant 0 : i32
    %c0_i32_0 = arith.constant 0 : i32
    %c0_i32_1 = arith.constant 0 : i32
    return %c0_i32, %c0_i32_0 : i32, i32
  }
  func.func @transform_3(%arg0: i32, %arg1: memref<2xi32, #tpu.memory_space<smem>>) -> (i32, i32) {
    %c0_i32 = arith.constant 0 : i32
    %c0_i32_0 = arith.constant 0 : i32
    %c0_i32_1 = arith.constant 0 : i32
    return %c0_i32, %c0_i32_0 : i32, i32
  }
  func.func @transform_4(%arg0: i32, %arg1: memref<2xi32, #tpu.memory_space<smem>>) -> (i32, i32) {
    %c0_i32 = arith.constant 0 : i32
    %c0_i32_0 = arith.constant 0 : i32
    %c0_i32_1 = arith.constant 0 : i32
    return %c0_i32, %c0_i32_0 : i32, i32
  }
  func.func @transform_5(%arg0: i32, %arg1: memref<2xi32, #tpu.memory_space<smem>>) -> (i32, i32) {
    %c0_i32 = arith.constant 0 : i32
    %c0_i32_0 = arith.constant 0 : i32
    %c0_i32_1 = arith.constant 0 : i32
    return %c0_i32, %c0_i32_0 : i32, i32
  }
  func.func @transform_6(%arg0: i32, %arg1: memref<2xi32, #tpu.memory_space<smem>>) -> (i32, i32) {
    %c0_i32 = arith.constant 0 : i32
    %c0_i32_0 = arith.constant 0 : i32
    %c0_i32_1 = arith.constant 0 : i32
    return %c0_i32, %c0_i32_0 : i32, i32
  }
  func.func @transform_7(%arg0: i32, %arg1: memref<2xi32, #tpu.memory_space<smem>>) -> (i32, i32) {
    %c0_i32 = arith.constant 0 : i32
    %c0_i32_0 = arith.constant 0 : i32
    %c0_i32_1 = arith.constant 0 : i32
    return %c0_i32, %c0_i32_0 : i32, i32
  }
  func.func @transform_8(%arg0: i32, %arg1: memref<2xi32, #tpu.memory_space<smem>>) -> (i32, i32) {
    %c0_i32 = arith.constant 0 : i32
    %c0_i32_0 = arith.constant 0 : i32
    %c0_i32_1 = arith.constant 0 : i32
    return %c0_i32, %c0_i32_0 : i32, i32
  }
  func.func @transform_9(%arg0: i32, %arg1: memref<2xi32, #tpu.memory_space<smem>>) -> (i32, i32) {
    %c0_i32 = arith.constant 0 : i32
    %c0_i32_0 = arith.constant 0 : i32
    %c0_i32_1 = arith.constant 0 : i32
    return %c0_i32, %c0_i32_0 : i32, i32
  }
  func.func @transform_10(%arg0: i32, %arg1: memref<2xi32, #tpu.memory_space<smem>>) -> (i32, i32) {
    %c0_i32 = arith.constant 0 : i32
    %c0_i32_0 = arith.constant 0 : i32
    %c0_i32_1 = arith.constant 0 : i32
    return %c0_i32, %c0_i32_0 : i32, i32
  }
  func.func @transform_11(%arg0: i32, %arg1: memref<2xi32, #tpu.memory_space<smem>>) -> (i32, i32) {
    %c0_i32 = arith.constant 0 : i32
    %c0_i32_0 = arith.constant 0 : i32
    %c0_i32_1 = arith.constant 0 : i32
    return %c0_i32, %c0_i32_0 : i32, i32
  }
  func.func @transform_12(%arg0: i32, %arg1: memref<2xi32, #tpu.memory_space<smem>>) -> (i32, i32, i32) {
    %c0_i32 = arith.constant 0 : i32
    %c0_i32_0 = arith.constant 0 : i32
    %c0_i32_1 = arith.constant 0 : i32
    return %arg0, %c0_i32, %c0_i32_0 : i32, i32, i32
  }
}

</mosaic_0001>

<llo_original>
// kernel: tpu_custom_call.1
$region0: #{tpu_custom_call.1}
  #allocation0 [shape = 'u32[]', space=smem, size = 0x4, offset = 0x4, fixed_abs, tag = 'smem constant byte address 0x4 - core index']
  #allocation1 [shape = 'u32[144,128]{1,0:T(1,128)}', space=vmem, size = 0x12000, scoped, tag = 'internal scratch']
  #allocation2 [shape = 'f32[16,36]{1,0:T(8,128)}', space=vmem, size = 0x2000, scoped, tag = 'scratch operand']
  #allocation3 [shape = 'f32[5,22]{1,0:T(8,128)}', space=vmem, size = 0x1000, scoped, tag = 'scratch operand']
  #allocation4 [shape = 's32[1]{0}', space=sflag, size = 0x4, scoped, tag = 'scoped memory for tpu_custom_call.1']
  #allocation5 [shape = 'u8[512]{0}', space=smem, size = 0x200, scoped, tag = 'prefetched SMEM operand 0']
  %s0 = inlined_call_operand.vmem [shape: s32[2], index: 0, kind: input, shape index: {}]
  %s1 = inlined_call_operand.vmem [shape: bf16[2,1024,16], index: 1, kind: input, shape index: {}]
  %s2 = inlined_call_operand.vmem [shape: bf16[16,1024], index: 2, kind: input, shape index: {}]
  %s3 = inlined_call_operand.vmem [shape: f32[16,1], index: 3, kind: input, shape index: {}]
  %s4 = inlined_call_operand.vmem [shape: f32[16,1], index: 4, kind: input, shape index: {}]
  %s5 = inlined_call_operand.vmem [shape: f32[16,9], index: 5, kind: input, shape index: {}]
  %s6 = inlined_call_operand.vmem [shape: f32[16,1], index: 6, kind: input, shape index: {}]
  %s7 = inlined_call_operand.vmem [shape: f32[16,1], index: 7, kind: input, shape index: {}]
  %s8 = inlined_call_operand.vmem [shape: f32[16,21], index: 8, kind: input, shape index: {}]
  %s9 = inlined_call_operand.vmem [shape: f32[16,1], index: 9, kind: input, shape index: {}]
  %s10 = inlined_call_operand.vmem [shape: f32[16,1], index: 10, kind: input, shape index: {}]
  %s11 = inlined_call_operand.vmem [shape: f32[5,48], index: 11, kind: input, shape index: {}]
  %s12 = inlined_call_operand.vmem [shape: f32[5,1], index: 12, kind: input, shape index: {}]
  %s13 = inlined_call_operand.vmem [shape: f32[2,5,16], index: 13, kind: output, shape index: {}]
  %s14 = sld [smem:[#allocation0]]
  $region58: #{tpu_custom_call.1} parent=0
    _
  %s16 = ssub.s32 1, %s14
  %s17 = scalar_select 0, %s16, %s14
  %s18 = sshll.u32 %s0, 4
  %s19 = int_to_ptr.vmem [resolvable:$true] %s18
  %21 = dma.vmem_to_smem %s19, 16, [#allocation5], [#allocation4]
  %22 = dma.done [#allocation4], 16
  %23 = sfence
  // Predicated region
  $region2: #{tpu_custom_call.1} parent=0 // pred_check
    _
  $region3: #{tpu_custom_call.1} parent=0 // pred_check_branch
    %25 = sbr.rel (0) target = $region5
  $region4: #{tpu_custom_call.1} parent=0 // pred_region
    _
  $region5: #{tpu_custom_call.1} parent=0 // pred_fallthru
    _
  // Predicated region
  $region6: #{tpu_custom_call.1} parent=0 // pred_check
    _
  $region7: #{tpu_custom_call.1} parent=0 // pred_check_branch
    %27 = sbr.rel (0) target = $region9
  $region8: #{tpu_custom_call.1} parent=0 // pred_region
    _
  $region9: #{tpu_custom_call.1} parent=0 // pred_fallthru
    _
  // Predicated region
  $region10: #{tpu_custom_call.1} parent=0 // pred_check
    _
  $region11: #{tpu_custom_call.1} parent=0 // pred_check_branch
    %29 = sbr.rel (0) target = $region13
  $region12: #{tpu_custom_call.1} parent=0 // pred_region
    _
  $region13: #{tpu_custom_call.1} parent=0 // pred_fallthru
    _
  // Predicated region
  $region14: #{tpu_custom_call.1} parent=0 // pred_check
    _
  $region15: #{tpu_custom_call.1} parent=0 // pred_check_branch
    %31 = sbr.rel (0) target = $region17
  $region16: #{tpu_custom_call.1} parent=0 // pred_region
    _
  $region17: #{tpu_custom_call.1} parent=0 // pred_fallthru
    _
  // Predicated region
  $region18: #{tpu_custom_call.1} parent=0 // pred_check
    _
  $region19: #{tpu_custom_call.1} parent=0 // pred_check_branch
    %33 = sbr.rel (0) target = $region21
  $region20: #{tpu_custom_call.1} parent=0 // pred_region
    _
  $region21: #{tpu_custom_call.1} parent=0 // pred_fallthru
    _
  // Predicated region
  $region22: #{tpu_custom_call.1} parent=0 // pred_check
    _
  $region23: #{tpu_custom_call.1} parent=0 // pred_check_branch
    %35 = sbr.rel (0) target = $region25
  $region24: #{tpu_custom_call.1} parent=0 // pred_region
    _
  $region25: #{tpu_custom_call.1} parent=0 // pred_fallthru
    _
  // Predicated region
  $region26: #{tpu_custom_call.1} parent=0 // pred_check
    _
  $region27: #{tpu_custom_call.1} parent=0 // pred_check_branch
    %37 = sbr.rel (0) target = $region29
  $region28: #{tpu_custom_call.1} parent=0 // pred_region
    _
  $region29: #{tpu_custom_call.1} parent=0 // pred_fallthru
    _
  // Predicated region
  $region30: #{tpu_custom_call.1} parent=0 // pred_check
    _
  $region31: #{tpu_custom_call.1} parent=0 // pred_check_branch
    %39 = sbr.rel (0) target = $region33
  $region32: #{tpu_custom_call.1} parent=0 // pred_region
    _
  $region33: #{tpu_custom_call.1} parent=0 // pred_fallthru
    _
  // Predicated region
  $region34: #{tpu_custom_call.1} parent=0 // pred_check
    _
  $region35: #{tpu_custom_call.1} parent=0 // pred_check_branch
    %41 = sbr.rel (0) target = $region37
  $region36: #{tpu_custom_call.1} parent=0 // pred_region
    _
  $region37: #{tpu_custom_call.1} parent=0 // pred_fallthru
    _
  // Predicated region
  $region38: #{tpu_custom_call.1} parent=0 // pred_check
    _
  $region39: #{tpu_custom_call.1} parent=0 // pred_check_branch
    %43 = sbr.rel (0) target = $region41
  $region40: #{tpu_custom_call.1} parent=0 // pred_region
    _
  $region41: #{tpu_custom_call.1} parent=0 // pred_fallthru
    _
  // Predicated region
  $region42: #{tpu_custom_call.1} parent=0 // pred_check
    _
  $region43: #{tpu_custom_call.1} parent=0 // pred_check_branch
    %45 = sbr.rel (0) target = $region45
  $region44: #{tpu_custom_call.1} parent=0 // pred_region
    _
  $region45: #{tpu_custom_call.1} parent=0 // pred_fallthru
    _
  // Predicated region
  $region46: #{tpu_custom_call.1} parent=0 // pred_check
    _
  $region47: #{tpu_custom_call.1} parent=0 // pred_check_branch
    %47 = sbr.rel (0) target = $region49
  $region48: #{tpu_custom_call.1} parent=0 // pred_region
    _
  $region49: #{tpu_custom_call.1} parent=0 // pred_fallthru
    _
  %s49 = smul.u32 0, 2
  %vm50 = vcmask 293888
  %51 = vst.msk [vmem:[#allocation2] sm:$0xff] %vm50, 0.0
  %52 = vst.msk [vmem:[#allocation2 + $0x8] sm:$0xff] %vm50, 0.0
  %vm53 = vcmask 176128
  %54 = vst.msk [vmem:[#allocation3] sm:$0x1f] %vm53, 0.0
  %v55 = vld [vmem:[%s2] sm:$0xff]
  %v56 = vld [vmem:[%s2 + $0x8] sm:$0xff]
  %v57 = vld [vmem:[%s2 + $0x10] sm:$0xff]
  %v58 = vld [vmem:[%s2 + $0x18] sm:$0xff]
  %v59 = vld [vmem:[%s2 + $0x20] sm:$0xff]
  %v60 = vld [vmem:[%s2 + $0x28] sm:$0xff]
  %v61 = vld [vmem:[%s2 + $0x30] sm:$0xff]
  %v62 = vld [vmem:[%s2 + $0x38] sm:$0xff]
  %v63 = vld [vmem:[%s3] sm:$0xff]
  %v64 = vld [vmem:[%s3 + $0x8] sm:$0xff]
  %v65 = vld [vmem:[%s4] sm:$0xff]
  %v66 = vld [vmem:[%s4 + $0x8] sm:$0xff]
  %v67 = vld [vmem:[%s5] sm:$0xff]
  %v68 = vld [vmem:[%s5 + $0x8] sm:$0xff]
  %v69 = vld [vmem:[%s6] sm:$0xff]
  %v70 = vld [vmem:[%s6 + $0x8] sm:$0xff]
  %v71 = vld [vmem:[%s7] sm:$0xff]
  %v72 = vld [vmem:[%s7 + $0x8] sm:$0xff]
  %v73 = vld [vmem:[%s8] sm:$0xff]
  %v74 = vld [vmem:[%s8 + $0x8] sm:$0xff]
  %v75 = vld [vmem:[%s9] sm:$0xff]
  %v76 = vld [vmem:[%s9 + $0x8] sm:$0xff]
  %v77 = vld [vmem:[%s10] sm:$0xff]
  %v78 = vld [vmem:[%s10 + $0x8] sm:$0xff]
  %v79 = vld [vmem:[%s11] sm:$0x1f]
  %v80 = vld [vmem:[%s12] sm:$0x1f]
  %v81 = vlaneseq
  %v82 = vand.u32 %v81, 127
  %s83 = sld [smem:[#allocation5 + %s49]]
  %v84 = vstv %s83
  %vm85 = vcmp.lt.s32.totalorder %v82, %v84
  %v86 = vsel %vm85, 1, 0
  %v87 = vcvt.s32.f32 %v86
  %p88 = scmp.gt.s32.totalorder %s83, 1
  %s89 = scalar_select %p88, %s83, 1
  %s90 = scvt.s32.f32 %s89
  %s91 = smul.f32 %s90, 16.0
  %v92 = vstv %s91
  %v93 = vrcp.pop %v92
  %s94 = vtos %v93
  %v95 = vld [vmem:[%s1] sm:$0xf]
  %v96 = vld [vmem:[%s1 + $0x4] sm:$0xf]
  %v97 = vld [vmem:[%s1 + $0x8] sm:$0xf]
  %v98 = vld [vmem:[%s1 + $0xc] sm:$0xf]
  %v99 = vld [vmem:[%s1 + $0x10] sm:$0xf]
  %v100 = vld [vmem:[%s1 + $0x14] sm:$0xf]
  %v101 = vld [vmem:[%s1 + $0x18] sm:$0xf]
  %v102 = vld [vmem:[%s1 + $0x1c] sm:$0xf]
  %v103 = vld [vmem:[%s1 + $0x20] sm:$0xf]
  %v104 = vld [vmem:[%s1 + $0x24] sm:$0xf]
  %v105 = vld [vmem:[%s1 + $0x28] sm:$0xf]
  %v106 = vld [vmem:[%s1 + $0x2c] sm:$0xf]
  %v107 = vld [vmem:[%s1 + $0x30] sm:$0xf]
  %v108 = vld [vmem:[%s1 + $0x34] sm:$0xf]
  %v109 = vld [vmem:[%s1 + $0x38] sm:$0xf]
  %v110 = vld [vmem:[%s1 + $0x3c] sm:$0xf]
  %v111 = vld [vmem:[%s1 + $0x40] sm:$0xf]
  %v112 = vld [vmem:[%s1 + $0x44] sm:$0xf]
  %v113 = vld [vmem:[%s1 + $0x48] sm:$0xf]
  %v114 = vld [vmem:[%s1 + $0x4c] sm:$0xf]
  %v115 = vld [vmem:[%s1 + $0x50] sm:$0xf]
  %v116 = vld [vmem:[%s1 + $0x54] sm:$0xf]
  %v117 = vld [vmem:[%s1 + $0x58] sm:$0xf]
  %v118 = vld [vmem:[%s1 + $0x5c] sm:$0xf]
  %v119 = vld [vmem:[%s1 + $0x60] sm:$0xf]
  %v120 = vld [vmem:[%s1 + $0x64] sm:$0xf]
  %v121 = vld [vmem:[%s1 + $0x68] sm:$0xf]
  %v122 = vld [vmem:[%s1 + $0x6c] sm:$0xf]
  %v123 = vld [vmem:[%s1 + $0x70] sm:$0xf]
  %v124 = vld [vmem:[%s1 + $0x74] sm:$0xf]
  %v125 = vld [vmem:[%s1 + $0x78] sm:$0xf]
  %v126 = vld [vmem:[%s1 + $0x7c] sm:$0xf]
  %v127 = vld [vmem:[%s1 + $0x80] sm:$0xf]
  %v128 = vld [vmem:[%s1 + $0x84] sm:$0xf]
  %v129 = vld [vmem:[%s1 + $0x88] sm:$0xf]
  %v130 = vld [vmem:[%s1 + $0x8c] sm:$0xf]
  %v131 = vld [vmem:[%s1 + $0x90] sm:$0xf]
  %v132 = vld [vmem:[%s1 + $0x94] sm:$0xf]
  %v133 = vld [vmem:[%s1 + $0x98] sm:$0xf]
  %v134 = vld [vmem:[%s1 + $0x9c] sm:$0xf]
  %v135 = vld [vmem:[%s1 + $0xa0] sm:$0xf]
  %v136 = vld [vmem:[%s1 + $0xa4] sm:$0xf]
  %v137 = vld [vmem:[%s1 + $0xa8] sm:$0xf]
  %v138 = vld [vmem:[%s1 + $0xac] sm:$0xf]
  %v139 = vld [vmem:[%s1 + $0xb0] sm:$0xf]
  %v140 = vld [vmem:[%s1 + $0xb4] sm:$0xf]
  %v141 = vld [vmem:[%s1 + $0xb8] sm:$0xf]
  %v142 = vld [vmem:[%s1 + $0xbc] sm:$0xf]
  %v143 = vld [vmem:[%s1 + $0xc0] sm:$0xf]
  %v144 = vld [vmem:[%s1 + $0xc4] sm:$0xf]
  %v145 = vld [vmem:[%s1 + $0xc8] sm:$0xf]
  %v146 = vld [vmem:[%s1 + $0xcc] sm:$0xf]
  %v147 = vld [vmem:[%s1 + $0xd0] sm:$0xf]
  %v148 = vld [vmem:[%s1 + $0xd4] sm:$0xf]
  %v149 = vld [vmem:[%s1 + $0xd8] sm:$0xf]
  %v150 = vld [vmem:[%s1 + $0xdc] sm:$0xf]
  %v151 = vld [vmem:[%s1 + $0xe0] sm:$0xf]
  %v152 = vld [vmem:[%s1 + $0xe4] sm:$0xf]
  %v153 = vld [vmem:[%s1 + $0xe8] sm:$0xf]
  %v154 = vld [vmem:[%s1 + $0xec] sm:$0xf]
  %v155 = vld [vmem:[%s1 + $0xf0] sm:$0xf]
  %v156 = vld [vmem:[%s1 + $0xf4] sm:$0xf]
  %v157 = vld [vmem:[%s1 + $0xf8] sm:$0xf]
  %v158 = vld [vmem:[%s1 + $0xfc] sm:$0xf]
  %v159 = vld [vmem:[%s1 + $0x100] sm:$0xf]
  %v160 = vld [vmem:[%s1 + $0x104] sm:$0xf]
  %v161 = vld [vmem:[%s1 + $0x108] sm:$0xf]
  %v162 = vld [vmem:[%s1 + $0x10c] sm:$0xf]
  %v163 = vld [vmem:[%s1 + $0x110] sm:$0xf]
  %v164 = vld [vmem:[%s1 + $0x114] sm:$0xf]
  %v165 = vld [vmem:[%s1 + $0x118] sm:$0xf]
  %v166 = vld [vmem:[%s1 + $0x11c] sm:$0xf]
  %v167 = vld [vmem:[%s1 + $0x120] sm:$0xf]
  %v168 = vld [vmem:[%s1 + $0x124] sm:$0xf]
  %v169 = vld [vmem:[%s1 + $0x128] sm:$0xf]
  %v170 = vld [vmem:[%s1 + $0x12c] sm:$0xf]
  %v171 = vld [vmem:[%s1 + $0x130] sm:$0xf]
  %v172 = vld [vmem:[%s1 + $0x134] sm:$0xf]
  %v173 = vld [vmem:[%s1 + $0x138] sm:$0xf]
  %v174 = vld [vmem:[%s1 + $0x13c] sm:$0xf]
  %v175 = vld [vmem:[%s1 + $0x140] sm:$0xf]
  %v176 = vld [vmem:[%s1 + $0x144] sm:$0xf]
  %v177 = vld [vmem:[%s1 + $0x148] sm:$0xf]
  %v178 = vld [vmem:[%s1 + $0x14c] sm:$0xf]
  %v179 = vld [vmem:[%s1 + $0x150] sm:$0xf]
  %v180 = vld [vmem:[%s1 + $0x154] sm:$0xf]
  %v181 = vld [vmem:[%s1 + $0x158] sm:$0xf]
  %v182 = vld [vmem:[%s1 + $0x15c] sm:$0xf]
  %v183 = vld [vmem:[%s1 + $0x160] sm:$0xf]
  %v184 = vld [vmem:[%s1 + $0x164] sm:$0xf]
  %v185 = vld [vmem:[%s1 + $0x168] sm:$0xf]
  %v186 = vld [vmem:[%s1 + $0x16c] sm:$0xf]
  %v187 = vld [vmem:[%s1 + $0x170] sm:$0xf]
  %v188 = vld [vmem:[%s1 + $0x174] sm:$0xf]
  %v189 = vld [vmem:[%s1 + $0x178] sm:$0xf]
  %v190 = vld [vmem:[%s1 + $0x17c] sm:$0xf]
  %v191 = vld [vmem:[%s1 + $0x180] sm:$0xf]
  %v192 = vld [vmem:[%s1 + $0x184] sm:$0xf]
  %v193 = vld [vmem:[%s1 + $0x188] sm:$0xf]
  %v194 = vld [vmem:[%s1 + $0x18c] sm:$0xf]
  %v195 = vld [vmem:[%s1 + $0x190] sm:$0xf]
  %v196 = vld [vmem:[%s1 + $0x194] sm:$0xf]
  %v197 = vld [vmem:[%s1 + $0x198] sm:$0xf]
  %v198 = vld [vmem:[%s1 + $0x19c] sm:$0xf]
  %v199 = vld [vmem:[%s1 + $0x1a0] sm:$0xf]
  %v200 = vld [vmem:[%s1 + $0x1a4] sm:$0xf]
  %v201 = vld [vmem:[%s1 + $0x1a8] sm:$0xf]
  %v202 = vld [vmem:[%s1 + $0x1ac] sm:$0xf]
  %v203 = vld [vmem:[%s1 + $0x1b0] sm:$0xf]
  %v204 = vld [vmem:[%s1 + $0x1b4] sm:$0xf]
  %v205 = vld [vmem:[%s1 + $0x1b8] sm:$0xf]
  %v206 = vld [vmem:[%s1 + $0x1bc] sm:$0xf]
  %v207 = vld [vmem:[%s1 + $0x1c0] sm:$0xf]
  %v208 = vld [vmem:[%s1 + $0x1c4] sm:$0xf]
  %v209 = vld [vmem:[%s1 + $0x1c8] sm:$0xf]
  %v210 = vld [vmem:[%s1 + $0x1cc] sm:$0xf]
  %v211 = vld [vmem:[%s1 + $0x1d0] sm:$0xf]
  %v212 = vld [vmem:[%s1 + $0x1d4] sm:$0xf]
  %v213 = vld [vmem:[%s1 + $0x1d8] sm:$0xf]
  %v214 = vld [vmem:[%s1 + $0x1dc] sm:$0xf]
  %v215 = vld [vmem:[%s1 + $0x1e0] sm:$0xf]
  %v216 = vld [vmem:[%s1 + $0x1e4] sm:$0xf]
  %v217 = vld [vmem:[%s1 + $0x1e8] sm:$0xf]
  %v218 = vld [vmem:[%s1 + $0x1ec] sm:$0xf]
  %v219 = vld [vmem:[%s1 + $0x1f0] sm:$0xf]
  %v220 = vld [vmem:[%s1 + $0x1f4] sm:$0xf]
  %v221 = vld [vmem:[%s1 + $0x1f8] sm:$0xf]
  %v222 = vld [vmem:[%s1 + $0x1fc] sm:$0xf]
  %v231 = vunpack.c.l.b16 %v55
  %v232 = vunpack.c.h.b16 %v55
  %v233 = vunpack.c.l.b16 %v56
  %v234 = vunpack.c.h.b16 %v56
  %v235 = vunpack.c.l.b16 %v57
  %v236 = vunpack.c.h.b16 %v57
  %v237 = vunpack.c.l.b16 %v58
  %v238 = vunpack.c.h.b16 %v58
  %v239 = vunpack.c.l.b16 %v59
  %v240 = vunpack.c.h.b16 %v59
  %v241 = vunpack.c.l.b16 %v60
  %v242 = vunpack.c.h.b16 %v60
  %v243 = vunpack.c.l.b16 %v61
  %v244 = vunpack.c.h.b16 %v61
  %v245 = vunpack.c.l.b16 %v62
  %v246 = vunpack.c.h.b16 %v62
  %v247 = vpack.c.b16 %v239, %v231
  %v248 = vpack.c.b16 %v240, %v232
  %v249 = vpack.c.b16 %v241, %v233
  %v250 = vpack.c.b16 %v242, %v234
  %v251 = vpack.c.b16 %v243, %v235
  %v252 = vpack.c.b16 %v244, %v236
  %v253 = vpack.c.b16 %v245, %v237
  %v254 = vpack.c.b16 %v246, %v238
  %v391 = vunpack.c.l.b16 %v95
  %v392 = vunpack.c.l.b16 %v96
  %v393 = vunpack.c.l.b16 %v97
  %v394 = vunpack.c.l.b16 %v98
  %v395 = vunpack.c.l.b16 %v99
  %v396 = vunpack.c.l.b16 %v100
  %v397 = vunpack.c.l.b16 %v101
  %v398 = vunpack.c.l.b16 %v102
  %v399 = vunpack.c.l.b16 %v103
  %v400 = vunpack.c.l.b16 %v104
  %v401 = vunpack.c.l.b16 %v105
  %v402 = vunpack.c.l.b16 %v106
  %v403 = vunpack.c.l.b16 %v107
  %v404 = vunpack.c.l.b16 %v108
  %v405 = vunpack.c.l.b16 %v109
  %v406 = vunpack.c.l.b16 %v110
  %v407 = vunpack.c.l.b16 %v111
  %v408 = vunpack.c.l.b16 %v112
  %v409 = vunpack.c.l.b16 %v113
  %v410 = vunpack.c.l.b16 %v114
  %v411 = vunpack.c.l.b16 %v115
  %v412 = vunpack.c.l.b16 %v116
  %v413 = vunpack.c.l.b16 %v117
  %v414 = vunpack.c.l.b16 %v118
  %v415 = vunpack.c.l.b16 %v119
  %v416 = vunpack.c.l.b16 %v120
  %v417 = vunpack.c.l.b16 %v121
  %v418 = vunpack.c.l.b16 %v122
  %v419 = vunpack.c.l.b16 %v123
  %v420 = vunpack.c.l.b16 %v124
  %v421 = vunpack.c.l.b16 %v125
  %v422 = vunpack.c.l.b16 %v126
  %v423 = vunpack.c.l.b16 %v127
  %v424 = vunpack.c.l.b16 %v128
  %v425 = vunpack.c.l.b16 %v129
  %v426 = vunpack.c.l.b16 %v130
  %v427 = vunpack.c.l.b16 %v131
  %v428 = vunpack.c.l.b16 %v132
  %v429 = vunpack.c.l.b16 %v133
  %v430 = vunpack.c.l.b16 %v134
  %v431 = vunpack.c.l.b16 %v135
  %v432 = vunpack.c.l.b16 %v136
  %v433 = vunpack.c.l.b16 %v137
  %v434 = vunpack.c.l.b16 %v138
  %v435 = vunpack.c.l.b16 %v139
  %v436 = vunpack.c.l.b16 %v140
  %v437 = vunpack.c.l.b16 %v141
  %v438 = vunpack.c.l.b16 %v142
  %v439 = vunpack.c.l.b16 %v143
  %v440 = vunpack.c.l.b16 %v144
  %v441 = vunpack.c.l.b16 %v145
  %v442 = vunpack.c.l.b16 %v146
  %v443 = vunpack.c.l.b16 %v147
  %v444 = vunpack.c.l.b16 %v148
  %v445 = vunpack.c.l.b16 %v149
  %v446 = vunpack.c.l.b16 %v150
  %v447 = vunpack.c.l.b16 %v151
  %v448 = vunpack.c.l.b16 %v152
  %v449 = vunpack.c.l.b16 %v153
  %v450 = vunpack.c.l.b16 %v154
  %v451 = vunpack.c.l.b16 %v155
  %v452 = vunpack.c.l.b16 %v156
  %v453 = vunpack.c.l.b16 %v157
  %v454 = vunpack.c.l.b16 %v158
  %v455 = vunpack.c.l.b16 %v159
  %v456 = vunpack.c.l.b16 %v160
  %v457 = vunpack.c.l.b16 %v161
  %v458 = vunpack.c.l.b16 %v162
  %v459 = vunpack.c.l.b16 %v163
  %v460 = vunpack.c.l.b16 %v164
  %v461 = vunpack.c.l.b16 %v165
  %v462 = vunpack.c.l.b16 %v166
  %v463 = vunpack.c.l.b16 %v167
  %v464 = vunpack.c.l.b16 %v168
  %v465 = vunpack.c.l.b16 %v169
  %v466 = vunpack.c.l.b16 %v170
  %v467 = vunpack.c.l.b16 %v171
  %v468 = vunpack.c.l.b16 %v172
  %v469 = vunpack.c.l.b16 %v173
  %v470 = vunpack.c.l.b16 %v174
  %v471 = vunpack.c.l.b16 %v175
  %v472 = vunpack.c.l.b16 %v176
  %v473 = vunpack.c.l.b16 %v177
  %v474 = vunpack.c.l.b16 %v178
  %v475 = vunpack.c.l.b16 %v179
  %v476 = vunpack.c.l.b16 %v180
  %v477 = vunpack.c.l.b16 %v181
  %v478 = vunpack.c.l.b16 %v182
  %v479 = vunpack.c.l.b16 %v183
  %v480 = vunpack.c.l.b16 %v184
  %v481 = vunpack.c.l.b16 %v185
  %v482 = vunpack.c.l.b16 %v186
  %v483 = vunpack.c.l.b16 %v187
  %v484 = vunpack.c.l.b16 %v188
  %v485 = vunpack.c.l.b16 %v189
  %v486 = vunpack.c.l.b16 %v190
  %v487 = vunpack.c.l.b16 %v191
  %v488 = vunpack.c.l.b16 %v192
  %v489 = vunpack.c.l.b16 %v193
  %v490 = vunpack.c.l.b16 %v194
  %v491 = vunpack.c.l.b16 %v195
  %v492 = vunpack.c.l.b16 %v196
  %v493 = vunpack.c.l.b16 %v197
  %v494 = vunpack.c.l.b16 %v198
  %v495 = vunpack.c.l.b16 %v199
  %v496 = vunpack.c.l.b16 %v200
  %v497 = vunpack.c.l.b16 %v201
  %v498 = vunpack.c.l.b16 %v202
  %v499 = vunpack.c.l.b16 %v203
  %v500 = vunpack.c.l.b16 %v204
  %v501 = vunpack.c.l.b16 %v205
  %v502 = vunpack.c.l.b16 %v206
  %v503 = vunpack.c.l.b16 %v207
  %v504 = vunpack.c.l.b16 %v208
  %v505 = vunpack.c.l.b16 %v209
  %v506 = vunpack.c.l.b16 %v210
  %v507 = vunpack.c.l.b16 %v211
  %v508 = vunpack.c.l.b16 %v212
  %v509 = vunpack.c.l.b16 %v213
  %v510 = vunpack.c.l.b16 %v214
  %v511 = vunpack.c.l.b16 %v215
  %v512 = vunpack.c.l.b16 %v216
  %v513 = vunpack.c.l.b16 %v217
  %v514 = vunpack.c.l.b16 %v218
  %v515 = vunpack.c.l.b16 %v219
  %v516 = vunpack.c.l.b16 %v220
  %v517 = vunpack.c.l.b16 %v221
  %v518 = vunpack.c.l.b16 %v222
  %v519 = vpack.c.b16 %v392, %v391
  %v520 = vpack.c.b16 %v394, %v393
  %v521 = vpack.c.b16 %v396, %v395
  %v522 = vpack.c.b16 %v398, %v397
  %v523 = vpack.c.b16 %v400, %v399
  %v524 = vpack.c.b16 %v402, %v401
  %v525 = vpack.c.b16 %v404, %v403
  %v526 = vpack.c.b16 %v406, %v405
  %v527 = vpack.c.b16 %v408, %v407
  %v528 = vpack.c.b16 %v410, %v409
  %v529 = vpack.c.b16 %v412, %v411
  %v530 = vpack.c.b16 %v414, %v413
  %v531 = vpack.c.b16 %v416, %v415
  %v532 = vpack.c.b16 %v418, %v417
  %v533 = vpack.c.b16 %v420, %v419
  %v534 = vpack.c.b16 %v422, %v421
  %v535 = vpack.c.b16 %v424, %v423
  %v536 = vpack.c.b16 %v426, %v425
  %v537 = vpack.c.b16 %v428, %v427
  %v538 = vpack.c.b16 %v430, %v429
  %v539 = vpack.c.b16 %v432, %v431
  %v540 = vpack.c.b16 %v434, %v433
  %v541 = vpack.c.b16 %v436, %v435
  %v542 = vpack.c.b16 %v438, %v437
  %v543 = vpack.c.b16 %v440, %v439
  %v544 = vpack.c.b16 %v442, %v441
  %v545 = vpack.c.b16 %v444, %v443
  %v546 = vpack.c.b16 %v446, %v445
  %v547 = vpack.c.b16 %v448, %v447
  %v548 = vpack.c.b16 %v450, %v449
  %v549 = vpack.c.b16 %v452, %v451
  %v550 = vpack.c.b16 %v454, %v453
  %v551 = vpack.c.b16 %v456, %v455
  %v552 = vpack.c.b16 %v458, %v457
  %v553 = vpack.c.b16 %v460, %v459
  %v554 = vpack.c.b16 %v462, %v461
  %v555 = vpack.c.b16 %v464, %v463
  %v556 = vpack.c.b16 %v466, %v465
  %v557 = vpack.c.b16 %v468, %v467
  %v558 = vpack.c.b16 %v470, %v469
  %v559 = vpack.c.b16 %v472, %v471
  %v560 = vpack.c.b16 %v474, %v473
  %v561 = vpack.c.b16 %v476, %v475
  %v562 = vpack.c.b16 %v478, %v477
  %v563 = vpack.c.b16 %v480, %v479
  %v564 = vpack.c.b16 %v482, %v481
  %v565 = vpack.c.b16 %v484, %v483
  %v566 = vpack.c.b16 %v486, %v485
  %v567 = vpack.c.b16 %v488, %v487
  %v568 = vpack.c.b16 %v490, %v489
  %v569 = vpack.c.b16 %v492, %v491
  %v570 = vpack.c.b16 %v494, %v493
  %v571 = vpack.c.b16 %v496, %v495
  %v572 = vpack.c.b16 %v498, %v497
  %v573 = vpack.c.b16 %v500, %v499
  %v574 = vpack.c.b16 %v502, %v501
  %v575 = vpack.c.b16 %v504, %v503
  %v576 = vpack.c.b16 %v506, %v505
  %v577 = vpack.c.b16 %v508, %v507
  %v578 = vpack.c.b16 %v510, %v509
  %v579 = vpack.c.b16 %v512, %v511
  %v580 = vpack.c.b16 %v514, %v513
  %v581 = vpack.c.b16 %v516, %v515
  %v582 = vpack.c.b16 %v518, %v517
  %647 = vmatprep.subr.bf16.mxu0 0
  %648 = vmatpush1.bf16.msra.mxu0 %v526
  %649 = vmatprep.subr.bf16.mxu0 0
  %650 = vmatpush1.bf16.msra.mxu0 %v525
  %651 = vmatprep.subr.bf16.mxu0 0
  %652 = vmatpush1.bf16.msra.mxu0 %v524
  %653 = vmatprep.subr.bf16.mxu0 0
  %654 = vmatpush1.bf16.msra.mxu0 %v523
  %655 = vmatprep.subr.bf16.mxu0 0
  %656 = vmatpush1.bf16.msra.mxu0 %v522
  %657 = vmatprep.subr.bf16.mxu0 0
  %658 = vmatpush1.bf16.msra.mxu0 %v521
  %659 = vmatprep.subr.bf16.mxu0 0
  %660 = vmatpush1.bf16.msra.mxu0 %v520
  %661 = vmatprep.subr.bf16.mxu0 0
  %662 = vmatpush1.bf16.msra.mxu0 %v519
  %663 = vmatprep.subr.bf16.mxu0 0
  %664 = vmatpush2.bf16.msra.mxu0 %v534
  %665 = vmatprep.subr.bf16.mxu0 0
  %666 = vmatpush2.bf16.msra.mxu0 %v533
  %667 = vmatprep.subr.bf16.mxu0 0
  %668 = vmatpush2.bf16.msra.mxu0 %v532
  %669 = vmatprep.subr.bf16.mxu0 0
  %670 = vmatpush2.bf16.msra.mxu0 %v531
  %671 = vmatprep.subr.bf16.mxu0 0
  %672 = vmatpush2.bf16.msra.mxu0 %v530
  %673 = vmatprep.subr.bf16.mxu0 0
  %674 = vmatpush2.bf16.msra.mxu0 %v529
  %675 = vmatprep.subr.bf16.mxu0 0
  %676 = vmatpush2.bf16.msra.mxu0 %v528
  %677 = vmatprep.subr.bf16.mxu0 0
  %678 = vmatpush2.bf16.msra.mxu0 %v527
  %679 = vmatprep.mubr.bf16.mxu0 %v248
  %680 = vmatmul.mubr.bf16.gmra.mxu0 %v247
  %v681 = vpop.f32.mrf.mxu0
  %v682 = vadd.f32 0.0, %v681
  %v683 = vpop.f32.mrf.mxu0
  %v684 = vpop.f32.mrf.mxu0
  %v685 = vadd.f32 0.0, %v684
  %v686 = vpop.f32.mrf.mxu0
  %687 = vdwg.mxu0
  %688 = vmatprep.subr.bf16.mxu0 0
  %689 = vmatpush1.bf16.msra.mxu0 %v542
  %690 = vmatprep.subr.bf16.mxu0 0
  %691 = vmatpush1.bf16.msra.mxu0 %v541
  %692 = vmatprep.subr.bf16.mxu0 0
  %693 = vmatpush1.bf16.msra.mxu0 %v540
  %694 = vmatprep.subr.bf16.mxu0 0
  %695 = vmatpush1.bf16.msra.mxu0 %v539
  %696 = vmatprep.subr.bf16.mxu0 0
  %697 = vmatpush1.bf16.msra.mxu0 %v538
  %698 = vmatprep.subr.bf16.mxu0 0
  %699 = vmatpush1.bf16.msra.mxu0 %v537
  %700 = vmatprep.subr.bf16.mxu0 0
  %701 = vmatpush1.bf16.msra.mxu0 %v536
  %702 = vmatprep.subr.bf16.mxu0 0
  %703 = vmatpush1.bf16.msra.mxu0 %v535
  %704 = vmatprep.subr.bf16.mxu0 0
  %705 = vmatpush2.bf16.msra.mxu0 %v550
  %706 = vmatprep.subr.bf16.mxu0 0
  %707 = vmatpush2.bf16.msra.mxu0 %v549
  %708 = vmatprep.subr.bf16.mxu0 0
  %709 = vmatpush2.bf16.msra.mxu0 %v548
  %710 = vmatprep.subr.bf16.mxu0 0
  %711 = vmatpush2.bf16.msra.mxu0 %v547
  %712 = vmatprep.subr.bf16.mxu0 0
  %713 = vmatpush2.bf16.msra.mxu0 %v546
  %714 = vmatprep.subr.bf16.mxu0 0
  %715 = vmatpush2.bf16.msra.mxu0 %v545
  %716 = vmatprep.subr.bf16.mxu0 0
  %717 = vmatpush2.bf16.msra.mxu0 %v544
  %718 = vmatprep.subr.bf16.mxu0 0
  %719 = vmatpush2.bf16.msra.mxu0 %v543
  %720 = vmatprep.mubr.bf16.mxu0 %v250
  %721 = vmatmul.mubr.bf16.gmra.mxu0 %v249
  %v722 = vpop.f32.mrf.mxu0
  %v723 = vadd.f32 %v682, %v722
  %v724 = vpop.f32.mrf.mxu0
  %v725 = vpop.f32.mrf.mxu0
  %v726 = vadd.f32 %v685, %v725
  %v727 = vpop.f32.mrf.mxu0
  %728 = vdwg.mxu0
  %729 = vmatprep.subr.bf16.mxu0 0
  %730 = vmatpush1.bf16.msra.mxu0 %v558
  %731 = vmatprep.subr.bf16.mxu0 0
  %732 = vmatpush1.bf16.msra.mxu0 %v557
  %733 = vmatprep.subr.bf16.mxu0 0
  %734 = vmatpush1.bf16.msra.mxu0 %v556
  %735 = vmatprep.subr.bf16.mxu0 0
  %736 = vmatpush1.bf16.msra.mxu0 %v555
  %737 = vmatprep.subr.bf16.mxu0 0
  %738 = vmatpush1.bf16.msra.mxu0 %v554
  %739 = vmatprep.subr.bf16.mxu0 0
  %740 = vmatpush1.bf16.msra.mxu0 %v553
  %741 = vmatprep.subr.bf16.mxu0 0
  %742 = vmatpush1.bf16.msra.mxu0 %v552
  %743 = vmatprep.subr.bf16.mxu0 0
  %744 = vmatpush1.bf16.msra.mxu0 %v551
  %745 = vmatprep.subr.bf16.mxu0 0
  %746 = vmatpush2.bf16.msra.mxu0 %v566
  %747 = vmatprep.subr.bf16.mxu0 0
  %748 = vmatpush2.bf16.msra.mxu0 %v565
  %749 = vmatprep.subr.bf16.mxu0 0
  %750 = vmatpush2.bf16.msra.mxu0 %v564
  %751 = vmatprep.subr.bf16.mxu0 0
  %752 = vmatpush2.bf16.msra.mxu0 %v563
  %753 = vmatprep.subr.bf16.mxu0 0
  %754 = vmatpush2.bf16.msra.mxu0 %v562
  %755 = vmatprep.subr.bf16.mxu0 0
  %756 = vmatpush2.bf16.msra.mxu0 %v561
  %757 = vmatprep.subr.bf16.mxu0 0
  %758 = vmatpush2.bf16.msra.mxu0 %v560
  %759 = vmatprep.subr.bf16.mxu0 0
  %760 = vmatpush2.bf16.msra.mxu0 %v559
  %761 = vmatprep.mubr.bf16.mxu0 %v252
  %762 = vmatmul.mubr.bf16.gmra.mxu0 %v251
  %v763 = vpop.f32.mrf.mxu0
  %v764 = vadd.f32 %v723, %v763
  %v765 = vpop.f32.mrf.mxu0
  %v766 = vpop.f32.mrf.mxu0
  %v767 = vadd.f32 %v726, %v766
  %v768 = vpop.f32.mrf.mxu0
  %769 = vdwg.mxu0
  %770 = vmatprep.subr.bf16.mxu0 0
  %771 = vmatpush1.bf16.msra.mxu0 %v574
  %772 = vmatprep.subr.bf16.mxu0 0
  %773 = vmatpush1.bf16.msra.mxu0 %v573
  %774 = vmatprep.subr.bf16.mxu0 0
  %775 = vmatpush1.bf16.msra.mxu0 %v572
  %776 = vmatprep.subr.bf16.mxu0 0
  %777 = vmatpush1.bf16.msra.mxu0 %v571
  %778 = vmatprep.subr.bf16.mxu0 0
  %779 = vmatpush1.bf16.msra.mxu0 %v570
  %780 = vmatprep.subr.bf16.mxu0 0
  %781 = vmatpush1.bf16.msra.mxu0 %v569
  %782 = vmatprep.subr.bf16.mxu0 0
  %783 = vmatpush1.bf16.msra.mxu0 %v568
  %784 = vmatprep.subr.bf16.mxu0 0
  %785 = vmatpush1.bf16.msra.mxu0 %v567
  %786 = vmatprep.subr.bf16.mxu0 0
  %787 = vmatpush2.bf16.msra.mxu0 %v582
  %788 = vmatprep.subr.bf16.mxu0 0
  %789 = vmatpush2.bf16.msra.mxu0 %v581
  %790 = vmatprep.subr.bf16.mxu0 0
  %791 = vmatpush2.bf16.msra.mxu0 %v580
  %792 = vmatprep.subr.bf16.mxu0 0
  %793 = vmatpush2.bf16.msra.mxu0 %v579
  %794 = vmatprep.subr.bf16.mxu0 0
  %795 = vmatpush2.bf16.msra.mxu0 %v578
  %796 = vmatprep.subr.bf16.mxu0 0
  %797 = vmatpush2.bf16.msra.mxu0 %v577
  %798 = vmatprep.subr.bf16.mxu0 0
  %799 = vmatpush2.bf16.msra.mxu0 %v576
  %800 = vmatprep.subr.bf16.mxu0 0
  %801 = vmatpush2.bf16.msra.mxu0 %v575
  %802 = vmatprep.mubr.bf16.mxu0 %v254
  %803 = vmatmul.mubr.bf16.gmra.mxu0 %v253
  %v804 = vpop.f32.mrf.mxu0
  %v805 = vadd.f32 %v764, %v804
  %v806 = vpop.f32.mrf.mxu0
  %v807 = vpop.f32.mrf.mxu0
  %v808 = vadd.f32 %v767, %v807
  %v809 = vpop.f32.mrf.mxu0
  %810 = vdwg.mxu0
  %v811 = vmul.f32 %v805, %v87
  %v812 = vmul.f32 %v808, %v87
  %vm813 = vcmask 130048
  %v814 = vsel %vm813, %v811, 0.0
  %v815 = vsel %vm813, %v812, 0.0
  %v816 = vadd.f32 %v814, %v815
  %817 = vadd.xlane.f32.xlu0 %v816
  %v818 = vpop.xlane.xlu0 %817
  %v819 = vrot.slane %v818, 4
  %v820 = vadd.f32 %v818, %v819
  %v821 = vrot.slane %v820, 2
  %v822 = vadd.f32 %v820, %v821
  %v823 = vrot.slane %v822, 1
  %v824 = vadd.f32 %v822, %v823
  %s825 = vtos %v824
  %s826 = smul.f32 %s825, %s94
  %v827 = vstv %s826
  %v828 = vsub.f32 %v811, %v827
  %v829 = vsub.f32 %v812, %v827
  %v830 = vmul.f32 %v828, %v87
  %v831 = vmul.f32 %v829, %v87
  %v832 = vmul.f32 %v830, %v830
  %v833 = vmul.f32 %v831, %v831
  %v834 = vsel %vm813, %v832, 0.0
  %v835 = vsel %vm813, %v833, 0.0
  %v836 = vadd.f32 %v834, %v835
  %837 = vadd.xlane.f32.xlu0 %v836
  %v838 = vpop.xlane.xlu0 %837
  %v839 = vrot.slane %v838, 4
  %v840 = vadd.f32 %v838, %v839
  %v841 = vrot.slane %v840, 2
  %v842 = vadd.f32 %v840, %v841
  %v843 = vrot.slane %v842, 1
  %v844 = vadd.f32 %v842, %v843
  %s845 = vtos %v844
  %s846 = smul.f32 %s845, %s94
  %s847 = sadd.f32 %s846, 1e-06
  %v848 = vstv %s847
  %v849 = vrsqrt.pop %v848
  %s850 = vtos %v849
  %v851 = vstv %s850
  %v852 = vmul.f32 %v830, %v851
  %v853 = vmul.f32 %v831, %v851
  %855 = vset.pattern.permute.xlu0 0
  %856 = vperm.xlu0 %855, %v63
  %v857 = vpop.permute.xlu0 %856
  %860 = vset.pattern.permute.xlu0 0
  %861 = vperm.xlu0 %860, %v64
  %v862 = vpop.permute.xlu0 %861
  %v864 = vmul.f32 %v852, %v857
  %v865 = vmul.f32 %v853, %v862
  %867 = vset.pattern.permute.xlu0 0
  %868 = vperm.xlu0 %867, %v65
  %v869 = vpop.permute.xlu0 %868
  %872 = vset.pattern.permute.xlu0 0
  %873 = vperm.xlu0 %872, %v66
  %v874 = vpop.permute.xlu0 %873
  %v876 = vadd.f32 %v864, %v869
  %v877 = vadd.f32 %v865, %v874
  %v878 = vmax.f32 %v876, 0.0
  %v879 = vmax.f32 %v877, 0.0
  %v880 = vmul.f32 %v878, %v87
  %v881 = vmul.f32 %v879, %v87
  %884 = vrot.lane.b32.xlu0 %v880, 10
  %v885 = vpop.permute.xlu0 %884
  %886 = vrot.lane.b32.xlu0 %v881, 10
  %v887 = vpop.permute.xlu0 %886
  %vm890 = vcmask 212048
  %891 = vst.msk [vmem:[#allocation2] sm:$0xff] %vm890, %v885
  %892 = vst.msk [vmem:[#allocation2 + $0x8] sm:$0xff] %vm890, %v887
  %v893 = vld [vmem:[#allocation2] sm:$0xff]
  %v894 = vld [vmem:[#allocation2 + $0x8] sm:$0xff]
  %896 = vset.pattern.permute.xlu0 0
  %897 = vperm.xlu0 %896, %v67
  %v898 = vpop.permute.xlu0 %897
  %901 = vset.pattern.permute.xlu0 0
  %902 = vperm.xlu0 %901, %v68
  %v903 = vpop.permute.xlu0 %902
  %v905 = vmul.f32 %v893, %v898
  %v906 = vmul.f32 %v894, %v903
  %v907 = vadd.f32 %v905, 0.0
  %v908 = vadd.f32 %v906, 0.0
  %909 = vset.pattern.permute.xlu0 1
  %910 = vperm.xlu0 %909, %v67
  %v911 = vpop.permute.xlu0 %910
  %913 = vset.pattern.permute.xlu0 1
  %914 = vperm.xlu0 %913, %v68
  %v915 = vpop.permute.xlu0 %914
  %v917 = vmul.f32 %v893, %v911
  %v918 = vmul.f32 %v894, %v915
  %921 = vrot.lane.b32.xlu0 %v917, 127
  %v922 = vpop.permute.xlu0 %921
  %923 = vrot.lane.b32.xlu0 %v918, 127
  %v924 = vpop.permute.xlu0 %923
  %v927 = vadd.f32 %v907, %v922
  %v928 = vadd.f32 %v908, %v924
  %929 = vset.pattern.permute.xlu0 2
  %930 = vperm.xlu0 %929, %v67
  %v931 = vpop.permute.xlu0 %930
  %933 = vset.pattern.permute.xlu0 2
  %934 = vperm.xlu0 %933, %v68
  %v935 = vpop.permute.xlu0 %934
  %v937 = vmul.f32 %v893, %v931
  %v938 = vmul.f32 %v894, %v935
  %941 = vrot.lane.b32.xlu0 %v937, 126
  %v942 = vpop.permute.xlu0 %941
  %943 = vrot.lane.b32.xlu0 %v938, 126
  %v944 = vpop.permute.xlu0 %943
  %v947 = vadd.f32 %v927, %v942
  %v948 = vadd.f32 %v928, %v944
  %949 = vset.pattern.permute.xlu0 3
  %950 = vperm.xlu0 %949, %v67
  %v951 = vpop.permute.xlu0 %950
  %953 = vset.pattern.permute.xlu0 3
  %954 = vperm.xlu0 %953, %v68
  %v955 = vpop.permute.xlu0 %954
  %v957 = vmul.f32 %v893, %v951
  %v958 = vmul.f32 %v894, %v955
  %961 = vrot.lane.b32.xlu0 %v957, 125
  %v962 = vpop.permute.xlu0 %961
  %963 = vrot.lane.b32.xlu0 %v958, 125
  %v964 = vpop.permute.xlu0 %963
  %v967 = vadd.f32 %v947, %v962
  %v968 = vadd.f32 %v948, %v964
  %969 = vset.pattern.permute.xlu0 4
  %970 = vperm.xlu0 %969, %v67
  %v971 = vpop.permute.xlu0 %970
  %973 = vset.pattern.permute.xlu0 4
  %974 = vperm.xlu0 %973, %v68
  %v975 = vpop.permute.xlu0 %974
  %v977 = vmul.f32 %v893, %v971
  %v978 = vmul.f32 %v894, %v975
  %981 = vrot.lane.b32.xlu0 %v977, 124
  %v982 = vpop.permute.xlu0 %981
  %983 = vrot.lane.b32.xlu0 %v978, 124
  %v984 = vpop.permute.xlu0 %983
  %v987 = vadd.f32 %v967, %v982
  %v988 = vadd.f32 %v968, %v984
  %989 = vset.pattern.permute.xlu0 5
  %990 = vperm.xlu0 %989, %v67
  %v991 = vpop.permute.xlu0 %990
  %993 = vset.pattern.permute.xlu0 5
  %994 = vperm.xlu0 %993, %v68
  %v995 = vpop.permute.xlu0 %994
  %v997 = vmul.f32 %v893, %v991
  %v998 = vmul.f32 %v894, %v995
  %1001 = vrot.lane.b32.xlu0 %v997, 123
  %v1002 = vpop.permute.xlu0 %1001
  %1003 = vrot.lane.b32.xlu0 %v998, 123
  %v1004 = vpop.permute.xlu0 %1003
  %v1007 = vadd.f32 %v987, %v1002
  %v1008 = vadd.f32 %v988, %v1004
  %1009 = vset.pattern.permute.xlu0 6
  %1010 = vperm.xlu0 %1009, %v67
  %v1011 = vpop.permute.xlu0 %1010
  %1013 = vset.pattern.permute.xlu0 6
  %1014 = vperm.xlu0 %1013, %v68
  %v1015 = vpop.permute.xlu0 %1014
  %v1017 = vmul.f32 %v893, %v1011
  %v1018 = vmul.f32 %v894, %v1015
  %1021 = vrot.lane.b32.xlu0 %v1017, 122
  %v1022 = vpop.permute.xlu0 %1021
  %1023 = vrot.lane.b32.xlu0 %v1018, 122
  %v1024 = vpop.permute.xlu0 %1023
  %v1027 = vadd.f32 %v1007, %v1022
  %v1028 = vadd.f32 %v1008, %v1024
  %1029 = vset.pattern.permute.xlu0 7
  %1030 = vperm.xlu0 %1029, %v67
  %v1031 = vpop.permute.xlu0 %1030
  %1033 = vset.pattern.permute.xlu0 7
  %1034 = vperm.xlu0 %1033, %v68
  %v1035 = vpop.permute.xlu0 %1034
  %v1037 = vmul.f32 %v893, %v1031
  %v1038 = vmul.f32 %v894, %v1035
  %1041 = vrot.lane.b32.xlu0 %v1037, 121
  %v1042 = vpop.permute.xlu0 %1041
  %1043 = vrot.lane.b32.xlu0 %v1038, 121
  %v1044 = vpop.permute.xlu0 %1043
  %v1047 = vadd.f32 %v1027, %v1042
  %v1048 = vadd.f32 %v1028, %v1044
  %1049 = vset.pattern.permute.xlu0 8
  %1050 = vperm.xlu0 %1049, %v67
  %v1051 = vpop.permute.xlu0 %1050
  %1053 = vset.pattern.permute.xlu0 8
  %1054 = vperm.xlu0 %1053, %v68
  %v1055 = vpop.permute.xlu0 %1054
  %v1057 = vmul.f32 %v893, %v1051
  %v1058 = vmul.f32 %v894, %v1055
  %1061 = vrot.lane.b32.xlu0 %v1057, 120
  %v1062 = vpop.permute.xlu0 %1061
  %1063 = vrot.lane.b32.xlu0 %v1058, 120
  %v1064 = vpop.permute.xlu0 %1063
  %v1067 = vadd.f32 %v1047, %v1062
  %v1068 = vadd.f32 %v1048, %v1064
  %1070 = vrot.lane.b32.xlu0 %v87, 6
  %v1071 = vpop.permute.xlu0 %1070
  %v1073 = vmul.f32 %v1067, %v1071
  %v1074 = vmul.f32 %v1068, %v1071
  %1077 = vrot.lane.b32.xlu0 %v1073, 122
  %v1078 = vpop.permute.xlu0 %1077
  %1079 = vrot.lane.b32.xlu0 %v1074, 122
  %v1080 = vpop.permute.xlu0 %1079
  %v1083 = vsel %vm813, %v1078, 0.0
  %v1084 = vsel %vm813, %v1080, 0.0
  %v1085 = vadd.f32 %v1083, %v1084
  %1086 = vadd.xlane.f32.xlu0 %v1085
  %v1087 = vpop.xlane.xlu0 %1086
  %v1088 = vrot.slane %v1087, 4
  %v1089 = vadd.f32 %v1087, %v1088
  %v1090 = vrot.slane %v1089, 2
  %v1091 = vadd.f32 %v1089, %v1090
  %v1092 = vrot.slane %v1091, 1
  %v1093 = vadd.f32 %v1091, %v1092
  %s1094 = vtos %v1093
  %s1095 = smul.f32 %s1094, %s94
  %v1096 = vstv %s1095
  %v1097 = vsub.f32 %v1073, %v1096
  %v1098 = vsub.f32 %v1074, %v1096
  %v1099 = vmul.f32 %v1097, %v1071
  %v1100 = vmul.f32 %v1098, %v1071
  %v1101 = vmul.f32 %v1099, %v1099
  %v1102 = vmul.f32 %v1100, %v1100
  %1105 = vrot.lane.b32.xlu0 %v1101, 122
  %v1106 = vpop.permute.xlu0 %1105
  %1107 = vrot.lane.b32.xlu0 %v1102, 122
  %v1108 = vpop.permute.xlu0 %1107
  %v1111 = vsel %vm813, %v1106, 0.0
  %v1112 = vsel %vm813, %v1108, 0.0
  %v1113 = vadd.f32 %v1111, %v1112
  %1114 = vadd.xlane.f32.xlu0 %v1113
  %v1115 = vpop.xlane.xlu0 %1114
  %v1116 = vrot.slane %v1115, 4
  %v1117 = vadd.f32 %v1115, %v1116
  %v1118 = vrot.slane %v1117, 2
  %v1119 = vadd.f32 %v1117, %v1118
  %v1120 = vrot.slane %v1119, 1
  %v1121 = vadd.f32 %v1119, %v1120
  %s1122 = vtos %v1121
  %s1123 = smul.f32 %s1122, %s94
  %s1124 = sadd.f32 %s1123, 1e-06
  %v1125 = vstv %s1124
  %v1126 = vrsqrt.pop %v1125
  %s1127 = vtos %v1126
  %v1128 = vstv %s1127
  %v1129 = vmul.f32 %v1099, %v1128
  %v1130 = vmul.f32 %v1100, %v1128
  %1132 = vset.pattern.permute.xlu0 0
  %1133 = vperm.xlu0 %1132, %v69
  %v1134 = vpop.permute.xlu0 %1133
  %1137 = vset.pattern.permute.xlu0 0
  %1138 = vperm.xlu0 %1137, %v70
  %v1139 = vpop.permute.xlu0 %1138
  %v1141 = vmul.f32 %v1129, %v1134
  %v1142 = vmul.f32 %v1130, %v1139
  %1144 = vset.pattern.permute.xlu0 0
  %1145 = vperm.xlu0 %1144, %v71
  %v1146 = vpop.permute.xlu0 %1145
  %1149 = vset.pattern.permute.xlu0 0
  %1150 = vperm.xlu0 %1149, %v72
  %v1151 = vpop.permute.xlu0 %1150
  %v1153 = vadd.f32 %v1141, %v1146
  %v1154 = vadd.f32 %v1142, %v1151
  %v1155 = vmax.f32 %v1153, 0.0
  %v1156 = vmax.f32 %v1154, 0.0
  %v1157 = vmul.f32 %v1155, %v1071
  %v1158 = vmul.f32 %v1156, %v1071
  %1160 = vset.pattern.permute.xlu0 0
  %1161 = vperm.xlu0 %1160, %v73
  %v1162 = vpop.permute.xlu0 %1161
  %1165 = vset.pattern.permute.xlu0 0
  %1166 = vperm.xlu0 %1165, %v74
  %v1167 = vpop.permute.xlu0 %1166
  %v1169 = vmul.f32 %v893, %v1162
  %v1170 = vmul.f32 %v894, %v1167
  %v1171 = vadd.f32 %v1169, 0.0
  %v1172 = vadd.f32 %v1170, 0.0
  %1173 = vset.pattern.permute.xlu0 1
  %1174 = vperm.xlu0 %1173, %v73
  %v1175 = vpop.permute.xlu0 %1174
  %1177 = vset.pattern.permute.xlu0 1
  %1178 = vperm.xlu0 %1177, %v74
  %v1179 = vpop.permute.xlu0 %1178
  %v1181 = vmul.f32 %v893, %v1175
  %v1182 = vmul.f32 %v894, %v1179
  %1185 = vrot.lane.b32.xlu0 %v1181, 127
  %v1186 = vpop.permute.xlu0 %1185
  %1187 = vrot.lane.b32.xlu0 %v1182, 127
  %v1188 = vpop.permute.xlu0 %1187
  %v1191 = vadd.f32 %v1171, %v1186
  %v1192 = vadd.f32 %v1172, %v1188
  %1193 = vset.pattern.permute.xlu0 2
  %1194 = vperm.xlu0 %1193, %v73
  %v1195 = vpop.permute.xlu0 %1194
  %1197 = vset.pattern.permute.xlu0 2
  %1198 = vperm.xlu0 %1197, %v74
  %v1199 = vpop.permute.xlu0 %1198
  %v1201 = vmul.f32 %v893, %v1195
  %v1202 = vmul.f32 %v894, %v1199
  %1205 = vrot.lane.b32.xlu0 %v1201, 126
  %v1206 = vpop.permute.xlu0 %1205
  %1207 = vrot.lane.b32.xlu0 %v1202, 126
  %v1208 = vpop.permute.xlu0 %1207
  %v1211 = vadd.f32 %v1191, %v1206
  %v1212 = vadd.f32 %v1192, %v1208
  %1213 = vset.pattern.permute.xlu0 3
  %1214 = vperm.xlu0 %1213, %v73
  %v1215 = vpop.permute.xlu0 %1214
  %1217 = vset.pattern.permute.xlu0 3
  %1218 = vperm.xlu0 %1217, %v74
  %v1219 = vpop.permute.xlu0 %1218
  %v1221 = vmul.f32 %v893, %v1215
  %v1222 = vmul.f32 %v894, %v1219
  %1225 = vrot.lane.b32.xlu0 %v1221, 125
  %v1226 = vpop.permute.xlu0 %1225
  %1227 = vrot.lane.b32.xlu0 %v1222, 125
  %v1228 = vpop.permute.xlu0 %1227
  %v1231 = vadd.f32 %v1211, %v1226
  %v1232 = vadd.f32 %v1212, %v1228
  %1233 = vset.pattern.permute.xlu0 4
  %1234 = vperm.xlu0 %1233, %v73
  %v1235 = vpop.permute.xlu0 %1234
  %1237 = vset.pattern.permute.xlu0 4
  %1238 = vperm.xlu0 %1237, %v74
  %v1239 = vpop.permute.xlu0 %1238
  %v1241 = vmul.f32 %v893, %v1235
  %v1242 = vmul.f32 %v894, %v1239
  %1245 = vrot.lane.b32.xlu0 %v1241, 124
  %v1246 = vpop.permute.xlu0 %1245
  %1247 = vrot.lane.b32.xlu0 %v1242, 124
  %v1248 = vpop.permute.xlu0 %1247
  %v1251 = vadd.f32 %v1231, %v1246
  %v1252 = vadd.f32 %v1232, %v1248
  %1253 = vset.pattern.permute.xlu0 5
  %1254 = vperm.xlu0 %1253, %v73
  %v1255 = vpop.permute.xlu0 %1254
  %1257 = vset.pattern.permute.xlu0 5
  %1258 = vperm.xlu0 %1257, %v74
  %v1259 = vpop.permute.xlu0 %1258
  %v1261 = vmul.f32 %v893, %v1255
  %v1262 = vmul.f32 %v894, %v1259
  %1265 = vrot.lane.b32.xlu0 %v1261, 123
  %v1266 = vpop.permute.xlu0 %1265
  %1267 = vrot.lane.b32.xlu0 %v1262, 123
  %v1268 = vpop.permute.xlu0 %1267
  %v1271 = vadd.f32 %v1251, %v1266
  %v1272 = vadd.f32 %v1252, %v1268
  %1273 = vset.pattern.permute.xlu0 6
  %1274 = vperm.xlu0 %1273, %v73
  %v1275 = vpop.permute.xlu0 %1274
  %1277 = vset.pattern.permute.xlu0 6
  %1278 = vperm.xlu0 %1277, %v74
  %v1279 = vpop.permute.xlu0 %1278
  %v1281 = vmul.f32 %v893, %v1275
  %v1282 = vmul.f32 %v894, %v1279
  %1285 = vrot.lane.b32.xlu0 %v1281, 122
  %v1286 = vpop.permute.xlu0 %1285
  %1287 = vrot.lane.b32.xlu0 %v1282, 122
  %v1288 = vpop.permute.xlu0 %1287
  %v1291 = vadd.f32 %v1271, %v1286
  %v1292 = vadd.f32 %v1272, %v1288
  %1293 = vset.pattern.permute.xlu0 7
  %1294 = vperm.xlu0 %1293, %v73
  %v1295 = vpop.permute.xlu0 %1294
  %1297 = vset.pattern.permute.xlu0 7
  %1298 = vperm.xlu0 %1297, %v74
  %v1299 = vpop.permute.xlu0 %1298
  %v1301 = vmul.f32 %v893, %v1295
  %v1302 = vmul.f32 %v894, %v1299
  %1305 = vrot.lane.b32.xlu0 %v1301, 121
  %v1306 = vpop.permute.xlu0 %1305
  %1307 = vrot.lane.b32.xlu0 %v1302, 121
  %v1308 = vpop.permute.xlu0 %1307
  %v1311 = vadd.f32 %v1291, %v1306
  %v1312 = vadd.f32 %v1292, %v1308
  %1313 = vset.pattern.permute.xlu0 8
  %1314 = vperm.xlu0 %1313, %v73
  %v1315 = vpop.permute.xlu0 %1314
  %1317 = vset.pattern.permute.xlu0 8
  %1318 = vperm.xlu0 %1317, %v74
  %v1319 = vpop.permute.xlu0 %1318
  %v1321 = vmul.f32 %v893, %v1315
  %v1322 = vmul.f32 %v894, %v1319
  %1325 = vrot.lane.b32.xlu0 %v1321, 120
  %v1326 = vpop.permute.xlu0 %1325
  %1327 = vrot.lane.b32.xlu0 %v1322, 120
  %v1328 = vpop.permute.xlu0 %1327
  %v1331 = vadd.f32 %v1311, %v1326
  %v1332 = vadd.f32 %v1312, %v1328
  %1333 = vset.pattern.permute.xlu0 9
  %1334 = vperm.xlu0 %1333, %v73
  %v1335 = vpop.permute.xlu0 %1334
  %1337 = vset.pattern.permute.xlu0 9
  %1338 = vperm.xlu0 %1337, %v74
  %v1339 = vpop.permute.xlu0 %1338
  %v1341 = vmul.f32 %v893, %v1335
  %v1342 = vmul.f32 %v894, %v1339
  %1345 = vrot.lane.b32.xlu0 %v1341, 119
  %v1346 = vpop.permute.xlu0 %1345
  %1347 = vrot.lane.b32.xlu0 %v1342, 119
  %v1348 = vpop.permute.xlu0 %1347
  %v1351 = vadd.f32 %v1331, %v1346
  %v1352 = vadd.f32 %v1332, %v1348
  %1353 = vset.pattern.permute.xlu0 10
  %1354 = vperm.xlu0 %1353, %v73
  %v1355 = vpop.permute.xlu0 %1354
  %1357 = vset.pattern.permute.xlu0 10
  %1358 = vperm.xlu0 %1357, %v74
  %v1359 = vpop.permute.xlu0 %1358
  %v1361 = vmul.f32 %v893, %v1355
  %v1362 = vmul.f32 %v894, %v1359
  %1365 = vrot.lane.b32.xlu0 %v1361, 118
  %v1366 = vpop.permute.xlu0 %1365
  %1367 = vrot.lane.b32.xlu0 %v1362, 118
  %v1368 = vpop.permute.xlu0 %1367
  %v1371 = vadd.f32 %v1351, %v1366
  %v1372 = vadd.f32 %v1352, %v1368
  %1373 = vset.pattern.permute.xlu0 11
  %1374 = vperm.xlu0 %1373, %v73
  %v1375 = vpop.permute.xlu0 %1374
  %1377 = vset.pattern.permute.xlu0 11
  %1378 = vperm.xlu0 %1377, %v74
  %v1379 = vpop.permute.xlu0 %1378
  %v1381 = vmul.f32 %v893, %v1375
  %v1382 = vmul.f32 %v894, %v1379
  %1385 = vrot.lane.b32.xlu0 %v1381, 117
  %v1386 = vpop.permute.xlu0 %1385
  %1387 = vrot.lane.b32.xlu0 %v1382, 117
  %v1388 = vpop.permute.xlu0 %1387
  %v1391 = vadd.f32 %v1371, %v1386
  %v1392 = vadd.f32 %v1372, %v1388
  %1393 = vset.pattern.permute.xlu0 12
  %1394 = vperm.xlu0 %1393, %v73
  %v1395 = vpop.permute.xlu0 %1394
  %1397 = vset.pattern.permute.xlu0 12
  %1398 = vperm.xlu0 %1397, %v74
  %v1399 = vpop.permute.xlu0 %1398
  %v1401 = vmul.f32 %v893, %v1395
  %v1402 = vmul.f32 %v894, %v1399
  %1405 = vrot.lane.b32.xlu0 %v1401, 116
  %v1406 = vpop.permute.xlu0 %1405
  %1407 = vrot.lane.b32.xlu0 %v1402, 116
  %v1408 = vpop.permute.xlu0 %1407
  %v1411 = vadd.f32 %v1391, %v1406
  %v1412 = vadd.f32 %v1392, %v1408
  %1413 = vset.pattern.permute.xlu0 13
  %1414 = vperm.xlu0 %1413, %v73
  %v1415 = vpop.permute.xlu0 %1414
  %1417 = vset.pattern.permute.xlu0 13
  %1418 = vperm.xlu0 %1417, %v74
  %v1419 = vpop.permute.xlu0 %1418
  %v1421 = vmul.f32 %v893, %v1415
  %v1422 = vmul.f32 %v894, %v1419
  %1425 = vrot.lane.b32.xlu0 %v1421, 115
  %v1426 = vpop.permute.xlu0 %1425
  %1427 = vrot.lane.b32.xlu0 %v1422, 115
  %v1428 = vpop.permute.xlu0 %1427
  %v1431 = vadd.f32 %v1411, %v1426
  %v1432 = vadd.f32 %v1412, %v1428
  %1433 = vset.pattern.permute.xlu0 14
  %1434 = vperm.xlu0 %1433, %v73
  %v1435 = vpop.permute.xlu0 %1434
  %1437 = vset.pattern.permute.xlu0 14
  %1438 = vperm.xlu0 %1437, %v74
  %v1439 = vpop.permute.xlu0 %1438
  %v1441 = vmul.f32 %v893, %v1435
  %v1442 = vmul.f32 %v894, %v1439
  %1445 = vrot.lane.b32.xlu0 %v1441, 114
  %v1446 = vpop.permute.xlu0 %1445
  %1447 = vrot.lane.b32.xlu0 %v1442, 114
  %v1448 = vpop.permute.xlu0 %1447
  %v1451 = vadd.f32 %v1431, %v1446
  %v1452 = vadd.f32 %v1432, %v1448
  %1453 = vset.pattern.permute.xlu0 15
  %1454 = vperm.xlu0 %1453, %v73
  %v1455 = vpop.permute.xlu0 %1454
  %1457 = vset.pattern.permute.xlu0 15
  %1458 = vperm.xlu0 %1457, %v74
  %v1459 = vpop.permute.xlu0 %1458
  %v1461 = vmul.f32 %v893, %v1455
  %v1462 = vmul.f32 %v894, %v1459
  %1465 = vrot.lane.b32.xlu0 %v1461, 113
  %v1466 = vpop.permute.xlu0 %1465
  %1467 = vrot.lane.b32.xlu0 %v1462, 113
  %v1468 = vpop.permute.xlu0 %1467
  %v1471 = vadd.f32 %v1451, %v1466
  %v1472 = vadd.f32 %v1452, %v1468
  %1473 = vset.pattern.permute.xlu0 16
  %1474 = vperm.xlu0 %1473, %v73
  %v1475 = vpop.permute.xlu0 %1474
  %1477 = vset.pattern.permute.xlu0 16
  %1478 = vperm.xlu0 %1477, %v74
  %v1479 = vpop.permute.xlu0 %1478
  %v1481 = vmul.f32 %v893, %v1475
  %v1482 = vmul.f32 %v894, %v1479
  %1485 = vrot.lane.b32.xlu0 %v1481, 112
  %v1486 = vpop.permute.xlu0 %1485
  %1487 = vrot.lane.b32.xlu0 %v1482, 112
  %v1488 = vpop.permute.xlu0 %1487
  %v1491 = vadd.f32 %v1471, %v1486
  %v1492 = vadd.f32 %v1472, %v1488
  %1493 = vset.pattern.permute.xlu0 17
  %1494 = vperm.xlu0 %1493, %v73
  %v1495 = vpop.permute.xlu0 %1494
  %1497 = vset.pattern.permute.xlu0 17
  %1498 = vperm.xlu0 %1497, %v74
  %v1499 = vpop.permute.xlu0 %1498
  %v1501 = vmul.f32 %v893, %v1495
  %v1502 = vmul.f32 %v894, %v1499
  %1505 = vrot.lane.b32.xlu0 %v1501, 111
  %v1506 = vpop.permute.xlu0 %1505
  %1507 = vrot.lane.b32.xlu0 %v1502, 111
  %v1508 = vpop.permute.xlu0 %1507
  %v1511 = vadd.f32 %v1491, %v1506
  %v1512 = vadd.f32 %v1492, %v1508
  %1513 = vset.pattern.permute.xlu0 18
  %1514 = vperm.xlu0 %1513, %v73
  %v1515 = vpop.permute.xlu0 %1514
  %1517 = vset.pattern.permute.xlu0 18
  %1518 = vperm.xlu0 %1517, %v74
  %v1519 = vpop.permute.xlu0 %1518
  %v1521 = vmul.f32 %v893, %v1515
  %v1522 = vmul.f32 %v894, %v1519
  %1525 = vrot.lane.b32.xlu0 %v1521, 110
  %v1526 = vpop.permute.xlu0 %1525
  %1527 = vrot.lane.b32.xlu0 %v1522, 110
  %v1528 = vpop.permute.xlu0 %1527
  %v1531 = vadd.f32 %v1511, %v1526
  %v1532 = vadd.f32 %v1512, %v1528
  %1533 = vset.pattern.permute.xlu0 19
  %1534 = vperm.xlu0 %1533, %v73
  %v1535 = vpop.permute.xlu0 %1534
  %1537 = vset.pattern.permute.xlu0 19
  %1538 = vperm.xlu0 %1537, %v74
  %v1539 = vpop.permute.xlu0 %1538
  %v1541 = vmul.f32 %v893, %v1535
  %v1542 = vmul.f32 %v894, %v1539
  %1545 = vrot.lane.b32.xlu0 %v1541, 109
  %v1546 = vpop.permute.xlu0 %1545
  %1547 = vrot.lane.b32.xlu0 %v1542, 109
  %v1548 = vpop.permute.xlu0 %1547
  %v1551 = vadd.f32 %v1531, %v1546
  %v1552 = vadd.f32 %v1532, %v1548
  %1553 = vset.pattern.permute.xlu0 20
  %1554 = vperm.xlu0 %1553, %v73
  %v1555 = vpop.permute.xlu0 %1554
  %1557 = vset.pattern.permute.xlu0 20
  %1558 = vperm.xlu0 %1557, %v74
  %v1559 = vpop.permute.xlu0 %1558
  %v1561 = vmul.f32 %v893, %v1555
  %v1562 = vmul.f32 %v894, %v1559
  %1565 = vrot.lane.b32.xlu0 %v1561, 108
  %v1566 = vpop.permute.xlu0 %1565
  %1567 = vrot.lane.b32.xlu0 %v1562, 108
  %v1568 = vpop.permute.xlu0 %1567
  %v1571 = vadd.f32 %v1551, %v1566
  %v1572 = vadd.f32 %v1552, %v1568
  %v1573 = vmul.f32 %v1571, %v87
  %v1574 = vmul.f32 %v1572, %v87
  %v1575 = vsel %vm813, %v1573, 0.0
  %v1576 = vsel %vm813, %v1574, 0.0
  %v1577 = vadd.f32 %v1575, %v1576
  %1578 = vadd.xlane.f32.xlu0 %v1577
  %v1579 = vpop.xlane.xlu0 %1578
  %v1580 = vrot.slane %v1579, 4
  %v1581 = vadd.f32 %v1579, %v1580
  %v1582 = vrot.slane %v1581, 2
  %v1583 = vadd.f32 %v1581, %v1582
  %v1584 = vrot.slane %v1583, 1
  %v1585 = vadd.f32 %v1583, %v1584
  %s1586 = vtos %v1585
  %s1587 = smul.f32 %s1586, %s94
  %v1588 = vstv %s1587
  %v1589 = vsub.f32 %v1573, %v1588
  %v1590 = vsub.f32 %v1574, %v1588
  %v1591 = vmul.f32 %v1589, %v87
  %v1592 = vmul.f32 %v1590, %v87
  %v1593 = vmul.f32 %v1591, %v1591
  %v1594 = vmul.f32 %v1592, %v1592
  %v1595 = vsel %vm813, %v1593, 0.0
  %v1596 = vsel %vm813, %v1594, 0.0
  %v1597 = vadd.f32 %v1595, %v1596
  %1598 = vadd.xlane.f32.xlu0 %v1597
  %v1599 = vpop.xlane.xlu0 %1598
  %v1600 = vrot.slane %v1599, 4
  %v1601 = vadd.f32 %v1599, %v1600
  %v1602 = vrot.slane %v1601, 2
  %v1603 = vadd.f32 %v1601, %v1602
  %v1604 = vrot.slane %v1603, 1
  %v1605 = vadd.f32 %v1603, %v1604
  %s1606 = vtos %v1605
  %s1607 = smul.f32 %s1606, %s94
  %s1608 = sadd.f32 %s1607, 1e-06
  %v1609 = vstv %s1608
  %v1610 = vrsqrt.pop %v1609
  %s1611 = vtos %v1610
  %v1612 = vstv %s1611
  %v1613 = vmul.f32 %v1591, %v1612
  %v1614 = vmul.f32 %v1592, %v1612
  %1616 = vset.pattern.permute.xlu0 0
  %1617 = vperm.xlu0 %1616, %v75
  %v1618 = vpop.permute.xlu0 %1617
  %1621 = vset.pattern.permute.xlu0 0
  %1622 = vperm.xlu0 %1621, %v76
  %v1623 = vpop.permute.xlu0 %1622
  %v1625 = vmul.f32 %v1613, %v1618
  %v1626 = vmul.f32 %v1614, %v1623
  %1628 = vset.pattern.permute.xlu0 0
  %1629 = vperm.xlu0 %1628, %v77
  %v1630 = vpop.permute.xlu0 %1629
  %1633 = vset.pattern.permute.xlu0 0
  %1634 = vperm.xlu0 %1633, %v78
  %v1635 = vpop.permute.xlu0 %1634
  %v1637 = vadd.f32 %v1625, %v1630
  %v1638 = vadd.f32 %v1626, %v1635
  %v1639 = vmax.f32 %v1637, 0.0
  %v1640 = vmax.f32 %v1638, 0.0
  %v1641 = vmul.f32 %v1639, %v87
  %v1642 = vmul.f32 %v1640, %v87
  %1645 = vrot.lane.b32.xlu0 %v1157, 122
  %v1646 = vpop.permute.xlu0 %1645
  %1647 = vrot.lane.b32.xlu0 %v1158, 122
  %v1648 = vpop.permute.xlu0 %1647
  %1652 = vset.pattern.permute.xlu0 0
  %1653 = vperm.xlu0 %1652, %v80
  %v1654 = vpop.permute.xlu0 %1653
  %vm1656 = vcmask 392192
  %v1658 = vsel %vm1656, %v79, 0
  %1660 = vmatprep.subr.mxu0 0.0
  %1661 = vmatpush1.msra.mxu0 0.0
  %1662 = vmatprep.subr.mxu0 0.0
  %1663 = vmatpush1.msra.mxu0 0.0
  %1664 = vmatprep.subr.mxu0 0.0
  %1665 = vmatpush1.msra.mxu0 0.0
  %1666 = vmatprep.subr.mxu0 0.0
  %1667 = vmatpush1.msra.mxu0 0.0
  %1668 = vmatprep.subr.mxu0 0.0
  %1669 = vmatpush1.msra.mxu0 0.0
  %1670 = vmatprep.subr.mxu0 0.0
  %1671 = vmatpush1.msra.mxu0 0.0
  %1672 = vmatprep.subr.mxu0 0.0
  %1673 = vmatpush1.msra.mxu0 0.0
  %1674 = vmatprep.subr.mxu0 0.0
  %1675 = vmatpush1.msra.mxu0 0.0
  %1676 = vmatprep.subr.mxu0 0.0
  %1677 = vmatpush1.msra.mxu0 0.0
  %1678 = vmatprep.subr.mxu0 0.0
  %1679 = vmatpush1.msra.mxu0 0.0
  %1680 = vmatprep.subr.mxu0 0.0
  %1681 = vmatpush1.msra.mxu0 %v1642
  %1682 = vmatprep.subr.mxu0 0.0
  %1683 = vmatpush1.msra.mxu0 %v1641
  %1684 = vmatprep.subr.mxu0 0.0
  %1685 = vmatpush1.msra.mxu0 %v1648
  %1686 = vmatprep.subr.mxu0 0.0
  %1687 = vmatpush1.msra.mxu0 %v1646
  %1688 = vmatprep.subr.mxu0 0.0
  %1689 = vmatpush1.msra.mxu0 %v881
  %1690 = vmatprep.subr.mxu0 0.0
  %1691 = vmatpush1.msra.mxu0 %v880
  %1692 = vmatprep.subr.mxu0 0.0
  %1693 = vmatpush2.msra.mxu0 0.0
  %1694 = vmatprep.subr.mxu0 0.0
  %1695 = vmatpush2.msra.mxu0 0.0
  %1696 = vmatprep.subr.mxu0 0.0
  %1697 = vmatpush2.msra.mxu0 0.0
  %1698 = vmatprep.subr.mxu0 0.0
  %1699 = vmatpush2.msra.mxu0 0.0
  %1700 = vmatprep.subr.mxu0 0.0
  %1701 = vmatpush2.msra.mxu0 0.0
  %1702 = vmatprep.subr.mxu0 0.0
  %1703 = vmatpush2.msra.mxu0 0.0
  %1704 = vmatprep.subr.mxu0 0.0
  %1705 = vmatpush2.msra.mxu0 0.0
  %1706 = vmatprep.subr.mxu0 0.0
  %1707 = vmatpush2.msra.mxu0 0.0
  %1708 = vmatprep.subr.mxu0 0.0
  %1709 = vmatpush2.msra.mxu0 0.0
  %1710 = vmatprep.subr.mxu0 0.0
  %1711 = vmatpush2.msra.mxu0 0.0
  %1712 = vmatprep.subr.mxu0 0.0
  %1713 = vmatpush2.msra.mxu0 0.0
  %1714 = vmatprep.subr.mxu0 0.0
  %1715 = vmatpush2.msra.mxu0 0.0
  %1716 = vmatprep.subr.mxu0 0.0
  %1717 = vmatpush2.msra.mxu0 0.0
  %1718 = vmatprep.subr.mxu0 0.0
  %1719 = vmatpush2.msra.mxu0 0.0
  %1720 = vmatprep.subr.mxu0 0.0
  %1721 = vmatpush2.msra.mxu0 0.0
  %1722 = vmatprep.subr.mxu0 0.0
  %1723 = vmatpush2.msra.mxu0 0.0
  %1724 = vmatprep.mubr.f32.mxu0 0.0
  %1725 = vmatmul.mubr.f32.gmra.mxu0 %v1658
  %v1726 = vpop.f32.mrf.mxu0
  %v1727 = vadd.f32 %v1654, %v1726
  %v1728 = vpop.f32.mrf.mxu0
  %1729 = vdwg.mxu0
  %v1730 = vmul.f32 %v1727, %v87
  %1732 = vrot.lane.b32.xlu0 %v1730, 3
  %v1733 = vpop.permute.xlu0 %1732
  %vm1735 = vcmask 151576
  %1736 = vst.msk [vmem:[#allocation3] sm:$0x1f] %vm1735, %v1733
  %v1737 = vld [vmem:[#allocation3] sm:$0x1f]
  %v1738 = vmul.f32 %v1737, 0.004433048
  %v1739 = vmul.f32 %v1737, 0.054005582
  %1741 = vrot.lane.b32.xlu0 %v1739, 127
  %v1742 = vpop.permute.xlu0 %1741
  %v1744 = vadd.f32 %v1738, %v1742
  %v1745 = vmul.f32 %v1737, 0.24203622
  %1747 = vrot.lane.b32.xlu0 %v1745, 126
  %v1748 = vpop.permute.xlu0 %1747
  %v1750 = vadd.f32 %v1744, %v1748
  %v1751 = vmul.f32 %v1737, 0.39905027
  %1753 = vrot.lane.b32.xlu0 %v1751, 125
  %v1754 = vpop.permute.xlu0 %1753
  %v1756 = vadd.f32 %v1750, %v1754
  %1757 = vrot.lane.b32.xlu0 %v1745, 124
  %v1758 = vpop.permute.xlu0 %1757
  %v1760 = vadd.f32 %v1756, %v1758
  %1761 = vrot.lane.b32.xlu0 %v1739, 123
  %v1762 = vpop.permute.xlu0 %1761
  %v1764 = vadd.f32 %v1760, %v1762
  %1766 = vrot.lane.b32.xlu0 %v1738, 122
  %v1767 = vpop.permute.xlu0 %1766
  %v1769 = vadd.f32 %v1764, %v1767
  %vm1770 = vcmask 126976
  %1771 = vst.msk [vmem:[%s13] sm:$0x1f] %vm1770, %v1769
  %s1772 = sadd.s32 %s49, 1
  %s1773 = sld [smem:[#allocation5 + %s1772]]
  %v1774 = vstv %s1773
  %vm1775 = vcmp.lt.s32.totalorder %v82, %v1774
  %v1776 = vsel %vm1775, 1, 0
  %v1777 = vcvt.s32.f32 %v1776
  %p1778 = scmp.gt.s32.totalorder %s1773, 1
  %s1779 = scalar_select %p1778, %s1773, 1
  %s1780 = scvt.s32.f32 %s1779
  %s1781 = smul.f32 %s1780, 16.0
  %v1782 = vstv %s1781
  %v1783 = vrcp.pop %v1782
  %s1784 = vtos %v1783
  %s1785 = scalar_lea.vmem %s1, 512
  %v1786 = vld [vmem:[%s1785] sm:$0xf]
  %v1787 = vld [vmem:[%s1785 + $0x4] sm:$0xf]
  %v1788 = vld [vmem:[%s1785 + $0x8] sm:$0xf]
  %v1789 = vld [vmem:[%s1785 + $0xc] sm:$0xf]
  %v1790 = vld [vmem:[%s1785 + $0x10] sm:$0xf]
  %v1791 = vld [vmem:[%s1785 + $0x14] sm:$0xf]
  %v1792 = vld [vmem:[%s1785 + $0x18] sm:$0xf]
  %v1793 = vld [vmem:[%s1785 + $0x1c] sm:$0xf]
  %v1794 = vld [vmem:[%s1785 + $0x20] sm:$0xf]
  %v1795 = vld [vmem:[%s1785 + $0x24] sm:$0xf]
  %v1796 = vld [vmem:[%s1785 + $0x28] sm:$0xf]
  %v1797 = vld [vmem:[%s1785 + $0x2c] sm:$0xf]
  %v1798 = vld [vmem:[%s1785 + $0x30] sm:$0xf]
  %v1799 = vld [vmem:[%s1785 + $0x34] sm:$0xf]
  %v1800 = vld [vmem:[%s1785 + $0x38] sm:$0xf]
  %v1801 = vld [vmem:[%s1785 + $0x3c] sm:$0xf]
  %v1802 = vld [vmem:[%s1785 + $0x40] sm:$0xf]
  %v1803 = vld [vmem:[%s1785 + $0x44] sm:$0xf]
  %v1804 = vld [vmem:[%s1785 + $0x48] sm:$0xf]
  %v1805 = vld [vmem:[%s1785 + $0x4c] sm:$0xf]
  %v1806 = vld [vmem:[%s1785 + $0x50] sm:$0xf]
  %v1807 = vld [vmem:[%s1785 + $0x54] sm:$0xf]
  %v1808 = vld [vmem:[%s1785 + $0x58] sm:$0xf]
  %v1809 = vld [vmem:[%s1785 + $0x5c] sm:$0xf]
  %v1810 = vld [vmem:[%s1785 + $0x60] sm:$0xf]
  %v1811 = vld [vmem:[%s1785 + $0x64] sm:$0xf]
  %v1812 = vld [vmem:[%s1785 + $0x68] sm:$0xf]
  %v1813 = vld [vmem:[%s1785 + $0x6c] sm:$0xf]
  %v1814 = vld [vmem:[%s1785 + $0x70] sm:$0xf]
  %v1815 = vld [vmem:[%s1785 + $0x74] sm:$0xf]
  %v1816 = vld [vmem:[%s1785 + $0x78] sm:$0xf]
  %v1817 = vld [vmem:[%s1785 + $0x7c] sm:$0xf]
  %v1818 = vld [vmem:[%s1785 + $0x80] sm:$0xf]
  %v1819 = vld [vmem:[%s1785 + $0x84] sm:$0xf]
  %v1820 = vld [vmem:[%s1785 + $0x88] sm:$0xf]
  %v1821 = vld [vmem:[%s1785 + $0x8c] sm:$0xf]
  %v1822 = vld [vmem:[%s1785 + $0x90] sm:$0xf]
  %v1823 = vld [vmem:[%s1785 + $0x94] sm:$0xf]
  %v1824 = vld [vmem:[%s1785 + $0x98] sm:$0xf]
  %v1825 = vld [vmem:[%s1785 + $0x9c] sm:$0xf]
  %v1826 = vld [vmem:[%s1785 + $0xa0] sm:$0xf]
  %v1827 = vld [vmem:[%s1785 + $0xa4] sm:$0xf]
  %v1828 = vld [vmem:[%s1785 + $0xa8] sm:$0xf]
  %v1829 = vld [vmem:[%s1785 + $0xac] sm:$0xf]
  %v1830 = vld [vmem:[%s1785 + $0xb0] sm:$0xf]
  %v1831 = vld [vmem:[%s1785 + $0xb4] sm:$0xf]
  %v1832 = vld [vmem:[%s1785 + $0xb8] sm:$0xf]
  %v1833 = vld [vmem:[%s1785 + $0xbc] sm:$0xf]
  %v1834 = vld [vmem:[%s1785 + $0xc0] sm:$0xf]
  %v1835 = vld [vmem:[%s1785 + $0xc4] sm:$0xf]
  %v1836 = vld [vmem:[%s1785 + $0xc8] sm:$0xf]
  %v1837 = vld [vmem:[%s1785 + $0xcc] sm:$0xf]
  %v1838 = vld [vmem:[%s1785 + $0xd0] sm:$0xf]
  %v1839 = vld [vmem:[%s1785 + $0xd4] sm:$0xf]
  %v1840 = vld [vmem:[%s1785 + $0xd8] sm:$0xf]
  %v1841 = vld [vmem:[%s1785 + $0xdc] sm:$0xf]
  %v1842 = vld [vmem:[%s1785 + $0xe0] sm:$0xf]
  %v1843 = vld [vmem:[%s1785 + $0xe4] sm:$0xf]
  %v1844 = vld [vmem:[%s1785 + $0xe8] sm:$0xf]
  %v1845 = vld [vmem:[%s1785 + $0xec] sm:$0xf]
  %v1846 = vld [vmem:[%s1785 + $0xf0] sm:$0xf]
  %v1847 = vld [vmem:[%s1785 + $0xf4] sm:$0xf]
  %v1848 = vld [vmem:[%s1785 + $0xf8] sm:$0xf]
  %v1849 = vld [vmem:[%s1785 + $0xfc] sm:$0xf]
  %v1850 = vld [vmem:[%s1785 + $0x100] sm:$0xf]
  %v1851 = vld [vmem:[%s1785 + $0x104] sm:$0xf]
  %v1852 = vld [vmem:[%s1785 + $0x108] sm:$0xf]
  %v1853 = vld [vmem:[%s1785 + $0x10c] sm:$0xf]
  %v1854 = vld [vmem:[%s1785 + $0x110] sm:$0xf]
  %v1855 = vld [vmem:[%s1785 + $0x114] sm:$0xf]
  %v1856 = vld [vmem:[%s1785 + $0x118] sm:$0xf]
  %v1857 = vld [vmem:[%s1785 + $0x11c] sm:$0xf]
  %v1858 = vld [vmem:[%s1785 + $0x120] sm:$0xf]
  %v1859 = vld [vmem:[%s1785 + $0x124] sm:$0xf]
  %v1860 = vld [vmem:[%s1785 + $0x128] sm:$0xf]
  %v1861 = vld [vmem:[%s1785 + $0x12c] sm:$0xf]
  %v1862 = vld [vmem:[%s1785 + $0x130] sm:$0xf]
  %v1863 = vld [vmem:[%s1785 + $0x134] sm:$0xf]
  %v1864 = vld [vmem:[%s1785 + $0x138] sm:$0xf]
  %v1865 = vld [vmem:[%s1785 + $0x13c] sm:$0xf]
  %v1866 = vld [vmem:[%s1785 + $0x140] sm:$0xf]
  %v1867 = vld [vmem:[%s1785 + $0x144] sm:$0xf]
  %v1868 = vld [vmem:[%s1785 + $0x148] sm:$0xf]
  %v1869 = vld [vmem:[%s1785 + $0x14c] sm:$0xf]
  %v1870 = vld [vmem:[%s1785 + $0x150] sm:$0xf]
  %v1871 = vld [vmem:[%s1785 + $0x154] sm:$0xf]
  %v1872 = vld [vmem:[%s1785 + $0x158] sm:$0xf]
  %v1873 = vld [vmem:[%s1785 + $0x15c] sm:$0xf]
  %v1874 = vld [vmem:[%s1785 + $0x160] sm:$0xf]
  %v1875 = vld [vmem:[%s1785 + $0x164] sm:$0xf]
  %v1876 = vld [vmem:[%s1785 + $0x168] sm:$0xf]
  %v1877 = vld [vmem:[%s1785 + $0x16c] sm:$0xf]
  %v1878 = vld [vmem:[%s1785 + $0x170] sm:$0xf]
  %v1879 = vld [vmem:[%s1785 + $0x174] sm:$0xf]
  %v1880 = vld [vmem:[%s1785 + $0x178] sm:$0xf]
  %v1881 = vld [vmem:[%s1785 + $0x17c] sm:$0xf]
  %v1882 = vld [vmem:[%s1785 + $0x180] sm:$0xf]
  %v1883 = vld [vmem:[%s1785 + $0x184] sm:$0xf]
  %v1884 = vld [vmem:[%s1785 + $0x188] sm:$0xf]
  %v1885 = vld [vmem:[%s1785 + $0x18c] sm:$0xf]
  %v1886 = vld [vmem:[%s1785 + $0x190] sm:$0xf]
  %v1887 = vld [vmem:[%s1785 + $0x194] sm:$0xf]
  %v1888 = vld [vmem:[%s1785 + $0x198] sm:$0xf]
  %v1889 = vld [vmem:[%s1785 + $0x19c] sm:$0xf]
  %v1890 = vld [vmem:[%s1785 + $0x1a0] sm:$0xf]
  %v1891 = vld [vmem:[%s1785 + $0x1a4] sm:$0xf]
  %v1892 = vld [vmem:[%s1785 + $0x1a8] sm:$0xf]
  %v1893 = vld [vmem:[%s1785 + $0x1ac] sm:$0xf]
  %v1894 = vld [vmem:[%s1785 + $0x1b0] sm:$0xf]
  %v1895 = vld [vmem:[%s1785 + $0x1b4] sm:$0xf]
  %v1896 = vld [vmem:[%s1785 + $0x1b8] sm:$0xf]
  %v1897 = vld [vmem:[%s1785 + $0x1bc] sm:$0xf]
  %v1898 = vld [vmem:[%s1785 + $0x1c0] sm:$0xf]
  %v1899 = vld [vmem:[%s1785 + $0x1c4] sm:$0xf]
  %v1900 = vld [vmem:[%s1785 + $0x1c8] sm:$0xf]
  %v1901 = vld [vmem:[%s1785 + $0x1cc] sm:$0xf]
  %v1902 = vld [vmem:[%s1785 + $0x1d0] sm:$0xf]
  %v1903 = vld [vmem:[%s1785 + $0x1d4] sm:$0xf]
  %v1904 = vld [vmem:[%s1785 + $0x1d8] sm:$0xf]
  %v1905 = vld [vmem:[%s1785 + $0x1dc] sm:$0xf]
  %v1906 = vld [vmem:[%s1785 + $0x1e0] sm:$0xf]
  %v1907 = vld [vmem:[%s1785 + $0x1e4] sm:$0xf]
  %v1908 = vld [vmem:[%s1785 + $0x1e8] sm:$0xf]
  %v1909 = vld [vmem:[%s1785 + $0x1ec] sm:$0xf]
  %v1910 = vld [vmem:[%s1785 + $0x1f0] sm:$0xf]
  %v1911 = vld [vmem:[%s1785 + $0x1f4] sm:$0xf]
  %v1912 = vld [vmem:[%s1785 + $0x1f8] sm:$0xf]
  %v1913 = vld [vmem:[%s1785 + $0x1fc] sm:$0xf]
  %v2042 = vunpack.c.l.b16 %v1786
  %v2043 = vunpack.c.l.b16 %v1787
  %v2044 = vunpack.c.l.b16 %v1788
  %v2045 = vunpack.c.l.b16 %v1789
  %v2046 = vunpack.c.l.b16 %v1790
  %v2047 = vunpack.c.l.b16 %v1791
  %v2048 = vunpack.c.l.b16 %v1792
  %v2049 = vunpack.c.l.b16 %v1793
  %v2050 = vunpack.c.l.b16 %v1794
  %v2051 = vunpack.c.l.b16 %v1795
  %v2052 = vunpack.c.l.b16 %v1796
  %v2053 = vunpack.c.l.b16 %v1797
  %v2054 = vunpack.c.l.b16 %v1798
  %v2055 = vunpack.c.l.b16 %v1799
  %v2056 = vunpack.c.l.b16 %v1800
  %v2057 = vunpack.c.l.b16 %v1801
  %v2058 = vunpack.c.l.b16 %v1802
  %v2059 = vunpack.c.l.b16 %v1803
  %v2060 = vunpack.c.l.b16 %v1804
  %v2061 = vunpack.c.l.b16 %v1805
  %v2062 = vunpack.c.l.b16 %v1806
  %v2063 = vunpack.c.l.b16 %v1807
  %v2064 = vunpack.c.l.b16 %v1808
  %v2065 = vunpack.c.l.b16 %v1809
  %v2066 = vunpack.c.l.b16 %v1810
  %v2067 = vunpack.c.l.b16 %v1811
  %v2068 = vunpack.c.l.b16 %v1812
  %v2069 = vunpack.c.l.b16 %v1813
  %v2070 = vunpack.c.l.b16 %v1814
  %v2071 = vunpack.c.l.b16 %v1815
  %v2072 = vunpack.c.l.b16 %v1816
  %v2073 = vunpack.c.l.b16 %v1817
  %v2074 = vunpack.c.l.b16 %v1818
  %v2075 = vunpack.c.l.b16 %v1819
  %v2076 = vunpack.c.l.b16 %v1820
  %v2077 = vunpack.c.l.b16 %v1821
  %v2078 = vunpack.c.l.b16 %v1822
  %v2079 = vunpack.c.l.b16 %v1823
  %v2080 = vunpack.c.l.b16 %v1824
  %v2081 = vunpack.c.l.b16 %v1825
  %v2082 = vunpack.c.l.b16 %v1826
  %v2083 = vunpack.c.l.b16 %v1827
  %v2084 = vunpack.c.l.b16 %v1828
  %v2085 = vunpack.c.l.b16 %v1829
  %v2086 = vunpack.c.l.b16 %v1830
  %v2087 = vunpack.c.l.b16 %v1831
  %v2088 = vunpack.c.l.b16 %v1832
  %v2089 = vunpack.c.l.b16 %v1833
  %v2090 = vunpack.c.l.b16 %v1834
  %v2091 = vunpack.c.l.b16 %v1835
  %v2092 = vunpack.c.l.b16 %v1836
  %v2093 = vunpack.c.l.b16 %v1837
  %v2094 = vunpack.c.l.b16 %v1838
  %v2095 = vunpack.c.l.b16 %v1839
  %v2096 = vunpack.c.l.b16 %v1840
  %v2097 = vunpack.c.l.b16 %v1841
  %v2098 = vunpack.c.l.b16 %v1842
  %v2099 = vunpack.c.l.b16 %v1843
  %v2100 = vunpack.c.l.b16 %v1844
  %v2101 = vunpack.c.l.b16 %v1845
  %v2102 = vunpack.c.l.b16 %v1846
  %v2103 = vunpack.c.l.b16 %v1847
  %v2104 = vunpack.c.l.b16 %v1848
  %v2105 = vunpack.c.l.b16 %v1849
  %v2106 = vunpack.c.l.b16 %v1850
  %v2107 = vunpack.c.l.b16 %v1851
  %v2108 = vunpack.c.l.b16 %v1852
  %v2109 = vunpack.c.l.b16 %v1853
  %v2110 = vunpack.c.l.b16 %v1854
  %v2111 = vunpack.c.l.b16 %v1855
  %v2112 = vunpack.c.l.b16 %v1856
  %v2113 = vunpack.c.l.b16 %v1857
  %v2114 = vunpack.c.l.b16 %v1858
  %v2115 = vunpack.c.l.b16 %v1859
  %v2116 = vunpack.c.l.b16 %v1860
  %v2117 = vunpack.c.l.b16 %v1861
  %v2118 = vunpack.c.l.b16 %v1862
  %v2119 = vunpack.c.l.b16 %v1863
  %v2120 = vunpack.c.l.b16 %v1864
  %v2121 = vunpack.c.l.b16 %v1865
  %v2122 = vunpack.c.l.b16 %v1866
  %v2123 = vunpack.c.l.b16 %v1867
  %v2124 = vunpack.c.l.b16 %v1868
  %v2125 = vunpack.c.l.b16 %v1869
  %v2126 = vunpack.c.l.b16 %v1870
  %v2127 = vunpack.c.l.b16 %v1871
  %v2128 = vunpack.c.l.b16 %v1872
  %v2129 = vunpack.c.l.b16 %v1873
  %v2130 = vunpack.c.l.b16 %v1874
  %v2131 = vunpack.c.l.b16 %v1875
  %v2132 = vunpack.c.l.b16 %v1876
  %v2133 = vunpack.c.l.b16 %v1877
  %v2134 = vunpack.c.l.b16 %v1878
  %v2135 = vunpack.c.l.b16 %v1879
  %v2136 = vunpack.c.l.b16 %v1880
  %v2137 = vunpack.c.l.b16 %v1881
  %v2138 = vunpack.c.l.b16 %v1882
  %v2139 = vunpack.c.l.b16 %v1883
  %v2140 = vunpack.c.l.b16 %v1884
  %v2141 = vunpack.c.l.b16 %v1885
  %v2142 = vunpack.c.l.b16 %v1886
  %v2143 = vunpack.c.l.b16 %v1887
  %v2144 = vunpack.c.l.b16 %v1888
  %v2145 = vunpack.c.l.b16 %v1889
  %v2146 = vunpack.c.l.b16 %v1890
  %v2147 = vunpack.c.l.b16 %v1891
  %v2148 = vunpack.c.l.b16 %v1892
  %v2149 = vunpack.c.l.b16 %v1893
  %v2150 = vunpack.c.l.b16 %v1894
  %v2151 = vunpack.c.l.b16 %v1895
  %v2152 = vunpack.c.l.b16 %v1896
  %v2153 = vunpack.c.l.b16 %v1897
  %v2154 = vunpack.c.l.b16 %v1898
  %v2155 = vunpack.c.l.b16 %v1899
  %v2156 = vunpack.c.l.b16 %v1900
  %v2157 = vunpack.c.l.b16 %v1901
  %v2158 = vunpack.c.l.b16 %v1902
  %v2159 = vunpack.c.l.b16 %v1903
  %v2160 = vunpack.c.l.b16 %v1904
  %v2161 = vunpack.c.l.b16 %v1905
  %v2162 = vunpack.c.l.b16 %v1906
  %v2163 = vunpack.c.l.b16 %v1907
  %v2164 = vunpack.c.l.b16 %v1908
  %v2165 = vunpack.c.l.b16 %v1909
  %v2166 = vunpack.c.l.b16 %v1910
  %v2167 = vunpack.c.l.b16 %v1911
  %v2168 = vunpack.c.l.b16 %v1912
  %v2169 = vunpack.c.l.b16 %v1913
  %v2170 = vpack.c.b16 %v2043, %v2042
  %v2171 = vpack.c.b16 %v2045, %v2044
  %v2172 = vpack.c.b16 %v2047, %v2046
  %v2173 = vpack.c.b16 %v2049, %v2048
  %v2174 = vpack.c.b16 %v2051, %v2050
  %v2175 = vpack.c.b16 %v2053, %v2052
  %v2176 = vpack.c.b16 %v2055, %v2054
  %v2177 = vpack.c.b16 %v2057, %v2056
  %v2178 = vpack.c.b16 %v2059, %v2058
  %v2179 = vpack.c.b16 %v2061, %v2060
  %v2180 = vpack.c.b16 %v2063, %v2062
  %v2181 = vpack.c.b16 %v2065, %v2064
  %v2182 = vpack.c.b16 %v2067, %v2066
  %v2183 = vpack.c.b16 %v2069, %v2068
  %v2184 = vpack.c.b16 %v2071, %v2070
  %v2185 = vpack.c.b16 %v2073, %v2072
  %v2186 = vpack.c.b16 %v2075, %v2074
  %v2187 = vpack.c.b16 %v2077, %v2076
  %v2188 = vpack.c.b16 %v2079, %v2078
  %v2189 = vpack.c.b16 %v2081, %v2080
  %v2190 = vpack.c.b16 %v2083, %v2082
  %v2191 = vpack.c.b16 %v2085, %v2084
  %v2192 = vpack.c.b16 %v2087, %v2086
  %v2193 = vpack.c.b16 %v2089, %v2088
  %v2194 = vpack.c.b16 %v2091, %v2090
  %v2195 = vpack.c.b16 %v2093, %v2092
  %v2196 = vpack.c.b16 %v2095, %v2094
  %v2197 = vpack.c.b16 %v2097, %v2096
  %v2198 = vpack.c.b16 %v2099, %v2098
  %v2199 = vpack.c.b16 %v2101, %v2100
  %v2200 = vpack.c.b16 %v2103, %v2102
  %v2201 = vpack.c.b16 %v2105, %v2104
  %v2202 = vpack.c.b16 %v2107, %v2106
  %v2203 = vpack.c.b16 %v2109, %v2108
  %v2204 = vpack.c.b16 %v2111, %v2110
  %v2205 = vpack.c.b16 %v2113, %v2112
  %v2206 = vpack.c.b16 %v2115, %v2114
  %v2207 = vpack.c.b16 %v2117, %v2116
  %v2208 = vpack.c.b16 %v2119, %v2118
  %v2209 = vpack.c.b16 %v2121, %v2120
  %v2210 = vpack.c.b16 %v2123, %v2122
  %v2211 = vpack.c.b16 %v2125, %v2124
  %v2212 = vpack.c.b16 %v2127, %v2126
  %v2213 = vpack.c.b16 %v2129, %v2128
  %v2214 = vpack.c.b16 %v2131, %v2130
  %v2215 = vpack.c.b16 %v2133, %v2132
  %v2216 = vpack.c.b16 %v2135, %v2134
  %v2217 = vpack.c.b16 %v2137, %v2136
  %v2218 = vpack.c.b16 %v2139, %v2138
  %v2219 = vpack.c.b16 %v2141, %v2140
  %v2220 = vpack.c.b16 %v2143, %v2142
  %v2221 = vpack.c.b16 %v2145, %v2144
  %v2222 = vpack.c.b16 %v2147, %v2146
  %v2223 = vpack.c.b16 %v2149, %v2148
  %v2224 = vpack.c.b16 %v2151, %v2150
  %v2225 = vpack.c.b16 %v2153, %v2152
  %v2226 = vpack.c.b16 %v2155, %v2154
  %v2227 = vpack.c.b16 %v2157, %v2156
  %v2228 = vpack.c.b16 %v2159, %v2158
  %v2229 = vpack.c.b16 %v2161, %v2160
  %v2230 = vpack.c.b16 %v2163, %v2162
  %v2231 = vpack.c.b16 %v2165, %v2164
  %v2232 = vpack.c.b16 %v2167, %v2166
  %v2233 = vpack.c.b16 %v2169, %v2168
  %2298 = vmatprep.subr.bf16.mxu0 0
  %2299 = vmatpush1.bf16.msra.mxu0 %v2177
  %2300 = vmatprep.subr.bf16.mxu0 0
  %2301 = vmatpush1.bf16.msra.mxu0 %v2176
  %2302 = vmatprep.subr.bf16.mxu0 0
  %2303 = vmatpush1.bf16.msra.mxu0 %v2175
  %2304 = vmatprep.subr.bf16.mxu0 0
  %2305 = vmatpush1.bf16.msra.mxu0 %v2174
  %2306 = vmatprep.subr.bf16.mxu0 0
  %2307 = vmatpush1.bf16.msra.mxu0 %v2173
  %2308 = vmatprep.subr.bf16.mxu0 0
  %2309 = vmatpush1.bf16.msra.mxu0 %v2172
  %2310 = vmatprep.subr.bf16.mxu0 0
  %2311 = vmatpush1.bf16.msra.mxu0 %v2171
  %2312 = vmatprep.subr.bf16.mxu0 0
  %2313 = vmatpush1.bf16.msra.mxu0 %v2170
  %2314 = vmatprep.subr.bf16.mxu0 0
  %2315 = vmatpush2.bf16.msra.mxu0 %v2185
  %2316 = vmatprep.subr.bf16.mxu0 0
  %2317 = vmatpush2.bf16.msra.mxu0 %v2184
  %2318 = vmatprep.subr.bf16.mxu0 0
  %2319 = vmatpush2.bf16.msra.mxu0 %v2183
  %2320 = vmatprep.subr.bf16.mxu0 0
  %2321 = vmatpush2.bf16.msra.mxu0 %v2182
  %2322 = vmatprep.subr.bf16.mxu0 0
  %2323 = vmatpush2.bf16.msra.mxu0 %v2181
  %2324 = vmatprep.subr.bf16.mxu0 0
  %2325 = vmatpush2.bf16.msra.mxu0 %v2180
  %2326 = vmatprep.subr.bf16.mxu0 0
  %2327 = vmatpush2.bf16.msra.mxu0 %v2179
  %2328 = vmatprep.subr.bf16.mxu0 0
  %2329 = vmatpush2.bf16.msra.mxu0 %v2178
  %2330 = vmatprep.mubr.bf16.mxu0 %v248
  %2331 = vmatmul.mubr.bf16.gmra.mxu0 %v247
  %v2332 = vpop.f32.mrf.mxu0
  %v2333 = vadd.f32 0.0, %v2332
  %v2334 = vpop.f32.mrf.mxu0
  %v2335 = vpop.f32.mrf.mxu0
  %v2336 = vadd.f32 0.0, %v2335
  %v2337 = vpop.f32.mrf.mxu0
  %2338 = vdwg.mxu0
  %2339 = vmatprep.subr.bf16.mxu0 0
  %2340 = vmatpush1.bf16.msra.mxu0 %v2193
  %2341 = vmatprep.subr.bf16.mxu0 0
  %2342 = vmatpush1.bf16.msra.mxu0 %v2192
  %2343 = vmatprep.subr.bf16.mxu0 0
  %2344 = vmatpush1.bf16.msra.mxu0 %v2191
  %2345 = vmatprep.subr.bf16.mxu0 0
  %2346 = vmatpush1.bf16.msra.mxu0 %v2190
  %2347 = vmatprep.subr.bf16.mxu0 0
  %2348 = vmatpush1.bf16.msra.mxu0 %v2189
  %2349 = vmatprep.subr.bf16.mxu0 0
  %2350 = vmatpush1.bf16.msra.mxu0 %v2188
  %2351 = vmatprep.subr.bf16.mxu0 0
  %2352 = vmatpush1.bf16.msra.mxu0 %v2187
  %2353 = vmatprep.subr.bf16.mxu0 0
  %2354 = vmatpush1.bf16.msra.mxu0 %v2186
  %2355 = vmatprep.subr.bf16.mxu0 0
  %2356 = vmatpush2.bf16.msra.mxu0 %v2201
  %2357 = vmatprep.subr.bf16.mxu0 0
  %2358 = vmatpush2.bf16.msra.mxu0 %v2200
  %2359 = vmatprep.subr.bf16.mxu0 0
  %2360 = vmatpush2.bf16.msra.mxu0 %v2199
  %2361 = vmatprep.subr.bf16.mxu0 0
  %2362 = vmatpush2.bf16.msra.mxu0 %v2198
  %2363 = vmatprep.subr.bf16.mxu0 0
  %2364 = vmatpush2.bf16.msra.mxu0 %v2197
  %2365 = vmatprep.subr.bf16.mxu0 0
  %2366 = vmatpush2.bf16.msra.mxu0 %v2196
  %2367 = vmatprep.subr.bf16.mxu0 0
  %2368 = vmatpush2.bf16.msra.mxu0 %v2195
  %2369 = vmatprep.subr.bf16.mxu0 0
  %2370 = vmatpush2.bf16.msra.mxu0 %v2194
  %2371 = vmatprep.mubr.bf16.mxu0 %v250
  %2372 = vmatmul.mubr.bf16.gmra.mxu0 %v249
  %v2373 = vpop.f32.mrf.mxu0
  %v2374 = vadd.f32 %v2333, %v2373
  %v2375 = vpop.f32.mrf.mxu0
  %v2376 = vpop.f32.mrf.mxu0
  %v2377 = vadd.f32 %v2336, %v2376
  %v2378 = vpop.f32.mrf.mxu0
  %2379 = vdwg.mxu0
  %2380 = vmatprep.subr.bf16.mxu0 0
  %2381 = vmatpush1.bf16.msra.mxu0 %v2209
  %2382 = vmatprep.subr.bf16.mxu0 0
  %2383 = vmatpush1.bf16.msra.mxu0 %v2208
  %2384 = vmatprep.subr.bf16.mxu0 0
  %2385 = vmatpush1.bf16.msra.mxu0 %v2207
  %2386 = vmatprep.subr.bf16.mxu0 0
  %2387 = vmatpush1.bf16.msra.mxu0 %v2206
  %2388 = vmatprep.subr.bf16.mxu0 0
  %2389 = vmatpush1.bf16.msra.mxu0 %v2205
  %2390 = vmatprep.subr.bf16.mxu0 0
  %2391 = vmatpush1.bf16.msra.mxu0 %v2204
  %2392 = vmatprep.subr.bf16.mxu0 0
  %2393 = vmatpush1.bf16.msra.mxu0 %v2203
  %2394 = vmatprep.subr.bf16.mxu0 0
  %2395 = vmatpush1.bf16.msra.mxu0 %v2202
  %2396 = vmatprep.subr.bf16.mxu0 0
  %2397 = vmatpush2.bf16.msra.mxu0 %v2217
  %2398 = vmatprep.subr.bf16.mxu0 0
  %2399 = vmatpush2.bf16.msra.mxu0 %v2216
  %2400 = vmatprep.subr.bf16.mxu0 0
  %2401 = vmatpush2.bf16.msra.mxu0 %v2215
  %2402 = vmatprep.subr.bf16.mxu0 0
  %2403 = vmatpush2.bf16.msra.mxu0 %v2214
  %2404 = vmatprep.subr.bf16.mxu0 0
  %2405 = vmatpush2.bf16.msra.mxu0 %v2213
  %2406 = vmatprep.subr.bf16.mxu0 0
  %2407 = vmatpush2.bf16.msra.mxu0 %v2212
  %2408 = vmatprep.subr.bf16.mxu0 0
  %2409 = vmatpush2.bf16.msra.mxu0 %v2211
  %2410 = vmatprep.subr.bf16.mxu0 0
  %2411 = vmatpush2.bf16.msra.mxu0 %v2210
  %2412 = vmatprep.mubr.bf16.mxu0 %v252
  %2413 = vmatmul.mubr.bf16.gmra.mxu0 %v251
  %v2414 = vpop.f32.mrf.mxu0
  %v2415 = vadd.f32 %v2374, %v2414
  %v2416 = vpop.f32.mrf.mxu0
  %v2417 = vpop.f32.mrf.mxu0
  %v2418 = vadd.f32 %v2377, %v2417
  %v2419 = vpop.f32.mrf.mxu0
  %2420 = vdwg.mxu0
  %2421 = vmatprep.subr.bf16.mxu0 0
  %2422 = vmatpush1.bf16.msra.mxu0 %v2225
  %2423 = vmatprep.subr.bf16.mxu0 0
  %2424 = vmatpush1.bf16.msra.mxu0 %v2224
  %2425 = vmatprep.subr.bf16.mxu0 0
  %2426 = vmatpush1.bf16.msra.mxu0 %v2223
  %2427 = vmatprep.subr.bf16.mxu0 0
  %2428 = vmatpush1.bf16.msra.mxu0 %v2222
  %2429 = vmatprep.subr.bf16.mxu0 0
  %2430 = vmatpush1.bf16.msra.mxu0 %v2221
  %2431 = vmatprep.subr.bf16.mxu0 0
  %2432 = vmatpush1.bf16.msra.mxu0 %v2220
  %2433 = vmatprep.subr.bf16.mxu0 0
  %2434 = vmatpush1.bf16.msra.mxu0 %v2219
  %2435 = vmatprep.subr.bf16.mxu0 0
  %2436 = vmatpush1.bf16.msra.mxu0 %v2218
  %2437 = vmatprep.subr.bf16.mxu0 0
  %2438 = vmatpush2.bf16.msra.mxu0 %v2233
  %2439 = vmatprep.subr.bf16.mxu0 0
  %2440 = vmatpush2.bf16.msra.mxu0 %v2232
  %2441 = vmatprep.subr.bf16.mxu0 0
  %2442 = vmatpush2.bf16.msra.mxu0 %v2231
  %2443 = vmatprep.subr.bf16.mxu0 0
  %2444 = vmatpush2.bf16.msra.mxu0 %v2230
  %2445 = vmatprep.subr.bf16.mxu0 0
  %2446 = vmatpush2.bf16.msra.mxu0 %v2229
  %2447 = vmatprep.subr.bf16.mxu0 0
  %2448 = vmatpush2.bf16.msra.mxu0 %v2228
  %2449 = vmatprep.subr.bf16.mxu0 0
  %2450 = vmatpush2.bf16.msra.mxu0 %v2227
  %2451 = vmatprep.subr.bf16.mxu0 0
  %2452 = vmatpush2.bf16.msra.mxu0 %v2226
  %2453 = vmatprep.mubr.bf16.mxu0 %v254
  %2454 = vmatmul.mubr.bf16.gmra.mxu0 %v253
  %v2455 = vpop.f32.mrf.mxu0
  %v2456 = vadd.f32 %v2415, %v2455
  %v2457 = vpop.f32.mrf.mxu0
  %v2458 = vpop.f32.mrf.mxu0
  %v2459 = vadd.f32 %v2418, %v2458
  %v2460 = vpop.f32.mrf.mxu0
  %2461 = vdwg.mxu0
  %v2462 = vmul.f32 %v2456, %v1777
  %v2463 = vmul.f32 %v2459, %v1777
  %v2464 = vsel %vm813, %v2462, 0.0
  %v2465 = vsel %vm813, %v2463, 0.0
  %v2466 = vadd.f32 %v2464, %v2465
  %2467 = vadd.xlane.f32.xlu0 %v2466
  %v2468 = vpop.xlane.xlu0 %2467
  %v2469 = vrot.slane %v2468, 4
  %v2470 = vadd.f32 %v2468, %v2469
  %v2471 = vrot.slane %v2470, 2
  %v2472 = vadd.f32 %v2470, %v2471
  %v2473 = vrot.slane %v2472, 1
  %v2474 = vadd.f32 %v2472, %v2473
  %s2475 = vtos %v2474
  %s2476 = smul.f32 %s2475, %s1784
  %v2477 = vstv %s2476
  %v2478 = vsub.f32 %v2462, %v2477
  %v2479 = vsub.f32 %v2463, %v2477
  %v2480 = vmul.f32 %v2478, %v1777
  %v2481 = vmul.f32 %v2479, %v1777
  %v2482 = vmul.f32 %v2480, %v2480
  %v2483 = vmul.f32 %v2481, %v2481
  %v2484 = vsel %vm813, %v2482, 0.0
  %v2485 = vsel %vm813, %v2483, 0.0
  %v2486 = vadd.f32 %v2484, %v2485
  %2487 = vadd.xlane.f32.xlu0 %v2486
  %v2488 = vpop.xlane.xlu0 %2487
  %v2489 = vrot.slane %v2488, 4
  %v2490 = vadd.f32 %v2488, %v2489
  %v2491 = vrot.slane %v2490, 2
  %v2492 = vadd.f32 %v2490, %v2491
  %v2493 = vrot.slane %v2492, 1
  %v2494 = vadd.f32 %v2492, %v2493
  %s2495 = vtos %v2494
  %s2496 = smul.f32 %s2495, %s1784
  %s2497 = sadd.f32 %s2496, 1e-06
  %v2498 = vstv %s2497
  %v2499 = vrsqrt.pop %v2498
  %s2500 = vtos %v2499
  %v2501 = vstv %s2500
  %v2502 = vmul.f32 %v2480, %v2501
  %v2503 = vmul.f32 %v2481, %v2501
  %v2504 = vmul.f32 %v2502, %v857
  %v2505 = vmul.f32 %v2503, %v862
  %v2506 = vadd.f32 %v2504, %v869
  %v2507 = vadd.f32 %v2505, %v874
  %v2508 = vmax.f32 %v2506, 0.0
  %v2509 = vmax.f32 %v2507, 0.0
  %v2510 = vmul.f32 %v2508, %v1777
  %v2511 = vmul.f32 %v2509, %v1777
  %2514 = vrot.lane.b32.xlu0 %v2510, 10
  %v2515 = vpop.permute.xlu0 %2514
  %2516 = vrot.lane.b32.xlu0 %v2511, 10
  %v2517 = vpop.permute.xlu0 %2516
  %2520 = vst.msk [vmem:[#allocation2] sm:$0xff] %vm890, %v2515
  %2521 = vst.msk [vmem:[#allocation2 + $0x8] sm:$0xff] %vm890, %v2517
  %v2522 = vld [vmem:[#allocation2] sm:$0xff]
  %v2523 = vld [vmem:[#allocation2 + $0x8] sm:$0xff]
  %v2524 = vmul.f32 %v2522, %v898
  %v2525 = vmul.f32 %v2523, %v903
  %v2526 = vadd.f32 %v2524, 0.0
  %v2527 = vadd.f32 %v2525, 0.0
  %v2528 = vmul.f32 %v2522, %v911
  %v2529 = vmul.f32 %v2523, %v915
  %2532 = vrot.lane.b32.xlu0 %v2528, 127
  %v2533 = vpop.permute.xlu0 %2532
  %2534 = vrot.lane.b32.xlu0 %v2529, 127
  %v2535 = vpop.permute.xlu0 %2534
  %v2538 = vadd.f32 %v2526, %v2533
  %v2539 = vadd.f32 %v2527, %v2535
  %v2540 = vmul.f32 %v2522, %v931
  %v2541 = vmul.f32 %v2523, %v935
  %2544 = vrot.lane.b32.xlu0 %v2540, 126
  %v2545 = vpop.permute.xlu0 %2544
  %2546 = vrot.lane.b32.xlu0 %v2541, 126
  %v2547 = vpop.permute.xlu0 %2546
  %v2550 = vadd.f32 %v2538, %v2545
  %v2551 = vadd.f32 %v2539, %v2547
  %v2552 = vmul.f32 %v2522, %v951
  %v2553 = vmul.f32 %v2523, %v955
  %2556 = vrot.lane.b32.xlu0 %v2552, 125
  %v2557 = vpop.permute.xlu0 %2556
  %2558 = vrot.lane.b32.xlu0 %v2553, 125
  %v2559 = vpop.permute.xlu0 %2558
  %v2562 = vadd.f32 %v2550, %v2557
  %v2563 = vadd.f32 %v2551, %v2559
  %v2564 = vmul.f32 %v2522, %v971
  %v2565 = vmul.f32 %v2523, %v975
  %2568 = vrot.lane.b32.xlu0 %v2564, 124
  %v2569 = vpop.permute.xlu0 %2568
  %2570 = vrot.lane.b32.xlu0 %v2565, 124
  %v2571 = vpop.permute.xlu0 %2570
  %v2574 = vadd.f32 %v2562, %v2569
  %v2575 = vadd.f32 %v2563, %v2571
  %v2576 = vmul.f32 %v2522, %v991
  %v2577 = vmul.f32 %v2523, %v995
  %2580 = vrot.lane.b32.xlu0 %v2576, 123
  %v2581 = vpop.permute.xlu0 %2580
  %2582 = vrot.lane.b32.xlu0 %v2577, 123
  %v2583 = vpop.permute.xlu0 %2582
  %v2586 = vadd.f32 %v2574, %v2581
  %v2587 = vadd.f32 %v2575, %v2583
  %v2588 = vmul.f32 %v2522, %v1011
  %v2589 = vmul.f32 %v2523, %v1015
  %2592 = vrot.lane.b32.xlu0 %v2588, 122
  %v2593 = vpop.permute.xlu0 %2592
  %2594 = vrot.lane.b32.xlu0 %v2589, 122
  %v2595 = vpop.permute.xlu0 %2594
  %v2598 = vadd.f32 %v2586, %v2593
  %v2599 = vadd.f32 %v2587, %v2595
  %v2600 = vmul.f32 %v2522, %v1031
  %v2601 = vmul.f32 %v2523, %v1035
  %2604 = vrot.lane.b32.xlu0 %v2600, 121
  %v2605 = vpop.permute.xlu0 %2604
  %2606 = vrot.lane.b32.xlu0 %v2601, 121
  %v2607 = vpop.permute.xlu0 %2606
  %v2610 = vadd.f32 %v2598, %v2605
  %v2611 = vadd.f32 %v2599, %v2607
  %v2612 = vmul.f32 %v2522, %v1051
  %v2613 = vmul.f32 %v2523, %v1055
  %2616 = vrot.lane.b32.xlu0 %v2612, 120
  %v2617 = vpop.permute.xlu0 %2616
  %2618 = vrot.lane.b32.xlu0 %v2613, 120
  %v2619 = vpop.permute.xlu0 %2618
  %v2622 = vadd.f32 %v2610, %v2617
  %v2623 = vadd.f32 %v2611, %v2619
  %2625 = vrot.lane.b32.xlu0 %v1777, 6
  %v2626 = vpop.permute.xlu0 %2625
  %v2628 = vmul.f32 %v2622, %v2626
  %v2629 = vmul.f32 %v2623, %v2626
  %2632 = vrot.lane.b32.xlu0 %v2628, 122
  %v2633 = vpop.permute.xlu0 %2632
  %2634 = vrot.lane.b32.xlu0 %v2629, 122
  %v2635 = vpop.permute.xlu0 %2634
  %v2638 = vsel %vm813, %v2633, 0.0
  %v2639 = vsel %vm813, %v2635, 0.0
  %v2640 = vadd.f32 %v2638, %v2639
  %2641 = vadd.xlane.f32.xlu0 %v2640
  %v2642 = vpop.xlane.xlu0 %2641
  %v2643 = vrot.slane %v2642, 4
  %v2644 = vadd.f32 %v2642, %v2643
  %v2645 = vrot.slane %v2644, 2
  %v2646 = vadd.f32 %v2644, %v2645
  %v2647 = vrot.slane %v2646, 1
  %v2648 = vadd.f32 %v2646, %v2647
  %s2649 = vtos %v2648
  %s2650 = smul.f32 %s2649, %s1784
  %v2651 = vstv %s2650
  %v2652 = vsub.f32 %v2628, %v2651
  %v2653 = vsub.f32 %v2629, %v2651
  %v2654 = vmul.f32 %v2652, %v2626
  %v2655 = vmul.f32 %v2653, %v2626
  %v2656 = vmul.f32 %v2654, %v2654
  %v2657 = vmul.f32 %v2655, %v2655
  %2660 = vrot.lane.b32.xlu0 %v2656, 122
  %v2661 = vpop.permute.xlu0 %2660
  %2662 = vrot.lane.b32.xlu0 %v2657, 122
  %v2663 = vpop.permute.xlu0 %2662
  %v2666 = vsel %vm813, %v2661, 0.0
  %v2667 = vsel %vm813, %v2663, 0.0
  %v2668 = vadd.f32 %v2666, %v2667
  %2669 = vadd.xlane.f32.xlu0 %v2668
  %v2670 = vpop.xlane.xlu0 %2669
  %v2671 = vrot.slane %v2670, 4
  %v2672 = vadd.f32 %v2670, %v2671
  %v2673 = vrot.slane %v2672, 2
  %v2674 = vadd.f32 %v2672, %v2673
  %v2675 = vrot.slane %v2674, 1
  %v2676 = vadd.f32 %v2674, %v2675
  %s2677 = vtos %v2676
  %s2678 = smul.f32 %s2677, %s1784
  %s2679 = sadd.f32 %s2678, 1e-06
  %v2680 = vstv %s2679
  %v2681 = vrsqrt.pop %v2680
  %s2682 = vtos %v2681
  %v2683 = vstv %s2682
  %v2684 = vmul.f32 %v2654, %v2683
  %v2685 = vmul.f32 %v2655, %v2683
  %v2686 = vmul.f32 %v2684, %v1134
  %v2687 = vmul.f32 %v2685, %v1139
  %v2688 = vadd.f32 %v2686, %v1146
  %v2689 = vadd.f32 %v2687, %v1151
  %v2690 = vmax.f32 %v2688, 0.0
  %v2691 = vmax.f32 %v2689, 0.0
  %v2692 = vmul.f32 %v2690, %v2626
  %v2693 = vmul.f32 %v2691, %v2626
  %v2694 = vmul.f32 %v2522, %v1162
  %v2695 = vmul.f32 %v2523, %v1167
  %v2696 = vadd.f32 %v2694, 0.0
  %v2697 = vadd.f32 %v2695, 0.0
  %v2698 = vmul.f32 %v2522, %v1175
  %v2699 = vmul.f32 %v2523, %v1179
  %2702 = vrot.lane.b32.xlu0 %v2698, 127
  %v2703 = vpop.permute.xlu0 %2702
  %2704 = vrot.lane.b32.xlu0 %v2699, 127
  %v2705 = vpop.permute.xlu0 %2704
  %v2708 = vadd.f32 %v2696, %v2703
  %v2709 = vadd.f32 %v2697, %v2705
  %v2710 = vmul.f32 %v2522, %v1195
  %v2711 = vmul.f32 %v2523, %v1199
  %2714 = vrot.lane.b32.xlu0 %v2710, 126
  %v2715 = vpop.permute.xlu0 %2714
  %2716 = vrot.lane.b32.xlu0 %v2711, 126
  %v2717 = vpop.permute.xlu0 %2716
  %v2720 = vadd.f32 %v2708, %v2715
  %v2721 = vadd.f32 %v2709, %v2717
  %v2722 = vmul.f32 %v2522, %v1215
  %v2723 = vmul.f32 %v2523, %v1219
  %2726 = vrot.lane.b32.xlu0 %v2722, 125
  %v2727 = vpop.permute.xlu0 %2726
  %2728 = vrot.lane.b32.xlu0 %v2723, 125
  %v2729 = vpop.permute.xlu0 %2728
  %v2732 = vadd.f32 %v2720, %v2727
  %v2733 = vadd.f32 %v2721, %v2729
  %v2734 = vmul.f32 %v2522, %v1235
  %v2735 = vmul.f32 %v2523, %v1239
  %2738 = vrot.lane.b32.xlu0 %v2734, 124
  %v2739 = vpop.permute.xlu0 %2738
  %2740 = vrot.lane.b32.xlu0 %v2735, 124
  %v2741 = vpop.permute.xlu0 %2740
  %v2744 = vadd.f32 %v2732, %v2739
  %v2745 = vadd.f32 %v2733, %v2741
  %v2746 = vmul.f32 %v2522, %v1255
  %v2747 = vmul.f32 %v2523, %v1259
  %2750 = vrot.lane.b32.xlu0 %v2746, 123
  %v2751 = vpop.permute.xlu0 %2750
  %2752 = vrot.lane.b32.xlu0 %v2747, 123
  %v2753 = vpop.permute.xlu0 %2752
  %v2756 = vadd.f32 %v2744, %v2751
  %v2757 = vadd.f32 %v2745, %v2753
  %v2758 = vmul.f32 %v2522, %v1275
  %v2759 = vmul.f32 %v2523, %v1279
  %2762 = vrot.lane.b32.xlu0 %v2758, 122
  %v2763 = vpop.permute.xlu0 %2762
  %2764 = vrot.lane.b32.xlu0 %v2759, 122
  %v2765 = vpop.permute.xlu0 %2764
  %v2768 = vadd.f32 %v2756, %v2763
  %v2769 = vadd.f32 %v2757, %v2765
  %v2770 = vmul.f32 %v2522, %v1295
  %v2771 = vmul.f32 %v2523, %v1299
  %2774 = vrot.lane.b32.xlu0 %v2770, 121
  %v2775 = vpop.permute.xlu0 %2774
  %2776 = vrot.lane.b32.xlu0 %v2771, 121
  %v2777 = vpop.permute.xlu0 %2776
  %v2780 = vadd.f32 %v2768, %v2775
  %v2781 = vadd.f32 %v2769, %v2777
  %v2782 = vmul.f32 %v2522, %v1315
  %v2783 = vmul.f32 %v2523, %v1319
  %2786 = vrot.lane.b32.xlu0 %v2782, 120
  %v2787 = vpop.permute.xlu0 %2786
  %2788 = vrot.lane.b32.xlu0 %v2783, 120
  %v2789 = vpop.permute.xlu0 %2788
  %v2792 = vadd.f32 %v2780, %v2787
  %v2793 = vadd.f32 %v2781, %v2789
  %v2794 = vmul.f32 %v2522, %v1335
  %v2795 = vmul.f32 %v2523, %v1339
  %2798 = vrot.lane.b32.xlu0 %v2794, 119
  %v2799 = vpop.permute.xlu0 %2798
  %2800 = vrot.lane.b32.xlu0 %v2795, 119
  %v2801 = vpop.permute.xlu0 %2800
  %v2804 = vadd.f32 %v2792, %v2799
  %v2805 = vadd.f32 %v2793, %v2801
  %v2806 = vmul.f32 %v2522, %v1355
  %v2807 = vmul.f32 %v2523, %v1359
  %2810 = vrot.lane.b32.xlu0 %v2806, 118
  %v2811 = vpop.permute.xlu0 %2810
  %2812 = vrot.lane.b32.xlu0 %v2807, 118
  %v2813 = vpop.permute.xlu0 %2812
  %v2816 = vadd.f32 %v2804, %v2811
  %v2817 = vadd.f32 %v2805, %v2813
  %v2818 = vmul.f32 %v2522, %v1375
  %v2819 = vmul.f32 %v2523, %v1379
  %2822 = vrot.lane.b32.xlu0 %v2818, 117
  %v2823 = vpop.permute.xlu0 %2822
  %2824 = vrot.lane.b32.xlu0 %v2819, 117
  %v2825 = vpop.permute.xlu0 %2824
  %v2828 = vadd.f32 %v2816, %v2823
  %v2829 = vadd.f32 %v2817, %v2825
  %v2830 = vmul.f32 %v2522, %v1395
  %v2831 = vmul.f32 %v2523, %v1399
  %2834 = vrot.lane.b32.xlu0 %v2830, 116
  %v2835 = vpop.permute.xlu0 %2834
  %2836 = vrot.lane.b32.xlu0 %v2831, 116
  %v2837 = vpop.permute.xlu0 %2836
  %v2840 = vadd.f32 %v2828, %v2835
  %v2841 = vadd.f32 %v2829, %v2837
  %v2842 = vmul.f32 %v2522, %v1415
  %v2843 = vmul.f32 %v2523, %v1419
  %2846 = vrot.lane.b32.xlu0 %v2842, 115
  %v2847 = vpop.permute.xlu0 %2846
  %2848 = vrot.lane.b32.xlu0 %v2843, 115
  %v2849 = vpop.permute.xlu0 %2848
  %v2852 = vadd.f32 %v2840, %v2847
  %v2853 = vadd.f32 %v2841, %v2849
  %v2854 = vmul.f32 %v2522, %v1435
  %v2855 = vmul.f32 %v2523, %v1439
  %2858 = vrot.lane.b32.xlu0 %v2854, 114
  %v2859 = vpop.permute.xlu0 %2858
  %2860 = vrot.lane.b32.xlu0 %v2855, 114
  %v2861 = vpop.permute.xlu0 %2860
  %v2864 = vadd.f32 %v2852, %v2859
  %v2865 = vadd.f32 %v2853, %v2861
  %v2866 = vmul.f32 %v2522, %v1455
  %v2867 = vmul.f32 %v2523, %v1459
  %2870 = vrot.lane.b32.xlu0 %v2866, 113
  %v2871 = vpop.permute.xlu0 %2870
  %2872 = vrot.lane.b32.xlu0 %v2867, 113
  %v2873 = vpop.permute.xlu0 %2872
  %v2876 = vadd.f32 %v2864, %v2871
  %v2877 = vadd.f32 %v2865, %v2873
  %v2878 = vmul.f32 %v2522, %v1475
  %v2879 = vmul.f32 %v2523, %v1479
  %2882 = vrot.lane.b32.xlu0 %v2878, 112
  %v2883 = vpop.permute.xlu0 %2882
  %2884 = vrot.lane.b32.xlu0 %v2879, 112
  %v2885 = vpop.permute.xlu0 %2884
  %v2888 = vadd.f32 %v2876, %v2883
  %v2889 = vadd.f32 %v2877, %v2885
  %v2890 = vmul.f32 %v2522, %v1495
  %v2891 = vmul.f32 %v2523, %v1499
  %2894 = vrot.lane.b32.xlu0 %v2890, 111
  %v2895 = vpop.permute.xlu0 %2894
  %2896 = vrot.lane.b32.xlu0 %v2891, 111
  %v2897 = vpop.permute.xlu0 %2896
  %v2900 = vadd.f32 %v2888, %v2895
  %v2901 = vadd.f32 %v2889, %v2897
  %v2902 = vmul.f32 %v2522, %v1515
  %v2903 = vmul.f32 %v2523, %v1519
  %2906 = vrot.lane.b32.xlu0 %v2902, 110
  %v2907 = vpop.permute.xlu0 %2906
  %2908 = vrot.lane.b32.xlu0 %v2903, 110
  %v2909 = vpop.permute.xlu0 %2908
  %v2912 = vadd.f32 %v2900, %v2907
  %v2913 = vadd.f32 %v2901, %v2909
  %v2914 = vmul.f32 %v2522, %v1535
  %v2915 = vmul.f32 %v2523, %v1539
  %2918 = vrot.lane.b32.xlu0 %v2914, 109
  %v2919 = vpop.permute.xlu0 %2918
  %2920 = vrot.lane.b32.xlu0 %v2915, 109
  %v2921 = vpop.permute.xlu0 %2920
  %v2924 = vadd.f32 %v2912, %v2919
  %v2925 = vadd.f32 %v2913, %v2921
  %v2926 = vmul.f32 %v2522, %v1555
  %v2927 = vmul.f32 %v2523, %v1559
  %2930 = vrot.lane.b32.xlu0 %v2926, 108
  %v2931 = vpop.permute.xlu0 %2930
  %2932 = vrot.lane.b32.xlu0 %v2927, 108
  %v2933 = vpop.permute.xlu0 %2932
  %v2936 = vadd.f32 %v2924, %v2931
  %v2937 = vadd.f32 %v2925, %v2933
  %v2938 = vmul.f32 %v2936, %v1777
  %v2939 = vmul.f32 %v2937, %v1777
  %v2940 = vsel %vm813, %v2938, 0.0
  %v2941 = vsel %vm813, %v2939, 0.0
  %v2942 = vadd.f32 %v2940, %v2941
  %2943 = vadd.xlane.f32.xlu0 %v2942
  %v2944 = vpop.xlane.xlu0 %2943
  %v2945 = vrot.slane %v2944, 4
  %v2946 = vadd.f32 %v2944, %v2945
  %v2947 = vrot.slane %v2946, 2
  %v2948 = vadd.f32 %v2946, %v2947
  %v2949 = vrot.slane %v2948, 1
  %v2950 = vadd.f32 %v2948, %v2949
  %s2951 = vtos %v2950
  %s2952 = smul.f32 %s2951, %s1784
  %v2953 = vstv %s2952
  %v2954 = vsub.f32 %v2938, %v2953
  %v2955 = vsub.f32 %v2939, %v2953
  %v2956 = vmul.f32 %v2954, %v1777
  %v2957 = vmul.f32 %v2955, %v1777
  %v2958 = vmul.f32 %v2956, %v2956
  %v2959 = vmul.f32 %v2957, %v2957
  %v2960 = vsel %vm813, %v2958, 0.0
  %v2961 = vsel %vm813, %v2959, 0.0
  %v2962 = vadd.f32 %v2960, %v2961
  %2963 = vadd.xlane.f32.xlu0 %v2962
  %v2964 = vpop.xlane.xlu0 %2963
  %v2965 = vrot.slane %v2964, 4
  %v2966 = vadd.f32 %v2964, %v2965
  %v2967 = vrot.slane %v2966, 2
  %v2968 = vadd.f32 %v2966, %v2967
  %v2969 = vrot.slane %v2968, 1
  %v2970 = vadd.f32 %v2968, %v2969
  %s2971 = vtos %v2970
  %s2972 = smul.f32 %s2971, %s1784
  %s2973 = sadd.f32 %s2972, 1e-06
  %v2974 = vstv %s2973
  %v2975 = vrsqrt.pop %v2974
  %s2976 = vtos %v2975
  %v2977 = vstv %s2976
  %v2978 = vmul.f32 %v2956, %v2977
  %v2979 = vmul.f32 %v2957, %v2977
  %v2980 = vmul.f32 %v2978, %v1618
  %v2981 = vmul.f32 %v2979, %v1623
  %v2982 = vadd.f32 %v2980, %v1630
  %v2983 = vadd.f32 %v2981, %v1635
  %v2984 = vmax.f32 %v2982, 0.0
  %v2985 = vmax.f32 %v2983, 0.0
  %v2986 = vmul.f32 %v2984, %v1777
  %v2987 = vmul.f32 %v2985, %v1777
  %2990 = vrot.lane.b32.xlu0 %v2692, 122
  %v2991 = vpop.permute.xlu0 %2990
  %2992 = vrot.lane.b32.xlu0 %v2693, 122
  %v2993 = vpop.permute.xlu0 %2992
  %2996 = vmatprep.subr.mxu0 0.0
  %2997 = vmatpush1.msra.mxu0 0.0
  %2998 = vmatprep.subr.mxu0 0.0
  %2999 = vmatpush1.msra.mxu0 0.0
  %3000 = vmatprep.subr.mxu0 0.0
  %3001 = vmatpush1.msra.mxu0 0.0
  %3002 = vmatprep.subr.mxu0 0.0
  %3003 = vmatpush1.msra.mxu0 0.0
  %3004 = vmatprep.subr.mxu0 0.0
  %3005 = vmatpush1.msra.mxu0 0.0
  %3006 = vmatprep.subr.mxu0 0.0
  %3007 = vmatpush1.msra.mxu0 0.0
  %3008 = vmatprep.subr.mxu0 0.0
  %3009 = vmatpush1.msra.mxu0 0.0
  %3010 = vmatprep.subr.mxu0 0.0
  %3011 = vmatpush1.msra.mxu0 0.0
  %3012 = vmatprep.subr.mxu0 0.0
  %3013 = vmatpush1.msra.mxu0 0.0
  %3014 = vmatprep.subr.mxu0 0.0
  %3015 = vmatpush1.msra.mxu0 0.0
  %3016 = vmatprep.subr.mxu0 0.0
  %3017 = vmatpush1.msra.mxu0 %v2987
  %3018 = vmatprep.subr.mxu0 0.0
  %3019 = vmatpush1.msra.mxu0 %v2986
  %3020 = vmatprep.subr.mxu0 0.0
  %3021 = vmatpush1.msra.mxu0 %v2993
  %3022 = vmatprep.subr.mxu0 0.0
  %3023 = vmatpush1.msra.mxu0 %v2991
  %3024 = vmatprep.subr.mxu0 0.0
  %3025 = vmatpush1.msra.mxu0 %v2511
  %3026 = vmatprep.subr.mxu0 0.0
  %3027 = vmatpush1.msra.mxu0 %v2510
  %3028 = vmatprep.subr.mxu0 0.0
  %3029 = vmatpush2.msra.mxu0 0.0
  %3030 = vmatprep.subr.mxu0 0.0
  %3031 = vmatpush2.msra.mxu0 0.0
  %3032 = vmatprep.subr.mxu0 0.0
  %3033 = vmatpush2.msra.mxu0 0.0
  %3034 = vmatprep.subr.mxu0 0.0
  %3035 = vmatpush2.msra.mxu0 0.0
  %3036 = vmatprep.subr.mxu0 0.0
  %3037 = vmatpush2.msra.mxu0 0.0
  %3038 = vmatprep.subr.mxu0 0.0
  %3039 = vmatpush2.msra.mxu0 0.0
  %3040 = vmatprep.subr.mxu0 0.0
  %3041 = vmatpush2.msra.mxu0 0.0
  %3042 = vmatprep.subr.mxu0 0.0
  %3043 = vmatpush2.msra.mxu0 0.0
  %3044 = vmatprep.subr.mxu0 0.0
  %3045 = vmatpush2.msra.mxu0 0.0
  %3046 = vmatprep.subr.mxu0 0.0
  %3047 = vmatpush2.msra.mxu0 0.0
  %3048 = vmatprep.subr.mxu0 0.0
  %3049 = vmatpush2.msra.mxu0 0.0
  %3050 = vmatprep.subr.mxu0 0.0
  %3051 = vmatpush2.msra.mxu0 0.0
  %3052 = vmatprep.subr.mxu0 0.0
  %3053 = vmatpush2.msra.mxu0 0.0
  %3054 = vmatprep.subr.mxu0 0.0
  %3055 = vmatpush2.msra.mxu0 0.0
  %3056 = vmatprep.subr.mxu0 0.0
  %3057 = vmatpush2.msra.mxu0 0.0
  %3058 = vmatprep.subr.mxu0 0.0
  %3059 = vmatpush2.msra.mxu0 0.0
  %3060 = vmatprep.mubr.f32.mxu0 0.0
  %3061 = vmatmul.mubr.f32.gmra.mxu0 %v1658
  %v3062 = vpop.f32.mrf.mxu0
  %v3063 = vadd.f32 %v1654, %v3062
  %v3064 = vpop.f32.mrf.mxu0
  %3065 = vdwg.mxu0
  %v3066 = vmul.f32 %v3063, %v1777
  %3068 = vrot.lane.b32.xlu0 %v3066, 3
  %v3069 = vpop.permute.xlu0 %3068
  %3071 = vst.msk [vmem:[#allocation3] sm:$0x1f] %vm1735, %v3069
  %v3072 = vld [vmem:[#allocation3] sm:$0x1f]
  %v3073 = vmul.f32 %v3072, 0.004433048
  %v3074 = vmul.f32 %v3072, 0.054005582
  %3076 = vrot.lane.b32.xlu0 %v3074, 127
  %v3077 = vpop.permute.xlu0 %3076
  %v3079 = vadd.f32 %v3073, %v3077
  %v3080 = vmul.f32 %v3072, 0.24203622
  %3082 = vrot.lane.b32.xlu0 %v3080, 126
  %v3083 = vpop.permute.xlu0 %3082
  %v3085 = vadd.f32 %v3079, %v3083
  %v3086 = vmul.f32 %v3072, 0.39905027
  %3088 = vrot.lane.b32.xlu0 %v3086, 125
  %v3089 = vpop.permute.xlu0 %3088
  %v3091 = vadd.f32 %v3085, %v3089
  %3092 = vrot.lane.b32.xlu0 %v3080, 124
  %v3093 = vpop.permute.xlu0 %3092
  %v3095 = vadd.f32 %v3091, %v3093
  %3096 = vrot.lane.b32.xlu0 %v3074, 123
  %v3097 = vpop.permute.xlu0 %3096
  %v3099 = vadd.f32 %v3095, %v3097
  %3101 = vrot.lane.b32.xlu0 %v3073, 122
  %v3102 = vpop.permute.xlu0 %3101
  %v3104 = vadd.f32 %v3099, %v3102
  %s3105 = scalar_lea.vmem %s13, 8
  %3106 = vst.msk [vmem:[%s3105] sm:$0x1f] %vm1770, %v3104
  // Predicated region
  $region50: #{tpu_custom_call.1} parent=0 // pred_check
    _
  $region51: #{tpu_custom_call.1} parent=0 // pred_check_branch
    %3108 = sbr.rel (0) target = $region53
  $region52: #{tpu_custom_call.1} parent=0 // pred_region
    _
  $region53: #{tpu_custom_call.1} parent=0 // pred_fallthru
    _
  // Predicated region
  $region54: #{tpu_custom_call.1} parent=0 // pred_check
    _
  $region55: #{tpu_custom_call.1} parent=0 // pred_check_branch
    %3110 = sbr.rel (0) target = $region57
  $region56: #{tpu_custom_call.1} parent=0 // pred_region
    _
  $region57: #{tpu_custom_call.1} parent=0 // pred_fallthru
    _

</llo_original>
